<compile_context>
chip_gen: v7x
topology: tpu7x:2x2x1
jax: 0.10.0
libtpu: 0.0.40
codegen_flags: <defaults>
</compile_context>

<pallas_src>
import functools

import jax
import jax.numpy as jnp
from jax import lax
from jax.experimental import pallas as pl
from jax.experimental.pallas import tpu as pltpu

EPS = 1e-5  # PyTorch InstanceNorm2d default


def _round_up(x, m):
    return (x + m - 1) // m * m


# ------------------ pass 1: conv matmul + partial IN statistics ---------------

def _conv_stats_kernel(a_ref, w_ref, o_ref, stats_ref, acc_ref):
    """K-tiled matmul into a small f32 scratch; the epilogue writes the bf16
    conv tile and the per-(image, M-tile) partial sum / sum-of-squares."""
    k = pl.program_id(2)

    @pl.when(k == 0)
    def _init():
        acc_ref[...] = jnp.zeros_like(acc_ref)

    acc_ref[...] += jnp.dot(a_ref[...], w_ref[...],
                            preferred_element_type=jnp.float32)

    @pl.when(k == pl.num_programs(2) - 1)
    def _finalize():
        x = acc_ref[...]                                   # (tm, Cp) f32
        # Padded rows / channels are exactly zero (zero im2col rows, zero
        # weight columns, no bias), so unmasked single-pass sums are exact.
        s = jnp.sum(x, axis=0, keepdims=True)              # (1, Cp)
        ss = jnp.sum(x * x, axis=0, keepdims=True)         # (1, Cp)
        row = lax.broadcasted_iota(jnp.int32, (8, x.shape[1]), 0)
        stats_ref[...] = jnp.where(row == 0, s, jnp.where(row == 1, ss, 0.0))
        o_ref[...] = x.astype(o_ref.dtype)


# --------------- pass 2: normalize + affine (+ReLU) (+residual) ---------------

def _norm_kernel(*refs, apply_relu, has_residual):
    if has_residual:
        x_ref, scale_ref, shift_ref, r_ref, o_ref = refs
    else:
        x_ref, scale_ref, shift_ref, o_ref = refs
    y = x_ref[...].astype(jnp.float32) * scale_ref[...] + shift_ref[...]
    if apply_relu:
        y = jnp.maximum(y, 0.0)
    if has_residual:
        y = y + r_ref[...].astype(jnp.float32)
    o_ref[...] = y.astype(o_ref.dtype)


# ------------------------------ fused layer ------------------------------------

def conv_instnorm(x_nhwc, w_hwio, gamma, beta, stride, *,
                  apply_relu=True, residual=None):
    """ReflectionPad(k//2) + Conv2d(k, stride) + InstanceNorm(+ReLU)(+residual).

    Returns bf16 NHWC.  Conv bias is intentionally omitted (cancelled by IN).
    """
    kH, kW, Cin, Cout = w_hwio.shape
    pad = kH // 2
    xp = jnp.pad(x_nhwc.astype(jnp.bfloat16),
                 ((0, 0), (pad, pad), (pad, pad), (0, 0)), mode="reflect")
    N, Hp, Wp, _ = xp.shape
    Ho = (Hp - kH) // stride + 1
    Wo = (Wp - kW) // stride + 1
    HW, K = Ho * Wo, kH * kW * Cin

    # Host-side im2col in bf16; (kh, kw, cin) ordering == w_hwio.reshape(K, Cout).
    # TODO(synk): in-kernel im2col (shift-accumulated matmuls) for 3x3/Cin=128.
    patches = [xp[:, kh:kh + stride * Ho:stride, kw:kw + stride * Wo:stride, :]
               for kh in range(kH) for kw in range(kW)]
    cols = jnp.stack(patches, axis=3).reshape(N, HW, K)

    # Tiling: lane-dense Cp, 128-aligned K, bf16-sublane-aligned (16) M tiles.
    Cp = _round_up(Cout, 128)
    Kp = _round_up(K, 128)
    tm = _round_up(HW, 16) if HW <= 512 else 512
    HWp = _round_up(HW, tm)
    nm = HWp // tm

    budget = 12 * 1024 * 1024  # stays inside v5e's 16 MiB default scoped VMEM

    def vmem_bytes(tk):
        return (2 * tm * tk * 2 + 2 * tk * Cp * 2      # double-buffered a, w (bf16)
                + tm * Cp * 4                           # f32 accumulator
                + 2 * tm * Cp * 2 + 2 * 8 * Cp * 4)     # conv-out + stats buffers

    if vmem_bytes(Kp) <= budget:
        tk = Kp                    # whole-K: no k loop, weights DMA'd once
    else:
        tk = next((t for t in (512, 384, 256, 128)
                   if Kp % t == 0 and vmem_bytes(t) <= budget), 128)
    nk = Kp // tk

    a = jnp.pad(cols, ((0, 0), (0, HWp - HW), (0, Kp - K)))
    w = jnp.pad(w_hwio.reshape(K, Cout).astype(jnp.bfloat16),
                ((0, Kp - K), (0, Cp - Cout)))

    conv_out, stats = pl.pallas_call(
        _conv_stats_kernel,
        out_shape=(jax.ShapeDtypeStruct((N, HWp, Cp), jnp.bfloat16),
                   jax.ShapeDtypeStruct((N, nm, 8, Cp), jnp.float32)),
        grid=(N, nm, nk),
        in_specs=[pl.BlockSpec((None, tm, tk), lambda n, m, k: (n, m, k)),
                  pl.BlockSpec((tk, Cp), lambda n, m, k: (k, 0))],
        out_specs=(pl.BlockSpec((None, tm, Cp), lambda n, m, k: (n, m, 0)),
                   pl.BlockSpec((None, None, 8, Cp), lambda n, m, k: (n, m, 0, 0))),
        scratch_shapes=[pltpu.VMEM((tm, Cp), jnp.float32)],
        compiler_params=pltpu.CompilerParams(
            dimension_semantics=("parallel", "parallel", "arbitrary")),
        cost_estimate=pl.CostEstimate(
            flops=int(2 * N * HWp * Kp * Cp), transcendentals=0,
            bytes_accessed=int(a.size * 2 + w.size * 2
                               + N * HWp * Cp * 2 + N * nm * 8 * Cp * 4)),
    )(a, w)

    # Tiny O(N*C) host glue: reduce partial stats, fold IN affine into scale/shift.
    total = jnp.sum(stats, axis=1)                       # (N, 8, Cp)
    mean = total[:, 0, :] / HW
    var = jnp.maximum(total[:, 1, :] / HW - mean * mean, 0.0)
    g = jnp.pad(gamma.astype(jnp.float32), (0, Cp - Cout))
    b = jnp.pad(beta.astype(jnp.float32), (0, Cp - Cout))
    inv_std = lax.rsqrt(var + EPS)
    scale = (g[None, :] * inv_std).reshape(N, 1, Cp)
    shift = (b[None, :] - mean * g[None, :] * inv_std).reshape(N, 1, Cp)

    has_residual = residual is not None
    operands = [conv_out, scale, shift]
    in_specs = [pl.BlockSpec((None, tm, Cp), lambda n, m: (n, m, 0)),
                pl.BlockSpec((None, 1, Cp), lambda n, m: (n, 0, 0)),
                pl.BlockSpec((None, 1, Cp), lambda n, m: (n, 0, 0))]
    if has_residual:
        r = jnp.pad(residual.reshape(N, HW, Cout).astype(jnp.bfloat16),
                    ((0, 0), (0, HWp - HW), (0, Cp - Cout)))
        operands.append(r)
        in_specs.append(pl.BlockSpec((None, tm, Cp), lambda n, m: (n, m, 0)))

    out = pl.pallas_call(
        functools.partial(_norm_kernel, apply_relu=apply_relu,
                          has_residual=has_residual),
        out_shape=jax.ShapeDtypeStruct((N, HWp, Cp), jnp.bfloat16),
        grid=(N, nm),
        in_specs=in_specs,
        out_specs=pl.BlockSpec((None, tm, Cp), lambda n, m: (n, m, 0)),
        compiler_params=pltpu.CompilerParams(
            dimension_semantics=("parallel", "parallel")),
        cost_estimate=pl.CostEstimate(
            flops=int(3 * N * HWp * Cp), transcendentals=0,
            bytes_accessed=int((3 + int(has_residual)) * N * HWp * Cp * 2)),
    )(*operands)

    return out[:, :HW, :Cout].reshape(N, Ho, Wo, Cout)


# -------------------------------- parameters -----------------------------------

def init_params(key):
    keys = iter(jax.random.split(key, 40))

    def conv_p(cin, cout, k):
        w = jax.random.normal(next(keys), (k, k, cin, cout), jnp.float32)
        w = w * (1.0 / jnp.sqrt(float(k * k * cin)))
        b = 0.01 * jax.random.normal(next(keys), (cout,), jnp.float32)
        return {"w": w, "b": b}   # bias kept for fidelity; IN cancels it exactly.

    def in_p(c):
        g = 1.0 + 0.1 * jax.random.normal(next(keys), (c,), jnp.float32)
        bt = 0.1 * jax.random.normal(next(keys), (c,), jnp.float32)
        return {"g": g, "b": bt}

    def res_p(c):
        return {"conv1": conv_p(c, c, 3), "in1": in_p(c),
                "conv2": conv_p(c, c, 3), "in2": in_p(c)}

    return {
        "conv1": conv_p(3, 32, 9),   "in1": in_p(32),
        "conv2": conv_p(32, 64, 3),  "in2": in_p(64),
        "conv3": conv_p(64, 128, 3), "in3": in_p(128),
        "res1": res_p(128), "res2": res_p(128), "res3": res_p(128),
    }


# ------------------------------- forward pass -----------------------------------

def encoder_forward(params, x_nchw):
    x = jnp.transpose(x_nchw, (0, 2, 3, 1)).astype(jnp.bfloat16)   # NCHW -> NHWC
    p = params
    y = conv_instnorm(x, p["conv1"]["w"], p["in1"]["g"], p["in1"]["b"], 1,
                      apply_relu=True)
    y = conv_instnorm(y, p["conv2"]["w"], p["in2"]["g"], p["in2"]["b"], 2,
                      apply_relu=True)
    y = conv_instnorm(y, p["conv3"]["w"], p["in3"]["g"], p["in3"]["b"], 2,
                      apply_relu=True)
    for name in ("res1", "res2", "res3"):
        rp = params[name]
        res = y
        h = conv_instnorm(y, rp["conv1"]["w"], rp["in1"]["g"], rp["in1"]["b"], 1,
                          apply_relu=True)
        y = conv_instnorm(h, rp["conv2"]["w"], rp["in2"]["g"], rp["in2"]["b"], 1,
                          apply_relu=False, residual=res)
    out = jnp.transpose(y, (0, 3, 1, 2)).astype(jnp.float32)        # NHWC -> NCHW
    return {"block4Out": out}


# ----------------------- pure-JAX reference (same numerics) ---------------------

def _ref_layer(x, w, gamma, beta, stride, relu, residual=None):
    """Mirrors the kernel's numerics: bf16 conv operands, f32 accumulation/IN,
    bf16 conv output before affine, no conv bias (cancelled by IN)."""
    pad = w.shape[0] // 2
    xp = jnp.pad(x.astype(jnp.bfloat16),
                 ((0, 0), (pad, pad), (pad, pad), (0, 0)), mode="reflect")
    c = lax.conv_general_dilated(xp, w.astype(jnp.bfloat16), (stride, stride),
                                 "VALID",
                                 dimension_numbers=("NHWC", "HWIO", "NHWC"),
                                 preferred_element_type=jnp.float32)
    mean = jnp.mean(c, axis=(1, 2), keepdims=True)
    var = jnp.maximum(jnp.mean(c * c, axis=(1, 2), keepdims=True) - mean * mean, 0.0)
    inv_std = lax.rsqrt(var + EPS)
    scale = gamma * inv_std
    shift = beta - mean * scale
    y = c.astype(jnp.bfloat16).astype(jnp.float32) * scale + shift
    if relu:
        y = jnp.maximum(y, 0.0)
    if residual is not None:
        y = y + residual.astype(jnp.float32)
    return y.astype(jnp.bfloat16)


def ref_forward(params, x_nchw):
    x = jnp.transpose(x_nchw, (0, 2, 3, 1)).astype(jnp.bfloat16)
    p = params
    y = _ref_layer(x, p["conv1"]["w"], p["in1"]["g"], p["in1"]["b"], 1, True)
    y = _ref_layer(y, p["conv2"]["w"], p["in2"]["g"], p["in2"]["b"], 2, True)
    y = _ref_layer(y, p["conv3"]["w"], p["in3"]["g"], p["in3"]["b"], 2, True)
    for name in ("res1", "res2", "res3"):
        rp = params[name]
        r = y
        h = _ref_layer(y, rp["conv1"]["w"], rp["in1"]["g"], rp["in1"]["b"], 1, True)
        y = _ref_layer(h, rp["conv2"]["w"], rp["in2"]["g"], rp["in2"]["b"], 1, False,
                       residual=r)
    return jnp.transpose(y, (0, 3, 1, 2)).astype(jnp.float32)


# ------------------------------------ main --------------------------------------

if __name__ == "__main__":
    key = jax.random.PRNGKey(0)
    keys = jax.random.split(key, 10)
    params = init_params(keys[0])

    # Small input consistent with conv1(3 -> 32): NCHW (batch=2, C=3, 16x16).
    x = jax.random.normal(keys[1], (2, 3, 16, 16), jnp.float32)

    fwd = jax.jit(encoder_forward)
    out = jax.block_until_ready(fwd(params, x)["block4Out"])
    assert out.shape == (2, 128, 4, 4), out.shape
    assert bool(jnp.all(jnp.isfinite(out)))

    # Single-layer checks (tight; no cross-layer chaos amplification).
    # (a) 9x9 stride-1, Cin=3 -> Cout=32 (exercises channel padding), ReLU.
    xa = jax.random.normal(keys[2], (2, 16, 16, 3), jnp.float32)
    wa = jax.random.normal(keys[3], (9, 9, 3, 32), jnp.float32) * 0.06
    ga = 1.0 + 0.1 * jax.random.normal(keys[4], (32,), jnp.float32)
    ba = 0.1 * jax.random.normal(keys[5], (32,), jnp.float32)
    ya = conv_instnorm(xa, wa, ga, ba, 1, apply_relu=True)
    ra = _ref_layer(xa, wa, ga, ba, 1, True)
    assert bool(jnp.allclose(ya.astype(jnp.float32), ra.astype(jnp.float32),
                             atol=2e-2, rtol=2e-2)), "single-layer (a) mismatch"

    # (b) 3x3 stride-1, 128 -> 128 with residual add, no ReLU (residual path).
    xb = jax.random.normal(keys[6], (2, 8, 8, 128), jnp.float32) * 0.5
    wb = jax.random.normal(keys[7], (3, 3, 128, 128), jnp.float32) / jnp.sqrt(9.0 * 128)
    gb = 1.0 + 0.1 * jax.random.normal(keys[8], (128,), jnp.float32)
    bb = 0.1 * jax.random.normal(keys[9], (128,), jnp.float32)
    resb = jax.random.normal(keys[2], (2, 8, 8, 128), jnp.float32).astype(jnp.bfloat16)
    yb = conv_instnorm(xb, wb, gb, bb, 1, apply_relu=False, residual=resb)
    rb = _ref_layer(xb, wb, gb, bb, 1, False, residual=resb)
    assert bool(jnp.allclose(yb.astype(jnp.float32), rb.astype(jnp.float32),
                             atol=2e-2, rtol=2e-2)), "single-layer (b) mismatch"

    # End-to-end sanity vs the same-numerics reference.  Eight stacked bf16
    # conv + small-sample InstanceNorm layers are chaotically sensitive, so use
    # a norm-based criterion here (a real bug gives relative error ~O(1)).
    ref = jax.block_until_ready(ref_forward(params, x))
    rel = jnp.linalg.norm(out - ref) / (jnp.linalg.norm(ref) + 1e-12)
    assert float(rel) < 1e-1, f"end-to-end relative error too large: {float(rel)}"

    print("KERNEL_OK")
</pallas_src>

<mosaic_0001>
module attributes {stable_mosaic.version = 11 : i64} {
  func.func @_conv_stats_kernel(%arg0: i32, %arg1: i32, %arg2: i32, %arg3: memref<1x256x256xbf16, #tpu.memory_space<vmem>>, %arg4: memref<256x128xbf16, #tpu.memory_space<vmem>>, %arg5: memref<1x256x128xbf16, #tpu.memory_space<vmem>>, %arg6: memref<1x1x8x128xf32, #tpu.memory_space<vmem>>, %arg7: memref<256x128xf32, #tpu.memory_space<vmem>>) attributes {dimension_semantics = [#tpu.dimension_semantics<parallel>, #tpu.dimension_semantics<parallel>, #tpu.dimension_semantics<arbitrary>], iteration_bounds = array<i64: 2, 1, 1>, scalar_prefetch = 0 : i64, scratch_operands = 1 : i64, tpu.core_type = #tpu.core_type<tc>, window_params = [{transform_indices = @transform_0, window_bounds = array<i64: 1, 256, 256>}, {transform_indices = @transform_1, window_bounds = array<i64: 256, 128>}, {transform_indices = @transform_2, window_bounds = array<i64: 1, 256, 128>}, {transform_indices = @transform_3, window_bounds = array<i64: 1, 1, 8, 128>}]} {
    %c0_i32 = arith.constant 0 : i32
    %0 = arith.cmpi eq, %arg2, %c0_i32 : i32
    %1 = arith.extui %0 : i1 to i32
    %c0_i32_0 = arith.constant 0 : i32
    %2 = arith.cmpi ne, %1, %c0_i32_0 : i32
    scf.if %2 {
      %cst_11 = arith.constant 0.000000e+00 : f32
      %13 = vector.broadcast %cst_11 : f32 to vector<256x128xf32>
      %c0_12 = arith.constant 0 : index
      %c0_13 = arith.constant 0 : index
      %14 = vector.load %arg7[%c0_12, %c0_13] : memref<256x128xf32, #tpu.memory_space<vmem>>, vector<256x128xf32>
      tpu.vector_store %arg7[%c0_12, %c0_13], %13 {strides = array<i32>} : memref<256x128xf32, #tpu.memory_space<vmem>>, vector<256x128xf32>,
    } else {
    }
    %c0 = arith.constant 0 : index
    %c0_1 = arith.constant 0 : index
    %3 = vector.load %arg7[%c0, %c0_1] : memref<256x128xf32, #tpu.memory_space<vmem>>, vector<256x128xf32>
    %c0_2 = arith.constant 0 : index
    %c0_3 = arith.constant 0 : index
    %c0_4 = arith.constant 0 : index
    %4 = vector.load %arg3[%c0_2, %c0_3, %c0_4] : memref<1x256x256xbf16, #tpu.memory_space<vmem>>, vector<1x256x256xbf16>
    %5 = vector.shape_cast %4 : vector<1x256x256xbf16> to vector<256x256xbf16>
    %c0_5 = arith.constant 0 : index
    %c0_6 = arith.constant 0 : index
    %6 = vector.load %arg4[%c0_5, %c0_6] : memref<256x128xbf16, #tpu.memory_space<vmem>>, vector<256x128xbf16>
    %cst = arith.constant dense<0.000000e+00> : vector<256x128xf32>
    %7 = tpu.matmul %5, %6, %cst {dimension_numbers = #tpu.dot_dimension_numbers<[1], [0], [0], [1], [0, 0, 1, 1], [], []>} : vector<256x256xbf16>, vector<256x128xbf16>, vector<256x128xf32> -> vector<256x128xf32>
    %8 = arith.addf %3, %7 : vector<256x128xf32>
    %c0_7 = arith.constant 0 : index
    %c0_8 = arith.constant 0 : index
    %9 = vector.load %arg7[%c0_7, %c0_8] : memref<256x128xf32, #tpu.memory_space<vmem>>, vector<256x128xf32>
    tpu.vector_store %arg7[%c0_7, %c0_8], %8 {strides = array<i32>} : memref<256x128xf32, #tpu.memory_space<vmem>>, vector<256x128xf32>,
    %c0_i32_9 = arith.constant 0 : i32
    %10 = arith.cmpi eq, %arg2, %c0_i32_9 : i32
    %11 = arith.extui %10 : i1 to i32
    %c0_i32_10 = arith.constant 0 : i32
    %12 = arith.cmpi ne, %11, %c0_i32_10 : i32
    scf.if %12 {
      %c0_11 = arith.constant 0 : index
      %c0_12 = arith.constant 0 : index
      %13 = vector.load %arg7[%c0_11, %c0_12] : memref<256x128xf32, #tpu.memory_space<vmem>>, vector<256x128xf32>
      %cst_13 = arith.constant dense<0.000000e+00> : vector<128xf32>
      %14 = vector.multi_reduction <add>, %13, %cst_13 [0] : vector<256x128xf32> to vector<128xf32>
      %15 = vector.shape_cast %14 : vector<128xf32> to vector<1x128xf32>
      %16 = arith.mulf %13, %13 : vector<256x128xf32>
      %cst_14 = arith.constant dense<0.000000e+00> : vector<128xf32>
      %17 = vector.multi_reduction <add>, %16, %cst_14 [0] : vector<256x128xf32> to vector<128xf32>
      %18 = vector.shape_cast %17 : vector<128xf32> to vector<1x128xf32>
      %19 = tpu.iota {dimensions = array<i32: 0>} : vector<8x128xi32>
      %c0_i32_15 = arith.constant 0 : i32
      %20 = vector.broadcast %c0_i32_15 : i32 to vector<8x128xi32>
      %21 = arith.cmpi eq, %19, %20 : vector<8x128xi32>
      %c1_i32 = arith.constant 1 : i32
      %22 = vector.broadcast %c1_i32 : i32 to vector<8x128xi32>
      %23 = arith.cmpi eq, %19, %22 : vector<8x128xi32>
      %cst_16 = arith.constant 0.000000e+00 : f32
      %24 = vector.shape_cast %18 : vector<1x128xf32> to vector<1x128xf32>
      %25 = vector.broadcast %24 : vector<1x128xf32> to vector<8x128xf32>
      %26 = vector.broadcast %cst_16 : f32 to vector<8x128xf32>
      %27 = arith.select %23, %25, %26 : vector<8x128xi1>, vector<8x128xf32>
      %28 = vector.shape_cast %15 : vector<1x128xf32> to vector<1x128xf32>
      %29 = vector.broadcast %28 : vector<1x128xf32> to vector<8x128xf32>
      %30 = arith.select %21, %29, %27 : vector<8x128xi1>, vector<8x128xf32>
      %c0_17 = arith.constant 0 : index
      %c0_18 = arith.constant 0 : index
      %c0_19 = arith.constant 0 : index
      %c0_20 = arith.constant 0 : index
      %31 = vector.load %arg6[%c0_17, %c0_18, %c0_19, %c0_20] : memref<1x1x8x128xf32, #tpu.memory_space<vmem>>, vector<1x1x8x128xf32>
      %32 = vector.shape_cast %31 : vector<1x1x8x128xf32> to vector<8x128xf32>
      %33 = vector.shape_cast %30 : vector<8x128xf32> to vector<1x1x8x128xf32>
      tpu.vector_store %arg6[%c0_17, %c0_18, %c0_19, %c0_20], %33 {strides = array<i32>} : memref<1x1x8x128xf32, #tpu.memory_space<vmem>>, vector<1x1x8x128xf32>,
      %34 = arith.truncf %13 : vector<256x128xf32> to vector<256x128xbf16>
      %c0_21 = arith.constant 0 : index
      %c0_22 = arith.constant 0 : index
      %c0_23 = arith.constant 0 : index
      %35 = vector.load %arg5[%c0_21, %c0_22, %c0_23] : memref<1x256x128xbf16, #tpu.memory_space<vmem>>, vector<1x256x128xbf16>
      %36 = vector.shape_cast %35 : vector<1x256x128xbf16> to vector<256x128xbf16>
      %37 = vector.shape_cast %34 : vector<256x128xbf16> to vector<1x256x128xbf16>
      tpu.vector_store %arg5[%c0_21, %c0_22, %c0_23], %37 {strides = array<i32>} : memref<1x256x128xbf16, #tpu.memory_space<vmem>>, vector<1x256x128xbf16>,
    } else {
    }
    return
  }
  func.func @transform_0(%arg0: i32, %arg1: i32, %arg2: i32) -> (i32, i32, i32) {
    %c0_i32 = arith.constant 0 : i32
    return %arg0, %arg1, %arg2 : i32, i32, i32
  }
  func.func @transform_1(%arg0: i32, %arg1: i32, %arg2: i32) -> (i32, i32) {
    %c0_i32 = arith.constant 0 : i32
    %c0_i32_0 = arith.constant 0 : i32
    return %arg2, %c0_i32 : i32, i32
  }
  func.func @transform_2(%arg0: i32, %arg1: i32, %arg2: i32) -> (i32, i32, i32) {
    %c0_i32 = arith.constant 0 : i32
    %c0_i32_0 = arith.constant 0 : i32
    return %arg0, %arg1, %c0_i32 : i32, i32, i32
  }
  func.func @transform_3(%arg0: i32, %arg1: i32, %arg2: i32) -> (i32, i32, i32, i32) {
    %c0_i32 = arith.constant 0 : i32
    %c0_i32_0 = arith.constant 0 : i32
    %c0_i32_1 = arith.constant 0 : i32
    return %arg0, %arg1, %c0_i32, %c0_i32_0 : i32, i32, i32, i32
  }
}

module attributes {stable_mosaic.version = 11 : i64} {
  func.func @_norm_kernel(%arg0: i32, %arg1: i32, %arg2: memref<1x256x128xbf16, #tpu.memory_space<vmem>>, %arg3: memref<1x1x128xf32, #tpu.memory_space<vmem>>, %arg4: memref<1x1x128xf32, #tpu.memory_space<vmem>>, %arg5: memref<1x256x128xbf16, #tpu.memory_space<vmem>>) attributes {dimension_semantics = [#tpu.dimension_semantics<parallel>, #tpu.dimension_semantics<parallel>], iteration_bounds = array<i64: 2, 1>, scalar_prefetch = 0 : i64, scratch_operands = 0 : i64, tpu.core_type = #tpu.core_type<tc>, window_params = [{transform_indices = @transform_0, window_bounds = array<i64: 1, 256, 128>}, {transform_indices = @transform_1, window_bounds = array<i64: 1, 1, 128>}, {transform_indices = @transform_2, window_bounds = array<i64: 1, 1, 128>}, {transform_indices = @transform_3, window_bounds = array<i64: 1, 256, 128>}]} {
    %c0 = arith.constant 0 : index
    %c0_0 = arith.constant 0 : index
    %c0_1 = arith.constant 0 : index
    %0 = vector.load %arg2[%c0, %c0_0, %c0_1] : memref<1x256x128xbf16, #tpu.memory_space<vmem>>, vector<1x256x128xbf16>
    %1 = vector.shape_cast %0 : vector<1x256x128xbf16> to vector<256x128xbf16>
    %2 = arith.extf %1 : vector<256x128xbf16> to vector<256x128xf32>
    %c0_2 = arith.constant 0 : index
    %c0_3 = arith.constant 0 : index
    %c0_4 = arith.constant 0 : index
    %3 = vector.load %arg3[%c0_2, %c0_3, %c0_4] : memref<1x1x128xf32, #tpu.memory_space<vmem>>, vector<1x1x128xf32>
    %4 = vector.shape_cast %3 : vector<1x1x128xf32> to vector<1x128xf32>
    %5 = vector.broadcast %4 : vector<1x128xf32> to vector<256x128xf32>
    %6 = arith.mulf %2, %5 : vector<256x128xf32>
    %c0_5 = arith.constant 0 : index
    %c0_6 = arith.constant 0 : index
    %c0_7 = arith.constant 0 : index
    %7 = vector.load %arg4[%c0_5, %c0_6, %c0_7] : memref<1x1x128xf32, #tpu.memory_space<vmem>>, vector<1x1x128xf32>
    %8 = vector.shape_cast %7 : vector<1x1x128xf32> to vector<1x128xf32>
    %9 = vector.broadcast %8 : vector<1x128xf32> to vector<256x128xf32>
    %10 = arith.addf %6, %9 : vector<256x128xf32>
    %cst = arith.constant 0.000000e+00 : f32
    %11 = vector.broadcast %cst : f32 to vector<256x128xf32>
    %12 = arith.maximumf %10, %11 : vector<256x128xf32>
    %13 = arith.truncf %12 : vector<256x128xf32> to vector<256x128xbf16>
    %c0_8 = arith.constant 0 : index
    %c0_9 = arith.constant 0 : index
    %c0_10 = arith.constant 0 : index
    %14 = vector.load %arg5[%c0_8, %c0_9, %c0_10] : memref<1x256x128xbf16, #tpu.memory_space<vmem>>, vector<1x256x128xbf16>
    %15 = vector.shape_cast %14 : vector<1x256x128xbf16> to vector<256x128xbf16>
    %16 = vector.shape_cast %13 : vector<256x128xbf16> to vector<1x256x128xbf16>
    tpu.vector_store %arg5[%c0_8, %c0_9, %c0_10], %16 {strides = array<i32>} : memref<1x256x128xbf16, #tpu.memory_space<vmem>>, vector<1x256x128xbf16>,
    return
  }
  func.func @transform_0(%arg0: i32, %arg1: i32) -> (i32, i32, i32) {
    %c0_i32 = arith.constant 0 : i32
    %c0_i32_0 = arith.constant 0 : i32
    return %arg0, %arg1, %c0_i32 : i32, i32, i32
  }
  func.func @transform_1(%arg0: i32, %arg1: i32) -> (i32, i32, i32) {
    %c0_i32 = arith.constant 0 : i32
    %c0_i32_0 = arith.constant 0 : i32
    %c0_i32_1 = arith.constant 0 : i32
    return %arg0, %c0_i32, %c0_i32_0 : i32, i32, i32
  }
  func.func @transform_2(%arg0: i32, %arg1: i32) -> (i32, i32, i32) {
    %c0_i32 = arith.constant 0 : i32
    %c0_i32_0 = arith.constant 0 : i32
    %c0_i32_1 = arith.constant 0 : i32
    return %arg0, %c0_i32, %c0_i32_0 : i32, i32, i32
  }
  func.func @transform_3(%arg0: i32, %arg1: i32) -> (i32, i32, i32) {
    %c0_i32 = arith.constant 0 : i32
    %c0_i32_0 = arith.constant 0 : i32
    return %arg0, %arg1, %c0_i32 : i32, i32, i32
  }
}

module attributes {stable_mosaic.version = 11 : i64} {
  func.func @_conv_stats_kernel(%arg0: i32, %arg1: i32, %arg2: i32, %arg3: memref<1x64x384xbf16, #tpu.memory_space<vmem>>, %arg4: memref<384x128xbf16, #tpu.memory_space<vmem>>, %arg5: memref<1x64x128xbf16, #tpu.memory_space<vmem>>, %arg6: memref<1x1x8x128xf32, #tpu.memory_space<vmem>>, %arg7: memref<64x128xf32, #tpu.memory_space<vmem>>) attributes {dimension_semantics = [#tpu.dimension_semantics<parallel>, #tpu.dimension_semantics<parallel>, #tpu.dimension_semantics<arbitrary>], iteration_bounds = array<i64: 2, 1, 1>, scalar_prefetch = 0 : i64, scratch_operands = 1 : i64, tpu.core_type = #tpu.core_type<tc>, window_params = [{transform_indices = @transform_0, window_bounds = array<i64: 1, 64, 384>}, {transform_indices = @transform_1, window_bounds = array<i64: 384, 128>}, {transform_indices = @transform_2, window_bounds = array<i64: 1, 64, 128>}, {transform_indices = @transform_3, window_bounds = array<i64: 1, 1, 8, 128>}]} {
    %c0_i32 = arith.constant 0 : i32
    %0 = arith.cmpi eq, %arg2, %c0_i32 : i32
    %1 = arith.extui %0 : i1 to i32
    %c0_i32_0 = arith.constant 0 : i32
    %2 = arith.cmpi ne, %1, %c0_i32_0 : i32
    scf.if %2 {
      %cst_11 = arith.constant 0.000000e+00 : f32
      %13 = vector.broadcast %cst_11 : f32 to vector<64x128xf32>
      %c0_12 = arith.constant 0 : index
      %c0_13 = arith.constant 0 : index
      %14 = vector.load %arg7[%c0_12, %c0_13] : memref<64x128xf32, #tpu.memory_space<vmem>>, vector<64x128xf32>
      tpu.vector_store %arg7[%c0_12, %c0_13], %13 {strides = array<i32>} : memref<64x128xf32, #tpu.memory_space<vmem>>, vector<64x128xf32>,
    } else {
    }
    %c0 = arith.constant 0 : index
    %c0_1 = arith.constant 0 : index
    %3 = vector.load %arg7[%c0, %c0_1] : memref<64x128xf32, #tpu.memory_space<vmem>>, vector<64x128xf32>
    %c0_2 = arith.constant 0 : index
    %c0_3 = arith.constant 0 : index
    %c0_4 = arith.constant 0 : index
    %4 = vector.load %arg3[%c0_2, %c0_3, %c0_4] : memref<1x64x384xbf16, #tpu.memory_space<vmem>>, vector<1x64x384xbf16>
    %5 = vector.shape_cast %4 : vector<1x64x384xbf16> to vector<64x384xbf16>
    %c0_5 = arith.constant 0 : index
    %c0_6 = arith.constant 0 : index
    %6 = vector.load %arg4[%c0_5, %c0_6] : memref<384x128xbf16, #tpu.memory_space<vmem>>, vector<384x128xbf16>
    %cst = arith.constant dense<0.000000e+00> : vector<64x128xf32>
    %7 = tpu.matmul %5, %6, %cst {dimension_numbers = #tpu.dot_dimension_numbers<[1], [0], [0], [1], [0, 0, 1, 1], [], []>} : vector<64x384xbf16>, vector<384x128xbf16>, vector<64x128xf32> -> vector<64x128xf32>
    %8 = arith.addf %3, %7 : vector<64x128xf32>
    %c0_7 = arith.constant 0 : index
    %c0_8 = arith.constant 0 : index
    %9 = vector.load %arg7[%c0_7, %c0_8] : memref<64x128xf32, #tpu.memory_space<vmem>>, vector<64x128xf32>
    tpu.vector_store %arg7[%c0_7, %c0_8], %8 {strides = array<i32>} : memref<64x128xf32, #tpu.memory_space<vmem>>, vector<64x128xf32>,
    %c0_i32_9 = arith.constant 0 : i32
    %10 = arith.cmpi eq, %arg2, %c0_i32_9 : i32
    %11 = arith.extui %10 : i1 to i32
    %c0_i32_10 = arith.constant 0 : i32
    %12 = arith.cmpi ne, %11, %c0_i32_10 : i32
    scf.if %12 {
      %c0_11 = arith.constant 0 : index
      %c0_12 = arith.constant 0 : index
      %13 = vector.load %arg7[%c0_11, %c0_12] : memref<64x128xf32, #tpu.memory_space<vmem>>, vector<64x128xf32>
      %cst_13 = arith.constant dense<0.000000e+00> : vector<128xf32>
      %14 = vector.multi_reduction <add>, %13, %cst_13 [0] : vector<64x128xf32> to vector<128xf32>
      %15 = vector.shape_cast %14 : vector<128xf32> to vector<1x128xf32>
      %16 = arith.mulf %13, %13 : vector<64x128xf32>
      %cst_14 = arith.constant dense<0.000000e+00> : vector<128xf32>
      %17 = vector.multi_reduction <add>, %16, %cst_14 [0] : vector<64x128xf32> to vector<128xf32>
      %18 = vector.shape_cast %17 : vector<128xf32> to vector<1x128xf32>
      %19 = tpu.iota {dimensions = array<i32: 0>} : vector<8x128xi32>
      %c0_i32_15 = arith.constant 0 : i32
      %20 = vector.broadcast %c0_i32_15 : i32 to vector<8x128xi32>
      %21 = arith.cmpi eq, %19, %20 : vector<8x128xi32>
      %c1_i32 = arith.constant 1 : i32
      %22 = vector.broadcast %c1_i32 : i32 to vector<8x128xi32>
      %23 = arith.cmpi eq, %19, %22 : vector<8x128xi32>
      %cst_16 = arith.constant 0.000000e+00 : f32
      %24 = vector.shape_cast %18 : vector<1x128xf32> to vector<1x128xf32>
      %25 = vector.broadcast %24 : vector<1x128xf32> to vector<8x128xf32>
      %26 = vector.broadcast %cst_16 : f32 to vector<8x128xf32>
      %27 = arith.select %23, %25, %26 : vector<8x128xi1>, vector<8x128xf32>
      %28 = vector.shape_cast %15 : vector<1x128xf32> to vector<1x128xf32>
      %29 = vector.broadcast %28 : vector<1x128xf32> to vector<8x128xf32>
      %30 = arith.select %21, %29, %27 : vector<8x128xi1>, vector<8x128xf32>
      %c0_17 = arith.constant 0 : index
      %c0_18 = arith.constant 0 : index
      %c0_19 = arith.constant 0 : index
      %c0_20 = arith.constant 0 : index
      %31 = vector.load %arg6[%c0_17, %c0_18, %c0_19, %c0_20] : memref<1x1x8x128xf32, #tpu.memory_space<vmem>>, vector<1x1x8x128xf32>
      %32 = vector.shape_cast %31 : vector<1x1x8x128xf32> to vector<8x128xf32>
      %33 = vector.shape_cast %30 : vector<8x128xf32> to vector<1x1x8x128xf32>
      tpu.vector_store %arg6[%c0_17, %c0_18, %c0_19, %c0_20], %33 {strides = array<i32>} : memref<1x1x8x128xf32, #tpu.memory_space<vmem>>, vector<1x1x8x128xf32>,
      %34 = arith.truncf %13 : vector<64x128xf32> to vector<64x128xbf16>
      %c0_21 = arith.constant 0 : index
      %c0_22 = arith.constant 0 : index
      %c0_23 = arith.constant 0 : index
      %35 = vector.load %arg5[%c0_21, %c0_22, %c0_23] : memref<1x64x128xbf16, #tpu.memory_space<vmem>>, vector<1x64x128xbf16>
      %36 = vector.shape_cast %35 : vector<1x64x128xbf16> to vector<64x128xbf16>
      %37 = vector.shape_cast %34 : vector<64x128xbf16> to vector<1x64x128xbf16>
      tpu.vector_store %arg5[%c0_21, %c0_22, %c0_23], %37 {strides = array<i32>} : memref<1x64x128xbf16, #tpu.memory_space<vmem>>, vector<1x64x128xbf16>,
    } else {
    }
    return
  }
  func.func @transform_0(%arg0: i32, %arg1: i32, %arg2: i32) -> (i32, i32, i32) {
    %c0_i32 = arith.constant 0 : i32
    return %arg0, %arg1, %arg2 : i32, i32, i32
  }
  func.func @transform_1(%arg0: i32, %arg1: i32, %arg2: i32) -> (i32, i32) {
    %c0_i32 = arith.constant 0 : i32
    %c0_i32_0 = arith.constant 0 : i32
    return %arg2, %c0_i32 : i32, i32
  }
  func.func @transform_2(%arg0: i32, %arg1: i32, %arg2: i32) -> (i32, i32, i32) {
    %c0_i32 = arith.constant 0 : i32
    %c0_i32_0 = arith.constant 0 : i32
    return %arg0, %arg1, %c0_i32 : i32, i32, i32
  }
  func.func @transform_3(%arg0: i32, %arg1: i32, %arg2: i32) -> (i32, i32, i32, i32) {
    %c0_i32 = arith.constant 0 : i32
    %c0_i32_0 = arith.constant 0 : i32
    %c0_i32_1 = arith.constant 0 : i32
    return %arg0, %arg1, %c0_i32, %c0_i32_0 : i32, i32, i32, i32
  }
}

module attributes {stable_mosaic.version = 11 : i64} {
  func.func @_norm_kernel(%arg0: i32, %arg1: i32, %arg2: memref<1x64x128xbf16, #tpu.memory_space<vmem>>, %arg3: memref<1x1x128xf32, #tpu.memory_space<vmem>>, %arg4: memref<1x1x128xf32, #tpu.memory_space<vmem>>, %arg5: memref<1x64x128xbf16, #tpu.memory_space<vmem>>) attributes {dimension_semantics = [#tpu.dimension_semantics<parallel>, #tpu.dimension_semantics<parallel>], iteration_bounds = array<i64: 2, 1>, scalar_prefetch = 0 : i64, scratch_operands = 0 : i64, tpu.core_type = #tpu.core_type<tc>, window_params = [{transform_indices = @transform_0, window_bounds = array<i64: 1, 64, 128>}, {transform_indices = @transform_1, window_bounds = array<i64: 1, 1, 128>}, {transform_indices = @transform_2, window_bounds = array<i64: 1, 1, 128>}, {transform_indices = @transform_3, window_bounds = array<i64: 1, 64, 128>}]} {
    %c0 = arith.constant 0 : index
    %c0_0 = arith.constant 0 : index
    %c0_1 = arith.constant 0 : index
    %0 = vector.load %arg2[%c0, %c0_0, %c0_1] : memref<1x64x128xbf16, #tpu.memory_space<vmem>>, vector<1x64x128xbf16>
    %1 = vector.shape_cast %0 : vector<1x64x128xbf16> to vector<64x128xbf16>
    %2 = arith.extf %1 : vector<64x128xbf16> to vector<64x128xf32>
    %c0_2 = arith.constant 0 : index
    %c0_3 = arith.constant 0 : index
    %c0_4 = arith.constant 0 : index
    %3 = vector.load %arg3[%c0_2, %c0_3, %c0_4] : memref<1x1x128xf32, #tpu.memory_space<vmem>>, vector<1x1x128xf32>
    %4 = vector.shape_cast %3 : vector<1x1x128xf32> to vector<1x128xf32>
    %5 = vector.broadcast %4 : vector<1x128xf32> to vector<64x128xf32>
    %6 = arith.mulf %2, %5 : vector<64x128xf32>
    %c0_5 = arith.constant 0 : index
    %c0_6 = arith.constant 0 : index
    %c0_7 = arith.constant 0 : index
    %7 = vector.load %arg4[%c0_5, %c0_6, %c0_7] : memref<1x1x128xf32, #tpu.memory_space<vmem>>, vector<1x1x128xf32>
    %8 = vector.shape_cast %7 : vector<1x1x128xf32> to vector<1x128xf32>
    %9 = vector.broadcast %8 : vector<1x128xf32> to vector<64x128xf32>
    %10 = arith.addf %6, %9 : vector<64x128xf32>
    %cst = arith.constant 0.000000e+00 : f32
    %11 = vector.broadcast %cst : f32 to vector<64x128xf32>
    %12 = arith.maximumf %10, %11 : vector<64x128xf32>
    %13 = arith.truncf %12 : vector<64x128xf32> to vector<64x128xbf16>
    %c0_8 = arith.constant 0 : index
    %c0_9 = arith.constant 0 : index
    %c0_10 = arith.constant 0 : index
    %14 = vector.load %arg5[%c0_8, %c0_9, %c0_10] : memref<1x64x128xbf16, #tpu.memory_space<vmem>>, vector<1x64x128xbf16>
    %15 = vector.shape_cast %14 : vector<1x64x128xbf16> to vector<64x128xbf16>
    %16 = vector.shape_cast %13 : vector<64x128xbf16> to vector<1x64x128xbf16>
    tpu.vector_store %arg5[%c0_8, %c0_9, %c0_10], %16 {strides = array<i32>} : memref<1x64x128xbf16, #tpu.memory_space<vmem>>, vector<1x64x128xbf16>,
    return
  }
  func.func @transform_0(%arg0: i32, %arg1: i32) -> (i32, i32, i32) {
    %c0_i32 = arith.constant 0 : i32
    %c0_i32_0 = arith.constant 0 : i32
    return %arg0, %arg1, %c0_i32 : i32, i32, i32
  }
  func.func @transform_1(%arg0: i32, %arg1: i32) -> (i32, i32, i32) {
    %c0_i32 = arith.constant 0 : i32
    %c0_i32_0 = arith.constant 0 : i32
    %c0_i32_1 = arith.constant 0 : i32
    return %arg0, %c0_i32, %c0_i32_0 : i32, i32, i32
  }
  func.func @transform_2(%arg0: i32, %arg1: i32) -> (i32, i32, i32) {
    %c0_i32 = arith.constant 0 : i32
    %c0_i32_0 = arith.constant 0 : i32
    %c0_i32_1 = arith.constant 0 : i32
    return %arg0, %c0_i32, %c0_i32_0 : i32, i32, i32
  }
  func.func @transform_3(%arg0: i32, %arg1: i32) -> (i32, i32, i32) {
    %c0_i32 = arith.constant 0 : i32
    %c0_i32_0 = arith.constant 0 : i32
    return %arg0, %arg1, %c0_i32 : i32, i32, i32
  }
}

module attributes {stable_mosaic.version = 11 : i64} {
  func.func @_norm_kernel(%arg0: i32, %arg1: i32, %arg2: memref<1x16x128xbf16, #tpu.memory_space<vmem>>, %arg3: memref<1x1x128xf32, #tpu.memory_space<vmem>>, %arg4: memref<1x1x128xf32, #tpu.memory_space<vmem>>, %arg5: memref<1x16x128xbf16, #tpu.memory_space<vmem>>) attributes {dimension_semantics = [#tpu.dimension_semantics<parallel>, #tpu.dimension_semantics<parallel>], iteration_bounds = array<i64: 2, 1>, scalar_prefetch = 0 : i64, scratch_operands = 0 : i64, tpu.core_type = #tpu.core_type<tc>, window_params = [{transform_indices = @transform_0, window_bounds = array<i64: 1, 16, 128>}, {transform_indices = @transform_1, window_bounds = array<i64: 1, 1, 128>}, {transform_indices = @transform_2, window_bounds = array<i64: 1, 1, 128>}, {transform_indices = @transform_3, window_bounds = array<i64: 1, 16, 128>}]} {
    %c0 = arith.constant 0 : index
    %c0_0 = arith.constant 0 : index
    %c0_1 = arith.constant 0 : index
    %0 = vector.load %arg2[%c0, %c0_0, %c0_1] : memref<1x16x128xbf16, #tpu.memory_space<vmem>>, vector<1x16x128xbf16>
    %1 = vector.shape_cast %0 : vector<1x16x128xbf16> to vector<16x128xbf16>
    %2 = arith.extf %1 : vector<16x128xbf16> to vector<16x128xf32>
    %c0_2 = arith.constant 0 : index
    %c0_3 = arith.constant 0 : index
    %c0_4 = arith.constant 0 : index
    %3 = vector.load %arg3[%c0_2, %c0_3, %c0_4] : memref<1x1x128xf32, #tpu.memory_space<vmem>>, vector<1x1x128xf32>
    %4 = vector.shape_cast %3 : vector<1x1x128xf32> to vector<1x128xf32>
    %5 = vector.broadcast %4 : vector<1x128xf32> to vector<16x128xf32>
    %6 = arith.mulf %2, %5 : vector<16x128xf32>
    %c0_5 = arith.constant 0 : index
    %c0_6 = arith.constant 0 : index
    %c0_7 = arith.constant 0 : index
    %7 = vector.load %arg4[%c0_5, %c0_6, %c0_7] : memref<1x1x128xf32, #tpu.memory_space<vmem>>, vector<1x1x128xf32>
    %8 = vector.shape_cast %7 : vector<1x1x128xf32> to vector<1x128xf32>
    %9 = vector.broadcast %8 : vector<1x128xf32> to vector<16x128xf32>
    %10 = arith.addf %6, %9 : vector<16x128xf32>
    %cst = arith.constant 0.000000e+00 : f32
    %11 = vector.broadcast %cst : f32 to vector<16x128xf32>
    %12 = arith.maximumf %10, %11 : vector<16x128xf32>
    %13 = arith.truncf %12 : vector<16x128xf32> to vector<16x128xbf16>
    %c0_8 = arith.constant 0 : index
    %c0_9 = arith.constant 0 : index
    %c0_10 = arith.constant 0 : index
    %14 = vector.load %arg5[%c0_8, %c0_9, %c0_10] : memref<1x16x128xbf16, #tpu.memory_space<vmem>>, vector<1x16x128xbf16>
    %15 = vector.shape_cast %14 : vector<1x16x128xbf16> to vector<16x128xbf16>
    %16 = vector.shape_cast %13 : vector<16x128xbf16> to vector<1x16x128xbf16>
    tpu.vector_store %arg5[%c0_8, %c0_9, %c0_10], %16 {strides = array<i32>} : memref<1x16x128xbf16, #tpu.memory_space<vmem>>, vector<1x16x128xbf16>,
    return
  }
  func.func @transform_0(%arg0: i32, %arg1: i32) -> (i32, i32, i32) {
    %c0_i32 = arith.constant 0 : i32
    %c0_i32_0 = arith.constant 0 : i32
    return %arg0, %arg1, %c0_i32 : i32, i32, i32
  }
  func.func @transform_1(%arg0: i32, %arg1: i32) -> (i32, i32, i32) {
    %c0_i32 = arith.constant 0 : i32
    %c0_i32_0 = arith.constant 0 : i32
    %c0_i32_1 = arith.constant 0 : i32
    return %arg0, %c0_i32, %c0_i32_0 : i32, i32, i32
  }
  func.func @transform_2(%arg0: i32, %arg1: i32) -> (i32, i32, i32) {
    %c0_i32 = arith.constant 0 : i32
    %c0_i32_0 = arith.constant 0 : i32
    %c0_i32_1 = arith.constant 0 : i32
    return %arg0, %c0_i32, %c0_i32_0 : i32, i32, i32
  }
  func.func @transform_3(%arg0: i32, %arg1: i32) -> (i32, i32, i32) {
    %c0_i32 = arith.constant 0 : i32
    %c0_i32_0 = arith.constant 0 : i32
    return %arg0, %arg1, %c0_i32 : i32, i32, i32
  }
}

module attributes {stable_mosaic.version = 11 : i64} {
  func.func @_conv_stats_kernel(%arg0: i32, %arg1: i32, %arg2: i32, %arg3: memref<1x16x640xbf16, #tpu.memory_space<vmem>>, %arg4: memref<640x128xbf16, #tpu.memory_space<vmem>>, %arg5: memref<1x16x128xbf16, #tpu.memory_space<vmem>>, %arg6: memref<1x1x8x128xf32, #tpu.memory_space<vmem>>, %arg7: memref<16x128xf32, #tpu.memory_space<vmem>>) attributes {dimension_semantics = [#tpu.dimension_semantics<parallel>, #tpu.dimension_semantics<parallel>, #tpu.dimension_semantics<arbitrary>], iteration_bounds = array<i64: 2, 1, 1>, scalar_prefetch = 0 : i64, scratch_operands = 1 : i64, tpu.core_type = #tpu.core_type<tc>, window_params = [{transform_indices = @transform_0, window_bounds = array<i64: 1, 16, 640>}, {transform_indices = @transform_1, window_bounds = array<i64: 640, 128>}, {transform_indices = @transform_2, window_bounds = array<i64: 1, 16, 128>}, {transform_indices = @transform_3, window_bounds = array<i64: 1, 1, 8, 128>}]} {
    %c0_i32 = arith.constant 0 : i32
    %0 = arith.cmpi eq, %arg2, %c0_i32 : i32
    %1 = arith.extui %0 : i1 to i32
    %c0_i32_0 = arith.constant 0 : i32
    %2 = arith.cmpi ne, %1, %c0_i32_0 : i32
    scf.if %2 {
      %cst_11 = arith.constant 0.000000e+00 : f32
      %13 = vector.broadcast %cst_11 : f32 to vector<16x128xf32>
      %c0_12 = arith.constant 0 : index
      %c0_13 = arith.constant 0 : index
      %14 = vector.load %arg7[%c0_12, %c0_13] : memref<16x128xf32, #tpu.memory_space<vmem>>, vector<16x128xf32>
      tpu.vector_store %arg7[%c0_12, %c0_13], %13 {strides = array<i32>} : memref<16x128xf32, #tpu.memory_space<vmem>>, vector<16x128xf32>,
    } else {
    }
    %c0 = arith.constant 0 : index
    %c0_1 = arith.constant 0 : index
    %3 = vector.load %arg7[%c0, %c0_1] : memref<16x128xf32, #tpu.memory_space<vmem>>, vector<16x128xf32>
    %c0_2 = arith.constant 0 : index
    %c0_3 = arith.constant 0 : index
    %c0_4 = arith.constant 0 : index
    %4 = vector.load %arg3[%c0_2, %c0_3, %c0_4] : memref<1x16x640xbf16, #tpu.memory_space<vmem>>, vector<1x16x640xbf16>
    %5 = vector.shape_cast %4 : vector<1x16x640xbf16> to vector<16x640xbf16>
    %c0_5 = arith.constant 0 : index
    %c0_6 = arith.constant 0 : index
    %6 = vector.load %arg4[%c0_5, %c0_6] : memref<640x128xbf16, #tpu.memory_space<vmem>>, vector<640x128xbf16>
    %cst = arith.constant dense<0.000000e+00> : vector<16x128xf32>
    %7 = tpu.matmul %5, %6, %cst {dimension_numbers = #tpu.dot_dimension_numbers<[1], [0], [0], [1], [0, 0, 1, 1], [], []>} : vector<16x640xbf16>, vector<640x128xbf16>, vector<16x128xf32> -> vector<16x128xf32>
    %8 = arith.addf %3, %7 : vector<16x128xf32>
    %c0_7 = arith.constant 0 : index
    %c0_8 = arith.constant 0 : index
    %9 = vector.load %arg7[%c0_7, %c0_8] : memref<16x128xf32, #tpu.memory_space<vmem>>, vector<16x128xf32>
    tpu.vector_store %arg7[%c0_7, %c0_8], %8 {strides = array<i32>} : memref<16x128xf32, #tpu.memory_space<vmem>>, vector<16x128xf32>,
    %c0_i32_9 = arith.constant 0 : i32
    %10 = arith.cmpi eq, %arg2, %c0_i32_9 : i32
    %11 = arith.extui %10 : i1 to i32
    %c0_i32_10 = arith.constant 0 : i32
    %12 = arith.cmpi ne, %11, %c0_i32_10 : i32
    scf.if %12 {
      %c0_11 = arith.constant 0 : index
      %c0_12 = arith.constant 0 : index
      %13 = vector.load %arg7[%c0_11, %c0_12] : memref<16x128xf32, #tpu.memory_space<vmem>>, vector<16x128xf32>
      %cst_13 = arith.constant dense<0.000000e+00> : vector<128xf32>
      %14 = vector.multi_reduction <add>, %13, %cst_13 [0] : vector<16x128xf32> to vector<128xf32>
      %15 = vector.shape_cast %14 : vector<128xf32> to vector<1x128xf32>
      %16 = arith.mulf %13, %13 : vector<16x128xf32>
      %cst_14 = arith.constant dense<0.000000e+00> : vector<128xf32>
      %17 = vector.multi_reduction <add>, %16, %cst_14 [0] : vector<16x128xf32> to vector<128xf32>
      %18 = vector.shape_cast %17 : vector<128xf32> to vector<1x128xf32>
      %19 = tpu.iota {dimensions = array<i32: 0>} : vector<8x128xi32>
      %c0_i32_15 = arith.constant 0 : i32
      %20 = vector.broadcast %c0_i32_15 : i32 to vector<8x128xi32>
      %21 = arith.cmpi eq, %19, %20 : vector<8x128xi32>
      %c1_i32 = arith.constant 1 : i32
      %22 = vector.broadcast %c1_i32 : i32 to vector<8x128xi32>
      %23 = arith.cmpi eq, %19, %22 : vector<8x128xi32>
      %cst_16 = arith.constant 0.000000e+00 : f32
      %24 = vector.shape_cast %18 : vector<1x128xf32> to vector<1x128xf32>
      %25 = vector.broadcast %24 : vector<1x128xf32> to vector<8x128xf32>
      %26 = vector.broadcast %cst_16 : f32 to vector<8x128xf32>
      %27 = arith.select %23, %25, %26 : vector<8x128xi1>, vector<8x128xf32>
      %28 = vector.shape_cast %15 : vector<1x128xf32> to vector<1x128xf32>
      %29 = vector.broadcast %28 : vector<1x128xf32> to vector<8x128xf32>
      %30 = arith.select %21, %29, %27 : vector<8x128xi1>, vector<8x128xf32>
      %c0_17 = arith.constant 0 : index
      %c0_18 = arith.constant 0 : index
      %c0_19 = arith.constant 0 : index
      %c0_20 = arith.constant 0 : index
      %31 = vector.load %arg6[%c0_17, %c0_18, %c0_19, %c0_20] : memref<1x1x8x128xf32, #tpu.memory_space<vmem>>, vector<1x1x8x128xf32>
      %32 = vector.shape_cast %31 : vector<1x1x8x128xf32> to vector<8x128xf32>
      %33 = vector.shape_cast %30 : vector<8x128xf32> to vector<1x1x8x128xf32>
      tpu.vector_store %arg6[%c0_17, %c0_18, %c0_19, %c0_20], %33 {strides = array<i32>} : memref<1x1x8x128xf32, #tpu.memory_space<vmem>>, vector<1x1x8x128xf32>,
      %34 = arith.truncf %13 : vector<16x128xf32> to vector<16x128xbf16>
      %c0_21 = arith.constant 0 : index
      %c0_22 = arith.constant 0 : index
      %c0_23 = arith.constant 0 : index
      %35 = vector.load %arg5[%c0_21, %c0_22, %c0_23] : memref<1x16x128xbf16, #tpu.memory_space<vmem>>, vector<1x16x128xbf16>
      %36 = vector.shape_cast %35 : vector<1x16x128xbf16> to vector<16x128xbf16>
      %37 = vector.shape_cast %34 : vector<16x128xbf16> to vector<1x16x128xbf16>
      tpu.vector_store %arg5[%c0_21, %c0_22, %c0_23], %37 {strides = array<i32>} : memref<1x16x128xbf16, #tpu.memory_space<vmem>>, vector<1x16x128xbf16>,
    } else {
    }
    return
  }
  func.func @transform_0(%arg0: i32, %arg1: i32, %arg2: i32) -> (i32, i32, i32) {
    %c0_i32 = arith.constant 0 : i32
    return %arg0, %arg1, %arg2 : i32, i32, i32
  }
  func.func @transform_1(%arg0: i32, %arg1: i32, %arg2: i32) -> (i32, i32) {
    %c0_i32 = arith.constant 0 : i32
    %c0_i32_0 = arith.constant 0 : i32
    return %arg2, %c0_i32 : i32, i32
  }
  func.func @transform_2(%arg0: i32, %arg1: i32, %arg2: i32) -> (i32, i32, i32) {
    %c0_i32 = arith.constant 0 : i32
    %c0_i32_0 = arith.constant 0 : i32
    return %arg0, %arg1, %c0_i32 : i32, i32, i32
  }
  func.func @transform_3(%arg0: i32, %arg1: i32, %arg2: i32) -> (i32, i32, i32, i32) {
    %c0_i32 = arith.constant 0 : i32
    %c0_i32_0 = arith.constant 0 : i32
    %c0_i32_1 = arith.constant 0 : i32
    return %arg0, %arg1, %c0_i32, %c0_i32_0 : i32, i32, i32, i32
  }
}

module attributes {stable_mosaic.version = 11 : i64} {
  func.func @_norm_kernel(%arg0: i32, %arg1: i32, %arg2: memref<1x16x128xbf16, #tpu.memory_space<vmem>>, %arg3: memref<1x1x128xf32, #tpu.memory_space<vmem>>, %arg4: memref<1x1x128xf32, #tpu.memory_space<vmem>>, %arg5: memref<1x16x128xbf16, #tpu.memory_space<vmem>>, %arg6: memref<1x16x128xbf16, #tpu.memory_space<vmem>>) attributes {dimension_semantics = [#tpu.dimension_semantics<parallel>, #tpu.dimension_semantics<parallel>], iteration_bounds = array<i64: 2, 1>, scalar_prefetch = 0 : i64, scratch_operands = 0 : i64, tpu.core_type = #tpu.core_type<tc>, window_params = [{transform_indices = @transform_0, window_bounds = array<i64: 1, 16, 128>}, {transform_indices = @transform_1, window_bounds = array<i64: 1, 1, 128>}, {transform_indices = @transform_2, window_bounds = array<i64: 1, 1, 128>}, {transform_indices = @transform_3, window_bounds = array<i64: 1, 16, 128>}, {transform_indices = @transform_4, window_bounds = array<i64: 1, 16, 128>}]} {
    %c0 = arith.constant 0 : index
    %c0_0 = arith.constant 0 : index
    %c0_1 = arith.constant 0 : index
    %0 = vector.load %arg2[%c0, %c0_0, %c0_1] : memref<1x16x128xbf16, #tpu.memory_space<vmem>>, vector<1x16x128xbf16>
    %1 = vector.shape_cast %0 : vector<1x16x128xbf16> to vector<16x128xbf16>
    %2 = arith.extf %1 : vector<16x128xbf16> to vector<16x128xf32>
    %c0_2 = arith.constant 0 : index
    %c0_3 = arith.constant 0 : index
    %c0_4 = arith.constant 0 : index
    %3 = vector.load %arg3[%c0_2, %c0_3, %c0_4] : memref<1x1x128xf32, #tpu.memory_space<vmem>>, vector<1x1x128xf32>
    %4 = vector.shape_cast %3 : vector<1x1x128xf32> to vector<1x128xf32>
    %5 = vector.broadcast %4 : vector<1x128xf32> to vector<16x128xf32>
    %6 = arith.mulf %2, %5 : vector<16x128xf32>
    %c0_5 = arith.constant 0 : index
    %c0_6 = arith.constant 0 : index
    %c0_7 = arith.constant 0 : index
    %7 = vector.load %arg4[%c0_5, %c0_6, %c0_7] : memref<1x1x128xf32, #tpu.memory_space<vmem>>, vector<1x1x128xf32>
    %8 = vector.shape_cast %7 : vector<1x1x128xf32> to vector<1x128xf32>
    %9 = vector.broadcast %8 : vector<1x128xf32> to vector<16x128xf32>
    %10 = arith.addf %6, %9 : vector<16x128xf32>
    %c0_8 = arith.constant 0 : index
    %c0_9 = arith.constant 0 : index
    %c0_10 = arith.constant 0 : index
    %11 = vector.load %arg5[%c0_8, %c0_9, %c0_10] : memref<1x16x128xbf16, #tpu.memory_space<vmem>>, vector<1x16x128xbf16>
    %12 = vector.shape_cast %11 : vector<1x16x128xbf16> to vector<16x128xbf16>
    %13 = arith.extf %12 : vector<16x128xbf16> to vector<16x128xf32>
    %14 = arith.addf %10, %13 : vector<16x128xf32>
    %15 = arith.truncf %14 : vector<16x128xf32> to vector<16x128xbf16>
    %c0_11 = arith.constant 0 : index
    %c0_12 = arith.constant 0 : index
    %c0_13 = arith.constant 0 : index
    %16 = vector.load %arg6[%c0_11, %c0_12, %c0_13] : memref<1x16x128xbf16, #tpu.memory_space<vmem>>, vector<1x16x128xbf16>
    %17 = vector.shape_cast %16 : vector<1x16x128xbf16> to vector<16x128xbf16>
    %18 = vector.shape_cast %15 : vector<16x128xbf16> to vector<1x16x128xbf16>
    tpu.vector_store %arg6[%c0_11, %c0_12, %c0_13], %18 {strides = array<i32>} : memref<1x16x128xbf16, #tpu.memory_space<vmem>>, vector<1x16x128xbf16>,
    return
  }
  func.func @transform_0(%arg0: i32, %arg1: i32) -> (i32, i32, i32) {
    %c0_i32 = arith.constant 0 : i32
    %c0_i32_0 = arith.constant 0 : i32
    return %arg0, %arg1, %c0_i32 : i32, i32, i32
  }
  func.func @transform_1(%arg0: i32, %arg1: i32) -> (i32, i32, i32) {
    %c0_i32 = arith.constant 0 : i32
    %c0_i32_0 = arith.constant 0 : i32
    %c0_i32_1 = arith.constant 0 : i32
    return %arg0, %c0_i32, %c0_i32_0 : i32, i32, i32
  }
  func.func @transform_2(%arg0: i32, %arg1: i32) -> (i32, i32, i32) {
    %c0_i32 = arith.constant 0 : i32
    %c0_i32_0 = arith.constant 0 : i32
    %c0_i32_1 = arith.constant 0 : i32
    return %arg0, %c0_i32, %c0_i32_0 : i32, i32, i32
  }
  func.func @transform_3(%arg0: i32, %arg1: i32) -> (i32, i32, i32) {
    %c0_i32 = arith.constant 0 : i32
    %c0_i32_0 = arith.constant 0 : i32
    return %arg0, %arg1, %c0_i32 : i32, i32, i32
  }
  func.func @transform_4(%arg0: i32, %arg1: i32) -> (i32, i32, i32) {
    %c0_i32 = arith.constant 0 : i32
    %c0_i32_0 = arith.constant 0 : i32
    return %arg0, %arg1, %c0_i32 : i32, i32, i32
  }
}

module attributes {stable_mosaic.version = 11 : i64} {
  func.func @_conv_stats_kernel(%arg0: i32, %arg1: i32, %arg2: i32, %arg3: memref<1x16x1152xbf16, #tpu.memory_space<vmem>>, %arg4: memref<1152x128xbf16, #tpu.memory_space<vmem>>, %arg5: memref<1x16x128xbf16, #tpu.memory_space<vmem>>, %arg6: memref<1x1x8x128xf32, #tpu.memory_space<vmem>>, %arg7: memref<16x128xf32, #tpu.memory_space<vmem>>) attributes {dimension_semantics = [#tpu.dimension_semantics<parallel>, #tpu.dimension_semantics<parallel>, #tpu.dimension_semantics<arbitrary>], iteration_bounds = array<i64: 2, 1, 1>, scalar_prefetch = 0 : i64, scratch_operands = 1 : i64, tpu.core_type = #tpu.core_type<tc>, window_params = [{transform_indices = @transform_0, window_bounds = array<i64: 1, 16, 1152>}, {transform_indices = @transform_1, window_bounds = array<i64: 1152, 128>}, {transform_indices = @transform_2, window_bounds = array<i64: 1, 16, 128>}, {transform_indices = @transform_3, window_bounds = array<i64: 1, 1, 8, 128>}]} {
    %c0_i32 = arith.constant 0 : i32
    %0 = arith.cmpi eq, %arg2, %c0_i32 : i32
    %1 = arith.extui %0 : i1 to i32
    %c0_i32_0 = arith.constant 0 : i32
    %2 = arith.cmpi ne, %1, %c0_i32_0 : i32
    scf.if %2 {
      %cst_11 = arith.constant 0.000000e+00 : f32
      %13 = vector.broadcast %cst_11 : f32 to vector<16x128xf32>
      %c0_12 = arith.constant 0 : index
      %c0_13 = arith.constant 0 : index
      %14 = vector.load %arg7[%c0_12, %c0_13] : memref<16x128xf32, #tpu.memory_space<vmem>>, vector<16x128xf32>
      tpu.vector_store %arg7[%c0_12, %c0_13], %13 {strides = array<i32>} : memref<16x128xf32, #tpu.memory_space<vmem>>, vector<16x128xf32>,
    } else {
    }
    %c0 = arith.constant 0 : index
    %c0_1 = arith.constant 0 : index
    %3 = vector.load %arg7[%c0, %c0_1] : memref<16x128xf32, #tpu.memory_space<vmem>>, vector<16x128xf32>
    %c0_2 = arith.constant 0 : index
    %c0_3 = arith.constant 0 : index
    %c0_4 = arith.constant 0 : index
    %4 = vector.load %arg3[%c0_2, %c0_3, %c0_4] : memref<1x16x1152xbf16, #tpu.memory_space<vmem>>, vector<1x16x1152xbf16>
    %5 = vector.shape_cast %4 : vector<1x16x1152xbf16> to vector<16x1152xbf16>
    %c0_5 = arith.constant 0 : index
    %c0_6 = arith.constant 0 : index
    %6 = vector.load %arg4[%c0_5, %c0_6] : memref<1152x128xbf16, #tpu.memory_space<vmem>>, vector<1152x128xbf16>
    %cst = arith.constant dense<0.000000e+00> : vector<16x128xf32>
    %7 = tpu.matmul %5, %6, %cst {dimension_numbers = #tpu.dot_dimension_numbers<[1], [0], [0], [1], [0, 0, 1, 1], [], []>} : vector<16x1152xbf16>, vector<1152x128xbf16>, vector<16x128xf32> -> vector<16x128xf32>
    %8 = arith.addf %3, %7 : vector<16x128xf32>
    %c0_7 = arith.constant 0 : index
    %c0_8 = arith.constant 0 : index
    %9 = vector.load %arg7[%c0_7, %c0_8] : memref<16x128xf32, #tpu.memory_space<vmem>>, vector<16x128xf32>
    tpu.vector_store %arg7[%c0_7, %c0_8], %8 {strides = array<i32>} : memref<16x128xf32, #tpu.memory_space<vmem>>, vector<16x128xf32>,
    %c0_i32_9 = arith.constant 0 : i32
    %10 = arith.cmpi eq, %arg2, %c0_i32_9 : i32
    %11 = arith.extui %10 : i1 to i32
    %c0_i32_10 = arith.constant 0 : i32
    %12 = arith.cmpi ne, %11, %c0_i32_10 : i32
    scf.if %12 {
      %c0_11 = arith.constant 0 : index
      %c0_12 = arith.constant 0 : index
      %13 = vector.load %arg7[%c0_11, %c0_12] : memref<16x128xf32, #tpu.memory_space<vmem>>, vector<16x128xf32>
      %cst_13 = arith.constant dense<0.000000e+00> : vector<128xf32>
      %14 = vector.multi_reduction <add>, %13, %cst_13 [0] : vector<16x128xf32> to vector<128xf32>
      %15 = vector.shape_cast %14 : vector<128xf32> to vector<1x128xf32>
      %16 = arith.mulf %13, %13 : vector<16x128xf32>
      %cst_14 = arith.constant dense<0.000000e+00> : vector<128xf32>
      %17 = vector.multi_reduction <add>, %16, %cst_14 [0] : vector<16x128xf32> to vector<128xf32>
      %18 = vector.shape_cast %17 : vector<128xf32> to vector<1x128xf32>
      %19 = tpu.iota {dimensions = array<i32: 0>} : vector<8x128xi32>
      %c0_i32_15 = arith.constant 0 : i32
      %20 = vector.broadcast %c0_i32_15 : i32 to vector<8x128xi32>
      %21 = arith.cmpi eq, %19, %20 : vector<8x128xi32>
      %c1_i32 = arith.constant 1 : i32
      %22 = vector.broadcast %c1_i32 : i32 to vector<8x128xi32>
      %23 = arith.cmpi eq, %19, %22 : vector<8x128xi32>
      %cst_16 = arith.constant 0.000000e+00 : f32
      %24 = vector.shape_cast %18 : vector<1x128xf32> to vector<1x128xf32>
      %25 = vector.broadcast %24 : vector<1x128xf32> to vector<8x128xf32>
      %26 = vector.broadcast %cst_16 : f32 to vector<8x128xf32>
      %27 = arith.select %23, %25, %26 : vector<8x128xi1>, vector<8x128xf32>
      %28 = vector.shape_cast %15 : vector<1x128xf32> to vector<1x128xf32>
      %29 = vector.broadcast %28 : vector<1x128xf32> to vector<8x128xf32>
      %30 = arith.select %21, %29, %27 : vector<8x128xi1>, vector<8x128xf32>
      %c0_17 = arith.constant 0 : index
      %c0_18 = arith.constant 0 : index
      %c0_19 = arith.constant 0 : index
      %c0_20 = arith.constant 0 : index
      %31 = vector.load %arg6[%c0_17, %c0_18, %c0_19, %c0_20] : memref<1x1x8x128xf32, #tpu.memory_space<vmem>>, vector<1x1x8x128xf32>
      %32 = vector.shape_cast %31 : vector<1x1x8x128xf32> to vector<8x128xf32>
      %33 = vector.shape_cast %30 : vector<8x128xf32> to vector<1x1x8x128xf32>
      tpu.vector_store %arg6[%c0_17, %c0_18, %c0_19, %c0_20], %33 {strides = array<i32>} : memref<1x1x8x128xf32, #tpu.memory_space<vmem>>, vector<1x1x8x128xf32>,
      %34 = arith.truncf %13 : vector<16x128xf32> to vector<16x128xbf16>
      %c0_21 = arith.constant 0 : index
      %c0_22 = arith.constant 0 : index
      %c0_23 = arith.constant 0 : index
      %35 = vector.load %arg5[%c0_21, %c0_22, %c0_23] : memref<1x16x128xbf16, #tpu.memory_space<vmem>>, vector<1x16x128xbf16>
      %36 = vector.shape_cast %35 : vector<1x16x128xbf16> to vector<16x128xbf16>
      %37 = vector.shape_cast %34 : vector<16x128xbf16> to vector<1x16x128xbf16>
      tpu.vector_store %arg5[%c0_21, %c0_22, %c0_23], %37 {strides = array<i32>} : memref<1x16x128xbf16, #tpu.memory_space<vmem>>, vector<1x16x128xbf16>,
    } else {
    }
    return
  }
  func.func @transform_0(%arg0: i32, %arg1: i32, %arg2: i32) -> (i32, i32, i32) {
    %c0_i32 = arith.constant 0 : i32
    return %arg0, %arg1, %arg2 : i32, i32, i32
  }
  func.func @transform_1(%arg0: i32, %arg1: i32, %arg2: i32) -> (i32, i32) {
    %c0_i32 = arith.constant 0 : i32
    %c0_i32_0 = arith.constant 0 : i32
    return %arg2, %c0_i32 : i32, i32
  }
  func.func @transform_2(%arg0: i32, %arg1: i32, %arg2: i32) -> (i32, i32, i32) {
    %c0_i32 = arith.constant 0 : i32
    %c0_i32_0 = arith.constant 0 : i32
    return %arg0, %arg1, %c0_i32 : i32, i32, i32
  }
  func.func @transform_3(%arg0: i32, %arg1: i32, %arg2: i32) -> (i32, i32, i32, i32) {
    %c0_i32 = arith.constant 0 : i32
    %c0_i32_0 = arith.constant 0 : i32
    %c0_i32_1 = arith.constant 0 : i32
    return %arg0, %arg1, %c0_i32, %c0_i32_0 : i32, i32, i32, i32
  }
}

</mosaic_0001>

<llo_original>
// kernel: mul.1
$region0: #{mul.1}
  #allocation0 [shape = 's32[1]{0}', space=sflag, size = 0x4, scoped, tag = 'scoped memory for mul.1']
  %s0 = inlined_call_operand.vmem [shape: f32[2,1,128], index: 0, kind: input, shape index: {}]
  %s1 = inlined_call_operand.vmem [shape: f32[2,1,128], index: 1, kind: input, shape index: {}]
  %s2 = inlined_call_operand.vmem [shape: f32[2,1,128], index: 2, kind: output, shape index: {}]
  %v3 = vld [vmem:[%s0] sm:$0x1]
  %v4 = vld [vmem:[%s1] sm:$0x1]
  %5 = xla_tuple %v3, %v4
  %6 = xla_tuple %5
  %v7 = vmul.f32 %v3, %v4
  %8 = xla_tuple %v7
  %9 = vst [vmem:[%s2] sm:$0x1] %v7
  %s10 = scalar_lea.vmem %s0, 1
  %v11 = vld [vmem:[%s10] sm:$0x1]
  %s12 = scalar_lea.vmem %s1, 1
  %v13 = vld [vmem:[%s12] sm:$0x1]
  %14 = xla_tuple %v11, %v13
  %15 = xla_tuple %14
  %v16 = vmul.f32 %v11, %v13
  %17 = xla_tuple %v16
  %s18 = scalar_lea.vmem %s2, 1
  %19 = vst [vmem:[%s18] sm:$0x1] %v16

// kernel: encoder_forward.19
$region0: #{encoder_forward.19}
  #allocation0 [shape = 'u32[]', space=smem, size = 0x4, offset = 0x4, fixed_abs, tag = 'smem constant byte address 0x4 - core index']
  #allocation1 [shape = 'u32[144,128]{1,0:T(1,128)}', space=vmem, size = 0x12000, scoped, tag = 'internal scratch']
  %s0 = inlined_call_operand.vmem [shape: bf16[2,256,128], index: 0, kind: input, shape index: {}]
  %s1 = inlined_call_operand.vmem [shape: f32[2,1,128], index: 1, kind: input, shape index: {}]
  %s2 = inlined_call_operand.vmem [shape: f32[2,1,128], index: 2, kind: input, shape index: {}]
  %s3 = inlined_call_operand.vmem [shape: bf16[2,256,128], index: 3, kind: output, shape index: {}]
  %s4 = sld [smem:[#allocation0]]
  $region45: #{encoder_forward.19} parent=0
    _
  %s6 = ssub.s32 1, %s4
  %s7 = scalar_select 0, %s6, %s4
  loop: start=0, step=1, limit=4
  $region2: #{encoder_forward.19} parent=0 // loop_pre_header
    _
  $region3: #{encoder_forward.19} parent=0 // loop_header
    %s9 = sphi 0, %s13
    %p10 = scmp.ge.s32.totalorder %s9, 4
    %s16 = sphi 0, %s28
    %s17 = sphi 0, %s24
    %s18 = sphi 0, %s16
    %s19 = sphi 0, %s17
    %s20 = sphi 0, %s18
    %s21 = sphi 0, %s19
    %s33 = sphi 0, %s35
    %s36 = sphi 0, %s33
    %s37 = sphi 0, %s36
    %s53 = sphi 0, %s37
    %s59 = sphi 0, %s61
    %s62 = sphi 0, %s59
    %s63 = sphi 0, %s62
    %s79 = sphi 0, %s63
    %s85 = sphi 0, %s87
    %s88 = sphi 0, %s85
    %s89 = sphi 0, %s88
    %s105 = sphi 0, %s89
    %s113 = sphi 0, %s115
    %s116 = sphi 0, %s113
    %s117 = sphi 0, %s116
    %s133 = sphi 0, %s117
  $region4: #{encoder_forward.19} parent=0 // loop_header_branch
    %12 = sbr.rel (%p10) target = $region8
  $region5: #{encoder_forward.19} parent=0 // loop_body
    %s14 = ssub.s32 %s9, 1
    %s15 = ssub.s32 %s9, 2
    %s22 = sadd.s32 1, %s17
    %p23 = scmp.ge.s32.totalorder %s22, 1
    %s24 = scalar_select %p23, 0, %s22
    %s25 = sadd.s32 1, %s16
    %s26 = scalar_select %p23, %s25, %s16
    %p27 = scmp.ge.s32.totalorder %s26, 2
    %s28 = scalar_select %p27, 0, %s26
    %s29 = ssub.s32 %s16, %s28
    %s30 = ssub.s32 %s17, %s24
    %s31 = sor.u32 %s29, %s30
    %p32 = scmp.eq.s32.totalorder %s31, 0
    %s34 = sadd.s32 %s33, 1
    %s35 = scalar_select %p32, %s33, %s34
    %p38 = pneg %p32
    %p39 = scmp.eq.s32.totalorder %s9, 1
    %p40 = por %p38, %p39
    %p41 = scmp.ne.s32.totalorder %s33, %s36
    %p42 = scmp.eq.s32.totalorder %s9, 0
    %p43 = por %p41, %p42
    %p44 = scmp.ne.s32.totalorder %s33, %s36
    %p45 = scmp.eq.s32.totalorder %s14, 1
    %p46 = por %p44, %p45
    %p47 = scmp.ne.s32.totalorder %s36, %s37
    %p48 = scmp.eq.s32.totalorder %s14, 0
    %p49 = por %p47, %p48
    %p50 = scmp.ne.s32.totalorder %s36, %s37
    %p51 = scmp.eq.s32.totalorder %s15, 1
    %p52 = por %p50, %p51
    %p54 = scmp.ne.s32.totalorder %s37, %s53
    %p55 = scmp.eq.s32.totalorder %s15, 0
    %p56 = por %p54, %p55
    %s57 = ssub.s32 %s16, %s28
    %p58 = scmp.eq.s32.totalorder %s57, 0
    %s60 = sadd.s32 %s59, 1
    %s61 = scalar_select %p58, %s59, %s60
    %p64 = pneg %p58
    %p65 = scmp.eq.s32.totalorder %s9, 1
    %p66 = por %p64, %p65
    %p67 = scmp.ne.s32.totalorder %s59, %s62
    %p68 = scmp.eq.s32.totalorder %s9, 0
    %p69 = por %p67, %p68
    %p70 = scmp.ne.s32.totalorder %s59, %s62
    %p71 = scmp.eq.s32.totalorder %s14, 1
    %p72 = por %p70, %p71
    %p73 = scmp.ne.s32.totalorder %s62, %s63
    %p74 = scmp.eq.s32.totalorder %s14, 0
    %p75 = por %p73, %p74
    %p76 = scmp.ne.s32.totalorder %s62, %s63
    %p77 = scmp.eq.s32.totalorder %s15, 1
    %p78 = por %p76, %p77
    %p80 = scmp.ne.s32.totalorder %s63, %s79
    %p81 = scmp.eq.s32.totalorder %s15, 0
    %p82 = por %p80, %p81
    %s83 = ssub.s32 %s16, %s28
    %p84 = scmp.eq.s32.totalorder %s83, 0
    %s86 = sadd.s32 %s85, 1
    %s87 = scalar_select %p84, %s85, %s86
    %p90 = pneg %p84
    %p91 = scmp.eq.s32.totalorder %s9, 1
    %p92 = por %p90, %p91
    %p93 = scmp.ne.s32.totalorder %s85, %s88
    %p94 = scmp.eq.s32.totalorder %s9, 0
    %p95 = por %p93, %p94
    %p96 = scmp.ne.s32.totalorder %s85, %s88
    %p97 = scmp.eq.s32.totalorder %s14, 1
    %p98 = por %p96, %p97
    %p99 = scmp.ne.s32.totalorder %s88, %s89
    %p100 = scmp.eq.s32.totalorder %s14, 0
    %p101 = por %p99, %p100
    %p102 = scmp.ne.s32.totalorder %s88, %s89
    %p103 = scmp.eq.s32.totalorder %s15, 1
    %p104 = por %p102, %p103
    %p106 = scmp.ne.s32.totalorder %s89, %s105
    %p107 = scmp.eq.s32.totalorder %s15, 0
    %p108 = por %p106, %p107
    %s109 = ssub.s32 %s16, %s28
    %s110 = ssub.s32 %s17, %s24
    %s111 = sor.u32 %s109, %s110
    %p112 = scmp.eq.s32.totalorder %s111, 0
    %s114 = sadd.s32 %s113, 1
    %s115 = scalar_select %p112, %s113, %s114
    %p118 = pneg %p112
    %p119 = scmp.eq.s32.totalorder %s9, 1
    %p120 = por %p118, %p119
    %p121 = scmp.ne.s32.totalorder %s113, %s116
    %p122 = scmp.eq.s32.totalorder %s9, 0
    %p123 = por %p121, %p122
    %p124 = scmp.ne.s32.totalorder %s113, %s116
    %p125 = scmp.eq.s32.totalorder %s14, 1
    %p126 = por %p124, %p125
    %p127 = scmp.ne.s32.totalorder %s116, %s117
    %p128 = scmp.eq.s32.totalorder %s14, 0
    %p129 = por %p127, %p128
    %p130 = scmp.ne.s32.totalorder %s116, %s117
    %p131 = scmp.eq.s32.totalorder %s15, 1
    %p132 = por %p130, %p131
    %p134 = scmp.ne.s32.totalorder %s117, %s133
    %p135 = scmp.eq.s32.totalorder %s15, 0
    %p136 = por %p134, %p135
    %p137 = scmp.le.s32.totalorder 1, %s9
    %p138 = scmp.lt.s32.totalorder %s9, 3
    %p139 = pnand %p137, %p138
    %p140 = pneg %p139
    // Predicated region
    $region9: #{encoder_forward.19} parent=5 // pred_check
      _
    $region10: #{encoder_forward.19} parent=5 // pred_check_branch
      %142 = sbr.rel (%p139) target = $region12
    $region11: #{encoder_forward.19} parent=5 // pred_region
      %s143 = ssub.s32 %s9, 1
    $region12: #{encoder_forward.19} parent=5 // pred_fallthru
      _
    %p144 = scmp.lt.s32.totalorder %s9, 2
    // Predicated region
    $region13: #{encoder_forward.19} parent=5 // pred_check
      %p145 = pneg %p144
    $region14: #{encoder_forward.19} parent=5 // pred_check_branch
      %147 = sbr.rel (%p145) target = $region16
    $region15: #{encoder_forward.19} parent=5 // pred_region
      // Predicated region
      $region17: #{encoder_forward.19} parent=15 // pred_check
        %p148 = pneg %p43
      $region18: #{encoder_forward.19} parent=15 // pred_check_branch
        %150 = sbr.rel (%p148) target = $region20
      $region19: #{encoder_forward.19} parent=15 // pred_region
        %s151 = smul.u32 32, %s17
        %p152 = scmp.lt.s32.totalorder %s16, 1
        %s153 = scalar_select %p152, %s16, 1
        %p154 = scmp.lt.s32.totalorder %s151, 31
        %s155 = scalar_select %p154, %s151, 31
        %s156 = smul.addr %s153, 32
        %s157 = sadd.s32 %s155, %s156
        %s158 = smul.addr %s157, 4
        %s159 = scalar_lea.vmem %s0, %s158
        %s160 = smul.u32 32, %s17
      $region20: #{encoder_forward.19} parent=15 // pred_fallthru
        _
      // Predicated region
      $region21: #{encoder_forward.19} parent=15 // pred_check
        %p161 = pneg %p69
      $region22: #{encoder_forward.19} parent=15 // pred_check_branch
        %163 = sbr.rel (%p161) target = $region24
      $region23: #{encoder_forward.19} parent=15 // pred_region
        %p164 = scmp.lt.s32.totalorder %s16, 1
        %s165 = scalar_select %p164, %s16, 1
        %s166 = scalar_lea.vmem %s1, %s165
      $region24: #{encoder_forward.19} parent=15 // pred_fallthru
        _
      // Predicated region
      $region25: #{encoder_forward.19} parent=15 // pred_check
        %p167 = pneg %p95
      $region26: #{encoder_forward.19} parent=15 // pred_check_branch
        %169 = sbr.rel (%p167) target = $region28
      $region27: #{encoder_forward.19} parent=15 // pred_region
        %p170 = scmp.lt.s32.totalorder %s16, 1
        %s171 = scalar_select %p170, %s16, 1
        %s172 = scalar_lea.vmem %s2, %s171
      $region28: #{encoder_forward.19} parent=15 // pred_fallthru
        _
    $region16: #{encoder_forward.19} parent=5 // pred_fallthru
      _
    %p173 = scmp.le.s32.totalorder 1, %s9
    %p174 = scmp.lt.s32.totalorder %s9, 3
    %p175 = pnand %p173, %p174
    %p176 = pneg %p175
    // Predicated region
    $region29: #{encoder_forward.19} parent=5 // pred_check
      _
    $region30: #{encoder_forward.19} parent=5 // pred_check_branch
      %178 = sbr.rel (%p175) target = $region32
    $region31: #{encoder_forward.19} parent=5 // pred_region
      %s179 = ssub.s32 %s9, 1
      %s180 = smul.u32 32, %s19
      %p181 = scmp.lt.s32.totalorder %s18, 1
      %s182 = scalar_select %p181, %s18, 1
      %p183 = scmp.lt.s32.totalorder %s180, 31
      %s184 = scalar_select %p183, %s180, 31
      %s185 = smul.addr %s182, 32
      %s186 = sadd.s32 %s184, %s185
      %s187 = smul.addr %s186, 4
      %s188 = scalar_lea.vmem %s0, %s187
      %p189 = pneg %p49
      %p190 = pneg %p46
      %p191 = scmp.lt.s32.totalorder %s18, 1
      %s192 = scalar_select %p191, %s18, 1
      %s193 = scalar_lea.vmem %s1, %s192
      %p194 = pneg %p75
      %p195 = pneg %p72
      %p196 = scmp.lt.s32.totalorder %s18, 1
      %s197 = scalar_select %p196, %s18, 1
      %s198 = scalar_lea.vmem %s2, %s197
      %p199 = pneg %p101
      %p200 = pneg %p98
      %p201 = pneg %p129
      %p202 = pneg %p126
      %s203 = smul.u32 32, %s19
      %p204 = scmp.lt.s32.totalorder %s18, 1
      %s205 = scalar_select %p204, %s18, 1
      %p206 = scmp.lt.s32.totalorder %s203, 31
      %s207 = scalar_select %p206, %s203, 31
      %s208 = smul.addr %s205, 32
      %s209 = sadd.s32 %s207, %s208
      %s210 = smul.addr %s209, 4
      %s211 = scalar_lea.vmem %s3, %s210
      %s212 = smul.u32 32, %s19
      %p213 = scmp.lt.s32.totalorder %s18, 1
      %s214 = scalar_select %p213, %s18, 1
      %p215 = scmp.lt.s32.totalorder %s212, 31
      %s216 = scalar_select %p215, %s212, 31
      %s217 = smul.addr %s214, 32
      %s218 = sadd.s32 %s216, %s217
      %s219 = smul.addr %s218, 4
      %s220 = scalar_lea.vmem %s0, %s219
      %s221 = smul.u32 32, %s19
      %p222 = scmp.lt.s32.totalorder %s18, 1
      %s223 = scalar_select %p222, %s18, 1
      %s224 = scalar_lea.vmem %s1, %s223
      %p225 = scmp.lt.s32.totalorder %s18, 1
      %s226 = scalar_select %p225, %s18, 1
      %s227 = scalar_lea.vmem %s2, %s226
      %s228 = smul.u32 32, %s19
      %p229 = scmp.lt.s32.totalorder %s18, 1
      %s230 = scalar_select %p229, %s18, 1
      %p231 = scmp.lt.s32.totalorder %s228, 31
      %s232 = scalar_select %p231, %s228, 31
      %s233 = smul.addr %s230, 32
      %s234 = sadd.s32 %s232, %s233
      %s235 = smul.addr %s234, 4
      %s236 = scalar_lea.vmem %s3, %s235
      %s237 = smul.u32 32, %s19
      %v238 = vld [vmem:[%s220] sm:$0xf]
      %v239 = vld [vmem:[%s220 + $0x4] sm:$0xf]
      %v240 = vld [vmem:[%s220 + $0x8] sm:$0xf]
      %v241 = vld [vmem:[%s220 + $0xc] sm:$0xf]
      %v242 = vld [vmem:[%s220 + $0x10] sm:$0xf]
      %v243 = vld [vmem:[%s220 + $0x14] sm:$0xf]
      %v244 = vld [vmem:[%s220 + $0x18] sm:$0xf]
      %v245 = vld [vmem:[%s220 + $0x1c] sm:$0xf]
      %v246 = vld [vmem:[%s220 + $0x20] sm:$0xf]
      %v247 = vld [vmem:[%s220 + $0x24] sm:$0xf]
      %v248 = vld [vmem:[%s220 + $0x28] sm:$0xf]
      %v249 = vld [vmem:[%s220 + $0x2c] sm:$0xf]
      %v250 = vld [vmem:[%s220 + $0x30] sm:$0xf]
      %v251 = vld [vmem:[%s220 + $0x34] sm:$0xf]
      %v252 = vld [vmem:[%s220 + $0x38] sm:$0xf]
      %v253 = vld [vmem:[%s220 + $0x3c] sm:$0xf]
      %v254 = vld [vmem:[%s220 + $0x40] sm:$0xf]
      %v255 = vld [vmem:[%s220 + $0x44] sm:$0xf]
      %v256 = vld [vmem:[%s220 + $0x48] sm:$0xf]
      %v257 = vld [vmem:[%s220 + $0x4c] sm:$0xf]
      %v258 = vld [vmem:[%s220 + $0x50] sm:$0xf]
      %v259 = vld [vmem:[%s220 + $0x54] sm:$0xf]
      %v260 = vld [vmem:[%s220 + $0x58] sm:$0xf]
      %v261 = vld [vmem:[%s220 + $0x5c] sm:$0xf]
      %v262 = vld [vmem:[%s220 + $0x60] sm:$0xf]
      %v263 = vld [vmem:[%s220 + $0x64] sm:$0xf]
      %v264 = vld [vmem:[%s220 + $0x68] sm:$0xf]
      %v265 = vld [vmem:[%s220 + $0x6c] sm:$0xf]
      %v266 = vld [vmem:[%s220 + $0x70] sm:$0xf]
      %v267 = vld [vmem:[%s220 + $0x74] sm:$0xf]
      %v268 = vld [vmem:[%s220 + $0x78] sm:$0xf]
      %v269 = vld [vmem:[%s220 + $0x7c] sm:$0xf]
      %v270 = vunpack.c.l.bf16 %v238
      %v271 = vunpack.c.l.bf16 %v239
      %v272 = vunpack.c.l.bf16 %v240
      %v273 = vunpack.c.l.bf16 %v241
      %v274 = vunpack.c.l.bf16 %v242
      %v275 = vunpack.c.l.bf16 %v243
      %v276 = vunpack.c.l.bf16 %v244
      %v277 = vunpack.c.l.bf16 %v245
      %v278 = vunpack.c.l.bf16 %v246
      %v279 = vunpack.c.l.bf16 %v247
      %v280 = vunpack.c.l.bf16 %v248
      %v281 = vunpack.c.l.bf16 %v249
      %v282 = vunpack.c.l.bf16 %v250
      %v283 = vunpack.c.l.bf16 %v251
      %v284 = vunpack.c.l.bf16 %v252
      %v285 = vunpack.c.l.bf16 %v253
      %v286 = vunpack.c.l.bf16 %v254
      %v287 = vunpack.c.l.bf16 %v255
      %v288 = vunpack.c.l.bf16 %v256
      %v289 = vunpack.c.l.bf16 %v257
      %v290 = vunpack.c.l.bf16 %v258
      %v291 = vunpack.c.l.bf16 %v259
      %v292 = vunpack.c.l.bf16 %v260
      %v293 = vunpack.c.l.bf16 %v261
      %v294 = vunpack.c.l.bf16 %v262
      %v295 = vunpack.c.l.bf16 %v263
      %v296 = vunpack.c.l.bf16 %v264
      %v297 = vunpack.c.l.bf16 %v265
      %v298 = vunpack.c.l.bf16 %v266
      %v299 = vunpack.c.l.bf16 %v267
      %v300 = vunpack.c.l.bf16 %v268
      %v301 = vunpack.c.l.bf16 %v269
      %v302 = vld [vmem:[%s224] sm:$0x1]
      %v304 = vlaneseq
      %v305 = vshrl.u32 %v304, 7
      %v306 = vsub.s32 0, %v305
      %v307 = vrot.slane %v302, %v306
      %v309 = vmul.f32 %v270, %v307
      %v310 = vmul.f32 %v271, %v307
      %v311 = vmul.f32 %v272, %v307
      %v312 = vmul.f32 %v273, %v307
      %v313 = vmul.f32 %v274, %v307
      %v314 = vmul.f32 %v275, %v307
      %v315 = vmul.f32 %v276, %v307
      %v316 = vmul.f32 %v277, %v307
      %v317 = vmul.f32 %v278, %v307
      %v318 = vmul.f32 %v279, %v307
      %v319 = vmul.f32 %v280, %v307
      %v320 = vmul.f32 %v281, %v307
      %v321 = vmul.f32 %v282, %v307
      %v322 = vmul.f32 %v283, %v307
      %v323 = vmul.f32 %v284, %v307
      %v324 = vmul.f32 %v285, %v307
      %v325 = vmul.f32 %v286, %v307
      %v326 = vmul.f32 %v287, %v307
      %v327 = vmul.f32 %v288, %v307
      %v328 = vmul.f32 %v289, %v307
      %v329 = vmul.f32 %v290, %v307
      %v330 = vmul.f32 %v291, %v307
      %v331 = vmul.f32 %v292, %v307
      %v332 = vmul.f32 %v293, %v307
      %v333 = vmul.f32 %v294, %v307
      %v334 = vmul.f32 %v295, %v307
      %v335 = vmul.f32 %v296, %v307
      %v336 = vmul.f32 %v297, %v307
      %v337 = vmul.f32 %v298, %v307
      %v338 = vmul.f32 %v299, %v307
      %v339 = vmul.f32 %v300, %v307
      %v340 = vmul.f32 %v301, %v307
      %v341 = vld [vmem:[%s227] sm:$0x1]
      %v343 = vlaneseq
      %v344 = vshrl.u32 %v343, 7
      %v345 = vsub.s32 0, %v344
      %v346 = vrot.slane %v341, %v345
      %v348 = vadd.f32 %v309, %v346
      %v349 = vadd.f32 %v310, %v346
      %v350 = vadd.f32 %v311, %v346
      %v351 = vadd.f32 %v312, %v346
      %v352 = vadd.f32 %v313, %v346
      %v353 = vadd.f32 %v314, %v346
      %v354 = vadd.f32 %v315, %v346
      %v355 = vadd.f32 %v316, %v346
      %v356 = vadd.f32 %v317, %v346
      %v357 = vadd.f32 %v318, %v346
      %v358 = vadd.f32 %v319, %v346
      %v359 = vadd.f32 %v320, %v346
      %v360 = vadd.f32 %v321, %v346
      %v361 = vadd.f32 %v322, %v346
      %v362 = vadd.f32 %v323, %v346
      %v363 = vadd.f32 %v324, %v346
      %v364 = vadd.f32 %v325, %v346
      %v365 = vadd.f32 %v326, %v346
      %v366 = vadd.f32 %v327, %v346
      %v367 = vadd.f32 %v328, %v346
      %v368 = vadd.f32 %v329, %v346
      %v369 = vadd.f32 %v330, %v346
      %v370 = vadd.f32 %v331, %v346
      %v371 = vadd.f32 %v332, %v346
      %v372 = vadd.f32 %v333, %v346
      %v373 = vadd.f32 %v334, %v346
      %v374 = vadd.f32 %v335, %v346
      %v375 = vadd.f32 %v336, %v346
      %v376 = vadd.f32 %v337, %v346
      %v377 = vadd.f32 %v338, %v346
      %v378 = vadd.f32 %v339, %v346
      %v379 = vadd.f32 %v340, %v346
      %v380 = vmax.f32 %v348, 0.0
      %v381 = vmax.f32 %v349, 0.0
      %v382 = vmax.f32 %v350, 0.0
      %v383 = vmax.f32 %v351, 0.0
      %v384 = vmax.f32 %v352, 0.0
      %v385 = vmax.f32 %v353, 0.0
      %v386 = vmax.f32 %v354, 0.0
      %v387 = vmax.f32 %v355, 0.0
      %v388 = vmax.f32 %v356, 0.0
      %v389 = vmax.f32 %v357, 0.0
      %v390 = vmax.f32 %v358, 0.0
      %v391 = vmax.f32 %v359, 0.0
      %v392 = vmax.f32 %v360, 0.0
      %v393 = vmax.f32 %v361, 0.0
      %v394 = vmax.f32 %v362, 0.0
      %v395 = vmax.f32 %v363, 0.0
      %v396 = vmax.f32 %v364, 0.0
      %v397 = vmax.f32 %v365, 0.0
      %v398 = vmax.f32 %v366, 0.0
      %v399 = vmax.f32 %v367, 0.0
      %v400 = vmax.f32 %v368, 0.0
      %v401 = vmax.f32 %v369, 0.0
      %v402 = vmax.f32 %v370, 0.0
      %v403 = vmax.f32 %v371, 0.0
      %v404 = vmax.f32 %v372, 0.0
      %v405 = vmax.f32 %v373, 0.0
      %v406 = vmax.f32 %v374, 0.0
      %v407 = vmax.f32 %v375, 0.0
      %v408 = vmax.f32 %v376, 0.0
      %v409 = vmax.f32 %v377, 0.0
      %v410 = vmax.f32 %v378, 0.0
      %v411 = vmax.f32 %v379, 0.0
      %v412 = vpack.c.bf16 %v381, %v380
      %v413 = vpack.c.bf16 %v383, %v382
      %v414 = vpack.c.bf16 %v385, %v384
      %v415 = vpack.c.bf16 %v387, %v386
      %v416 = vpack.c.bf16 %v389, %v388
      %v417 = vpack.c.bf16 %v391, %v390
      %v418 = vpack.c.bf16 %v393, %v392
      %v419 = vpack.c.bf16 %v395, %v394
      %v420 = vpack.c.bf16 %v397, %v396
      %v421 = vpack.c.bf16 %v399, %v398
      %v422 = vpack.c.bf16 %v401, %v400
      %v423 = vpack.c.bf16 %v403, %v402
      %v424 = vpack.c.bf16 %v405, %v404
      %v425 = vpack.c.bf16 %v407, %v406
      %v426 = vpack.c.bf16 %v409, %v408
      %v427 = vpack.c.bf16 %v411, %v410
      %v444 = vunpack.c.l.b16 %v412
      %v445 = vunpack.c.h.b16 %v412
      %v446 = vunpack.c.l.b16 %v413
      %v447 = vunpack.c.h.b16 %v413
      %v448 = vunpack.c.l.b16 %v414
      %v449 = vunpack.c.h.b16 %v414
      %v450 = vunpack.c.l.b16 %v415
      %v451 = vunpack.c.h.b16 %v415
      %v452 = vunpack.c.l.b16 %v416
      %v453 = vunpack.c.h.b16 %v416
      %v454 = vunpack.c.l.b16 %v417
      %v455 = vunpack.c.h.b16 %v417
      %v456 = vunpack.c.l.b16 %v418
      %v457 = vunpack.c.h.b16 %v418
      %v458 = vunpack.c.l.b16 %v419
      %v459 = vunpack.c.h.b16 %v419
      %v460 = vunpack.c.l.b16 %v420
      %v461 = vunpack.c.h.b16 %v420
      %v462 = vunpack.c.l.b16 %v421
      %v463 = vunpack.c.h.b16 %v421
      %v464 = vunpack.c.l.b16 %v422
      %v465 = vunpack.c.h.b16 %v422
      %v466 = vunpack.c.l.b16 %v423
      %v467 = vunpack.c.h.b16 %v423
      %v468 = vunpack.c.l.b16 %v424
      %v469 = vunpack.c.h.b16 %v424
      %v470 = vunpack.c.l.b16 %v425
      %v471 = vunpack.c.h.b16 %v425
      %v472 = vunpack.c.l.b16 %v426
      %v473 = vunpack.c.h.b16 %v426
      %v474 = vunpack.c.l.b16 %v427
      %v475 = vunpack.c.h.b16 %v427
      %v476 = vpack.c.b16 %v444, %v444
      %v477 = vpack.c.b16 %v445, %v445
      %v478 = vpack.c.b16 %v446, %v446
      %v479 = vpack.c.b16 %v447, %v447
      %v480 = vpack.c.b16 %v448, %v448
      %v481 = vpack.c.b16 %v449, %v449
      %v482 = vpack.c.b16 %v450, %v450
      %v483 = vpack.c.b16 %v451, %v451
      %v484 = vpack.c.b16 %v452, %v452
      %v485 = vpack.c.b16 %v453, %v453
      %v486 = vpack.c.b16 %v454, %v454
      %v487 = vpack.c.b16 %v455, %v455
      %v488 = vpack.c.b16 %v456, %v456
      %v489 = vpack.c.b16 %v457, %v457
      %v490 = vpack.c.b16 %v458, %v458
      %v491 = vpack.c.b16 %v459, %v459
      %v492 = vpack.c.b16 %v460, %v460
      %v493 = vpack.c.b16 %v461, %v461
      %v494 = vpack.c.b16 %v462, %v462
      %v495 = vpack.c.b16 %v463, %v463
      %v496 = vpack.c.b16 %v464, %v464
      %v497 = vpack.c.b16 %v465, %v465
      %v498 = vpack.c.b16 %v466, %v466
      %v499 = vpack.c.b16 %v467, %v467
      %v500 = vpack.c.b16 %v468, %v468
      %v501 = vpack.c.b16 %v469, %v469
      %v502 = vpack.c.b16 %v470, %v470
      %v503 = vpack.c.b16 %v471, %v471
      %v504 = vpack.c.b16 %v472, %v472
      %v505 = vpack.c.b16 %v473, %v473
      %v506 = vpack.c.b16 %v474, %v474
      %v507 = vpack.c.b16 %v475, %v475
      %540 = vst [vmem:[%s236] sm:$0xf] %v476
      %541 = vst [vmem:[%s236 + $0x4] sm:$0xf] %v477
      %542 = vst [vmem:[%s236 + $0x8] sm:$0xf] %v478
      %543 = vst [vmem:[%s236 + $0xc] sm:$0xf] %v479
      %544 = vst [vmem:[%s236 + $0x10] sm:$0xf] %v480
      %545 = vst [vmem:[%s236 + $0x14] sm:$0xf] %v481
      %546 = vst [vmem:[%s236 + $0x18] sm:$0xf] %v482
      %547 = vst [vmem:[%s236 + $0x1c] sm:$0xf] %v483
      %548 = vst [vmem:[%s236 + $0x20] sm:$0xf] %v484
      %549 = vst [vmem:[%s236 + $0x24] sm:$0xf] %v485
      %550 = vst [vmem:[%s236 + $0x28] sm:$0xf] %v486
      %551 = vst [vmem:[%s236 + $0x2c] sm:$0xf] %v487
      %552 = vst [vmem:[%s236 + $0x30] sm:$0xf] %v488
      %553 = vst [vmem:[%s236 + $0x34] sm:$0xf] %v489
      %554 = vst [vmem:[%s236 + $0x38] sm:$0xf] %v490
      %555 = vst [vmem:[%s236 + $0x3c] sm:$0xf] %v491
      %556 = vst [vmem:[%s236 + $0x40] sm:$0xf] %v492
      %557 = vst [vmem:[%s236 + $0x44] sm:$0xf] %v493
      %558 = vst [vmem:[%s236 + $0x48] sm:$0xf] %v494
      %559 = vst [vmem:[%s236 + $0x4c] sm:$0xf] %v495
      %560 = vst [vmem:[%s236 + $0x50] sm:$0xf] %v496
      %561 = vst [vmem:[%s236 + $0x54] sm:$0xf] %v497
      %562 = vst [vmem:[%s236 + $0x58] sm:$0xf] %v498
      %563 = vst [vmem:[%s236 + $0x5c] sm:$0xf] %v499
      %564 = vst [vmem:[%s236 + $0x60] sm:$0xf] %v500
      %565 = vst [vmem:[%s236 + $0x64] sm:$0xf] %v501
      %566 = vst [vmem:[%s236 + $0x68] sm:$0xf] %v502
      %567 = vst [vmem:[%s236 + $0x6c] sm:$0xf] %v503
      %568 = vst [vmem:[%s236 + $0x70] sm:$0xf] %v504
      %569 = vst [vmem:[%s236 + $0x74] sm:$0xf] %v505
      %570 = vst [vmem:[%s236 + $0x78] sm:$0xf] %v506
      %571 = vst [vmem:[%s236 + $0x7c] sm:$0xf] %v507
      %s572 = smul.u32 32, %s19
      %p573 = scmp.lt.s32.totalorder %s18, 1
      %s574 = scalar_select %p573, %s18, 1
      %p575 = scmp.lt.s32.totalorder %s572, 31
      %s576 = scalar_select %p575, %s572, 31
      %s577 = smul.addr %s574, 32
      %s578 = sadd.s32 %s576, %s577
      %s579 = smul.addr %s578, 4
      %s580 = scalar_lea.vmem %s3, %s579
      // Predicated region
      $region33: #{encoder_forward.19} parent=31 // pred_check
        %p581 = pneg %p126
      $region34: #{encoder_forward.19} parent=31 // pred_check_branch
        %583 = sbr.rel (%p581) target = $region36
      $region35: #{encoder_forward.19} parent=31 // pred_region
        %s584 = smul.u32 32, %s19
      $region36: #{encoder_forward.19} parent=31 // pred_fallthru
        _
    $region32: #{encoder_forward.19} parent=5 // pred_fallthru
      _
    %p585 = scmp.le.s32.totalorder 2, %s9
    // Predicated region
    $region37: #{encoder_forward.19} parent=5 // pred_check
      %p586 = pneg %p585
    $region38: #{encoder_forward.19} parent=5 // pred_check_branch
      %588 = sbr.rel (%p586) target = $region40
    $region39: #{encoder_forward.19} parent=5 // pred_region
      %s589 = ssub.s32 %s9, 2
      // Predicated region
      $region41: #{encoder_forward.19} parent=39 // pred_check
        %p590 = pneg %p132
      $region42: #{encoder_forward.19} parent=39 // pred_check_branch
        %592 = sbr.rel (%p590) target = $region44
      $region43: #{encoder_forward.19} parent=39 // pred_region
        %s593 = smul.u32 32, %s21
        %p594 = scmp.lt.s32.totalorder %s20, 1
        %s595 = scalar_select %p594, %s20, 1
        %p596 = scmp.lt.s32.totalorder %s593, 31
        %s597 = scalar_select %p596, %s593, 31
        %s598 = smul.addr %s595, 32
        %s599 = sadd.s32 %s597, %s598
        %s600 = smul.addr %s599, 4
        %s601 = scalar_lea.vmem %s3, %s600
      $region44: #{encoder_forward.19} parent=39 // pred_fallthru
        _
    $region40: #{encoder_forward.19} parent=5 // pred_fallthru
      _
  $region6: #{encoder_forward.19} parent=0 // loop_footer
    %s13 = sadd.s32 1, %s9
  $region7: #{encoder_forward.19} parent=0 // loop_footer_branch
    %8 = sbr.rel target = $region3
  $region8: #{encoder_forward.19} parent=0 // loop_exit
    _

// kernel: encoder_forward.18
$region0: #{encoder_forward.18}
  #allocation0 [shape = 'u32[]', space=smem, size = 0x4, offset = 0x4, fixed_abs, tag = 'smem constant byte address 0x4 - core index']
  #allocation1 [shape = 'u32[144,128]{1,0:T(1,128)}', space=vmem, size = 0x12000, scoped, tag = 'internal scratch']
  #allocation2 [shape = 'f32[256,128]{1,0:T(8,128)}', space=vmem, size = 0x20000, scoped, tag = 'scratch operand']
  %s0 = inlined_call_operand.vmem [shape: bf16[2,256,256], index: 0, kind: input, shape index: {}]
  %s1 = inlined_call_operand.vmem [shape: bf16[256,128], index: 1, kind: input, shape index: {}]
  %s2 = inlined_call_operand.vmem [shape: bf16[2,256,128], index: 2, kind: output, shape index: {0}]
  %s3 = inlined_call_operand.vmem [shape: f32[2,1,8,128], index: 3, kind: output, shape index: {1}]
  %4 = xla_tuple %s2, %s3
  %s5 = sld [smem:[#allocation0]]
  $region57: #{encoder_forward.18} parent=0
    _
  %s7 = ssub.s32 1, %s5
  %s8 = scalar_select 0, %s7, %s5
  loop: start=0, step=1, limit=4
  $region2: #{encoder_forward.18} parent=0 // loop_pre_header
    _
  $region3: #{encoder_forward.18} parent=0 // loop_header
    %s10 = sphi 0, %s14
    %p11 = scmp.ge.s32.totalorder %s10, 4
    %s17 = sphi 0, %s36
    %s18 = sphi 0, %s32
    %s19 = sphi 0, %s28
    %s20 = sphi 0, %s17
    %s21 = sphi 0, %s18
    %s22 = sphi 0, %s19
    %s23 = sphi 0, %s20
    %s24 = sphi 0, %s21
    %s25 = sphi 0, %s22
    %s43 = sphi 0, %s45
    %s46 = sphi 0, %s43
    %s47 = sphi 0, %s46
    %s63 = sphi 0, %s47
    %s69 = sphi 0, %s71
    %s72 = sphi 0, %s69
    %s73 = sphi 0, %s72
    %s89 = sphi 0, %s73
    %s97 = sphi 0, %s99
    %s100 = sphi 0, %s97
    %s101 = sphi 0, %s100
    %s117 = sphi 0, %s101
    %s125 = sphi 0, %s127
    %s128 = sphi 0, %s125
    %s129 = sphi 0, %s128
    %s145 = sphi 0, %s129
  $region4: #{encoder_forward.18} parent=0 // loop_header_branch
    %13 = sbr.rel (%p11) target = $region8
  $region5: #{encoder_forward.18} parent=0 // loop_body
    %s15 = ssub.s32 %s10, 1
    %s16 = ssub.s32 %s10, 2
    %s26 = sadd.s32 1, %s19
    %p27 = scmp.ge.s32.totalorder %s26, 1
    %s28 = scalar_select %p27, 0, %s26
    %s29 = sadd.s32 1, %s18
    %s30 = scalar_select %p27, %s29, %s18
    %p31 = scmp.ge.s32.totalorder %s30, 1
    %s32 = scalar_select %p31, 0, %s30
    %s33 = sadd.s32 1, %s17
    %s34 = scalar_select %p31, %s33, %s17
    %p35 = scmp.ge.s32.totalorder %s34, 2
    %s36 = scalar_select %p35, 0, %s34
    %s37 = ssub.s32 %s17, %s36
    %s38 = ssub.s32 %s18, %s32
    %s39 = sor.u32 %s37, %s38
    %s40 = ssub.s32 %s19, %s28
    %s41 = sor.u32 %s39, %s40
    %p42 = scmp.eq.s32.totalorder %s41, 0
    %s44 = sadd.s32 %s43, 1
    %s45 = scalar_select %p42, %s43, %s44
    %p48 = pneg %p42
    %p49 = scmp.eq.s32.totalorder %s10, 1
    %p50 = por %p48, %p49
    %p51 = scmp.ne.s32.totalorder %s43, %s46
    %p52 = scmp.eq.s32.totalorder %s10, 0
    %p53 = por %p51, %p52
    %p54 = scmp.ne.s32.totalorder %s43, %s46
    %p55 = scmp.eq.s32.totalorder %s15, 1
    %p56 = por %p54, %p55
    %p57 = scmp.ne.s32.totalorder %s46, %s47
    %p58 = scmp.eq.s32.totalorder %s15, 0
    %p59 = por %p57, %p58
    %p60 = scmp.ne.s32.totalorder %s46, %s47
    %p61 = scmp.eq.s32.totalorder %s16, 1
    %p62 = por %p60, %p61
    %p64 = scmp.ne.s32.totalorder %s47, %s63
    %p65 = scmp.eq.s32.totalorder %s16, 0
    %p66 = por %p64, %p65
    %s67 = ssub.s32 %s19, %s28
    %p68 = scmp.eq.s32.totalorder %s67, 0
    %s70 = sadd.s32 %s69, 1
    %s71 = scalar_select %p68, %s69, %s70
    %p74 = pneg %p68
    %p75 = scmp.eq.s32.totalorder %s10, 1
    %p76 = por %p74, %p75
    %p77 = scmp.ne.s32.totalorder %s69, %s72
    %p78 = scmp.eq.s32.totalorder %s10, 0
    %p79 = por %p77, %p78
    %p80 = scmp.ne.s32.totalorder %s69, %s72
    %p81 = scmp.eq.s32.totalorder %s15, 1
    %p82 = por %p80, %p81
    %p83 = scmp.ne.s32.totalorder %s72, %s73
    %p84 = scmp.eq.s32.totalorder %s15, 0
    %p85 = por %p83, %p84
    %p86 = scmp.ne.s32.totalorder %s72, %s73
    %p87 = scmp.eq.s32.totalorder %s16, 1
    %p88 = por %p86, %p87
    %p90 = scmp.ne.s32.totalorder %s73, %s89
    %p91 = scmp.eq.s32.totalorder %s16, 0
    %p92 = por %p90, %p91
    %s93 = ssub.s32 %s17, %s36
    %s94 = ssub.s32 %s18, %s32
    %s95 = sor.u32 %s93, %s94
    %p96 = scmp.eq.s32.totalorder %s95, 0
    %s98 = sadd.s32 %s97, 1
    %s99 = scalar_select %p96, %s97, %s98
    %p102 = pneg %p96
    %p103 = scmp.eq.s32.totalorder %s10, 1
    %p104 = por %p102, %p103
    %p105 = scmp.ne.s32.totalorder %s97, %s100
    %p106 = scmp.eq.s32.totalorder %s10, 0
    %p107 = por %p105, %p106
    %p108 = scmp.ne.s32.totalorder %s97, %s100
    %p109 = scmp.eq.s32.totalorder %s15, 1
    %p110 = por %p108, %p109
    %p111 = scmp.ne.s32.totalorder %s100, %s101
    %p112 = scmp.eq.s32.totalorder %s15, 0
    %p113 = por %p111, %p112
    %p114 = scmp.ne.s32.totalorder %s100, %s101
    %p115 = scmp.eq.s32.totalorder %s16, 1
    %p116 = por %p114, %p115
    %p118 = scmp.ne.s32.totalorder %s101, %s117
    %p119 = scmp.eq.s32.totalorder %s16, 0
    %p120 = por %p118, %p119
    %s121 = ssub.s32 %s17, %s36
    %s122 = ssub.s32 %s18, %s32
    %s123 = sor.u32 %s121, %s122
    %p124 = scmp.eq.s32.totalorder %s123, 0
    %s126 = sadd.s32 %s125, 1
    %s127 = scalar_select %p124, %s125, %s126
    %p130 = pneg %p124
    %p131 = scmp.eq.s32.totalorder %s10, 1
    %p132 = por %p130, %p131
    %p133 = scmp.ne.s32.totalorder %s125, %s128
    %p134 = scmp.eq.s32.totalorder %s10, 0
    %p135 = por %p133, %p134
    %p136 = scmp.ne.s32.totalorder %s125, %s128
    %p137 = scmp.eq.s32.totalorder %s15, 1
    %p138 = por %p136, %p137
    %p139 = scmp.ne.s32.totalorder %s128, %s129
    %p140 = scmp.eq.s32.totalorder %s15, 0
    %p141 = por %p139, %p140
    %p142 = scmp.ne.s32.totalorder %s128, %s129
    %p143 = scmp.eq.s32.totalorder %s16, 1
    %p144 = por %p142, %p143
    %p146 = scmp.ne.s32.totalorder %s129, %s145
    %p147 = scmp.eq.s32.totalorder %s16, 0
    %p148 = por %p146, %p147
    %p149 = scmp.le.s32.totalorder 1, %s10
    %p150 = scmp.lt.s32.totalorder %s10, 3
    %p151 = pnand %p149, %p150
    %p152 = pneg %p151
    // Predicated region
    $region9: #{encoder_forward.18} parent=5 // pred_check
      _
    $region10: #{encoder_forward.18} parent=5 // pred_check_branch
      %154 = sbr.rel (%p151) target = $region12
    $region11: #{encoder_forward.18} parent=5 // pred_region
      %s155 = ssub.s32 %s10, 1
      // Predicated region
      $region13: #{encoder_forward.18} parent=11 // pred_check
        %p156 = pneg %p85
      $region14: #{encoder_forward.18} parent=11 // pred_check_branch
        %158 = sbr.rel (%p156) target = $region16
      $region15: #{encoder_forward.18} parent=11 // pred_region
        %s159 = smul.u32 32, %s22
        %p160 = scmp.lt.s32.totalorder %s159, 31
        %s161 = scalar_select %p160, %s159, 31
        %s162 = smul.addr %s161, 4
        %s163 = scalar_lea.vmem %s1, %s162
        %s164 = smul.u32 32, %s22
      $region16: #{encoder_forward.18} parent=11 // pred_fallthru
        _
    $region12: #{encoder_forward.18} parent=5 // pred_fallthru
      _
    %p165 = scmp.lt.s32.totalorder %s10, 2
    // Predicated region
    $region17: #{encoder_forward.18} parent=5 // pred_check
      %p166 = pneg %p165
    $region18: #{encoder_forward.18} parent=5 // pred_check_branch
      %168 = sbr.rel (%p166) target = $region20
    $region19: #{encoder_forward.18} parent=5 // pred_region
      // Predicated region
      $region21: #{encoder_forward.18} parent=19 // pred_check
        %p169 = pneg %p53
      $region22: #{encoder_forward.18} parent=19 // pred_check_branch
        %171 = sbr.rel (%p169) target = $region24
      $region23: #{encoder_forward.18} parent=19 // pred_region
        %s172 = smul.u32 32, %s18
        %s173 = smul.u32 2, %s19
        %p174 = scmp.lt.s32.totalorder %s17, 1
        %s175 = scalar_select %p174, %s17, 1
        %p176 = scmp.lt.s32.totalorder %s172, 31
        %s177 = scalar_select %p176, %s172, 31
        %p178 = scmp.lt.s32.totalorder %s173, 1
        %s179 = scalar_select %p178, %s173, 1
        %s180 = smul.addr %s177, 2
        %s181 = sadd.s32 %s179, %s180
        %s182 = smul.addr %s175, 64
        %s183 = sadd.s32 %s181, %s182
        %s184 = smul.addr %s183, 4
        %s185 = scalar_lea.vmem %s0, %s184
        %s186 = smul.u32 32, %s18
        %s187 = smul.u32 2, %s19
      $region24: #{encoder_forward.18} parent=19 // pred_fallthru
        _
    $region20: #{encoder_forward.18} parent=5 // pred_fallthru
      _
    %p188 = scmp.le.s32.totalorder 1, %s10
    %p189 = scmp.lt.s32.totalorder %s10, 3
    %p190 = pnand %p188, %p189
    %p191 = pneg %p190
    // Predicated region
    $region25: #{encoder_forward.18} parent=5 // pred_check
      _
    $region26: #{encoder_forward.18} parent=5 // pred_check_branch
      %193 = sbr.rel (%p190) target = $region28
    $region27: #{encoder_forward.18} parent=5 // pred_region
      %s194 = ssub.s32 %s10, 1
      %s195 = smul.u32 32, %s21
      %s196 = smul.u32 2, %s22
      %p197 = scmp.lt.s32.totalorder %s20, 1
      %s198 = scalar_select %p197, %s20, 1
      %p199 = scmp.lt.s32.totalorder %s195, 31
      %s200 = scalar_select %p199, %s195, 31
      %p201 = scmp.lt.s32.totalorder %s196, 1
      %s202 = scalar_select %p201, %s196, 1
      %s203 = smul.addr %s200, 2
      %s204 = sadd.s32 %s202, %s203
      %s205 = smul.addr %s198, 64
      %s206 = sadd.s32 %s204, %s205
      %s207 = smul.addr %s206, 4
      %s208 = scalar_lea.vmem %s0, %s207
      %p209 = pneg %p59
      %p210 = pneg %p56
      %s211 = smul.u32 32, %s22
      %p212 = scmp.lt.s32.totalorder %s211, 31
      %s213 = scalar_select %p212, %s211, 31
      %s214 = smul.addr %s213, 4
      %s215 = scalar_lea.vmem %s1, %s214
      %p216 = pneg %p85
      %p217 = pneg %p82
      %p218 = pneg %p113
      %p219 = pneg %p110
      %s220 = smul.u32 32, %s21
      %p221 = scmp.lt.s32.totalorder %s20, 1
      %s222 = scalar_select %p221, %s20, 1
      %p223 = scmp.lt.s32.totalorder %s220, 31
      %s224 = scalar_select %p223, %s220, 31
      %s225 = smul.addr %s222, 32
      %s226 = sadd.s32 %s224, %s225
      %s227 = smul.addr %s226, 4
      %s228 = scalar_lea.vmem %s2, %s227
      %p229 = pneg %p141
      %p230 = pneg %p138
      %p231 = scmp.lt.s32.totalorder %s20, 1
      %s232 = scalar_select %p231, %s20, 1
      %p233 = scmp.lt.s32.totalorder %s21, 0
      %s234 = scalar_select %p233, %s21, 0
      %s235 = sadd.s32 %s234, %s232
      %s236 = smul.addr %s235, 8
      %s237 = scalar_lea.vmem %s3, %s236
      %s238 = smul.u32 32, %s21
      %s239 = smul.u32 2, %s22
      %p240 = scmp.lt.s32.totalorder %s20, 1
      %s241 = scalar_select %p240, %s20, 1
      %p242 = scmp.lt.s32.totalorder %s238, 31
      %s243 = scalar_select %p242, %s238, 31
      %p244 = scmp.lt.s32.totalorder %s239, 1
      %s245 = scalar_select %p244, %s239, 1
      %s246 = smul.addr %s243, 2
      %s247 = sadd.s32 %s245, %s246
      %s248 = smul.addr %s241, 64
      %s249 = sadd.s32 %s247, %s248
      %s250 = smul.addr %s249, 4
      %s251 = scalar_lea.vmem %s0, %s250
      %s252 = smul.u32 32, %s21
      %s253 = smul.u32 2, %s22
      %s254 = smul.u32 32, %s22
      %p255 = scmp.lt.s32.totalorder %s254, 31
      %s256 = scalar_select %p255, %s254, 31
      %s257 = smul.addr %s256, 4
      %s258 = scalar_lea.vmem %s1, %s257
      %s259 = smul.u32 32, %s22
      %s260 = smul.u32 32, %s21
      %p261 = scmp.lt.s32.totalorder %s20, 1
      %s262 = scalar_select %p261, %s20, 1
      %p263 = scmp.lt.s32.totalorder %s260, 31
      %s264 = scalar_select %p263, %s260, 31
      %s265 = smul.addr %s262, 32
      %s266 = sadd.s32 %s264, %s265
      %s267 = smul.addr %s266, 4
      %s268 = scalar_lea.vmem %s2, %s267
      %s269 = smul.u32 32, %s21
      %p270 = scmp.lt.s32.totalorder %s20, 1
      %s271 = scalar_select %p270, %s20, 1
      %p272 = scmp.lt.s32.totalorder %s21, 0
      %s273 = scalar_select %p272, %s21, 0
      %s274 = sadd.s32 %s273, %s271
      %s275 = smul.addr %s274, 8
      %s276 = scalar_lea.vmem %s3, %s275
      %p278 = scmp.eq.s32.totalorder %s22, 0
      // Predicated region
      $region29: #{encoder_forward.18} parent=27 // pred_check
        %p279 = pneg %p278
      $region30: #{encoder_forward.18} parent=27 // pred_check_branch
        %281 = sbr.rel (%p279) target = $region32
      $region31: #{encoder_forward.18} parent=27 // pred_region
        %282 = vst [vmem:[#allocation2] sm:$0xff] 0.0
        %283 = vst [vmem:[#allocation2 + $0x8] sm:$0xff] 0.0
        %284 = vst [vmem:[#allocation2 + $0x10] sm:$0xff] 0.0
        %285 = vst [vmem:[#allocation2 + $0x18] sm:$0xff] 0.0
        %286 = vst [vmem:[#allocation2 + $0x20] sm:$0xff] 0.0
        %287 = vst [vmem:[#allocation2 + $0x28] sm:$0xff] 0.0
        %288 = vst [vmem:[#allocation2 + $0x30] sm:$0xff] 0.0
        %289 = vst [vmem:[#allocation2 + $0x38] sm:$0xff] 0.0
        %290 = vst [vmem:[#allocation2 + $0x40] sm:$0xff] 0.0
        %291 = vst [vmem:[#allocation2 + $0x48] sm:$0xff] 0.0
        %292 = vst [vmem:[#allocation2 + $0x50] sm:$0xff] 0.0
        %293 = vst [vmem:[#allocation2 + $0x58] sm:$0xff] 0.0
        %294 = vst [vmem:[#allocation2 + $0x60] sm:$0xff] 0.0
        %295 = vst [vmem:[#allocation2 + $0x68] sm:$0xff] 0.0
        %296 = vst [vmem:[#allocation2 + $0x70] sm:$0xff] 0.0
        %297 = vst [vmem:[#allocation2 + $0x78] sm:$0xff] 0.0
        %298 = vst [vmem:[#allocation2 + $0x80] sm:$0xff] 0.0
        %299 = vst [vmem:[#allocation2 + $0x88] sm:$0xff] 0.0
        %300 = vst [vmem:[#allocation2 + $0x90] sm:$0xff] 0.0
        %301 = vst [vmem:[#allocation2 + $0x98] sm:$0xff] 0.0
        %302 = vst [vmem:[#allocation2 + $0xa0] sm:$0xff] 0.0
        %303 = vst [vmem:[#allocation2 + $0xa8] sm:$0xff] 0.0
        %304 = vst [vmem:[#allocation2 + $0xb0] sm:$0xff] 0.0
        %305 = vst [vmem:[#allocation2 + $0xb8] sm:$0xff] 0.0
        %306 = vst [vmem:[#allocation2 + $0xc0] sm:$0xff] 0.0
        %307 = vst [vmem:[#allocation2 + $0xc8] sm:$0xff] 0.0
        %308 = vst [vmem:[#allocation2 + $0xd0] sm:$0xff] 0.0
        %309 = vst [vmem:[#allocation2 + $0xd8] sm:$0xff] 0.0
        %310 = vst [vmem:[#allocation2 + $0xe0] sm:$0xff] 0.0
        %311 = vst [vmem:[#allocation2 + $0xe8] sm:$0xff] 0.0
        %312 = vst [vmem:[#allocation2 + $0xf0] sm:$0xff] 0.0
        %313 = vst [vmem:[#allocation2 + $0xf8] sm:$0xff] 0.0
      $region32: #{encoder_forward.18} parent=27 // pred_fallthru
        _
      %v314 = vld [vmem:[#allocation2] sm:$0xff]
      %v315 = vld [vmem:[#allocation2 + $0x8] sm:$0xff]
      %v316 = vld [vmem:[#allocation2 + $0x10] sm:$0xff]
      %v317 = vld [vmem:[#allocation2 + $0x18] sm:$0xff]
      %v318 = vld [vmem:[#allocation2 + $0x20] sm:$0xff]
      %v319 = vld [vmem:[#allocation2 + $0x28] sm:$0xff]
      %v320 = vld [vmem:[#allocation2 + $0x30] sm:$0xff]
      %v321 = vld [vmem:[#allocation2 + $0x38] sm:$0xff]
      %v322 = vld [vmem:[#allocation2 + $0x40] sm:$0xff]
      %v323 = vld [vmem:[#allocation2 + $0x48] sm:$0xff]
      %v324 = vld [vmem:[#allocation2 + $0x50] sm:$0xff]
      %v325 = vld [vmem:[#allocation2 + $0x58] sm:$0xff]
      %v326 = vld [vmem:[#allocation2 + $0x60] sm:$0xff]
      %v327 = vld [vmem:[#allocation2 + $0x68] sm:$0xff]
      %v328 = vld [vmem:[#allocation2 + $0x70] sm:$0xff]
      %v329 = vld [vmem:[#allocation2 + $0x78] sm:$0xff]
      %v330 = vld [vmem:[#allocation2 + $0x80] sm:$0xff]
      %v331 = vld [vmem:[#allocation2 + $0x88] sm:$0xff]
      %v332 = vld [vmem:[#allocation2 + $0x90] sm:$0xff]
      %v333 = vld [vmem:[#allocation2 + $0x98] sm:$0xff]
      %v334 = vld [vmem:[#allocation2 + $0xa0] sm:$0xff]
      %v335 = vld [vmem:[#allocation2 + $0xa8] sm:$0xff]
      %v336 = vld [vmem:[#allocation2 + $0xb0] sm:$0xff]
      %v337 = vld [vmem:[#allocation2 + $0xb8] sm:$0xff]
      %v338 = vld [vmem:[#allocation2 + $0xc0] sm:$0xff]
      %v339 = vld [vmem:[#allocation2 + $0xc8] sm:$0xff]
      %v340 = vld [vmem:[#allocation2 + $0xd0] sm:$0xff]
      %v341 = vld [vmem:[#allocation2 + $0xd8] sm:$0xff]
      %v342 = vld [vmem:[#allocation2 + $0xe0] sm:$0xff]
      %v343 = vld [vmem:[#allocation2 + $0xe8] sm:$0xff]
      %v344 = vld [vmem:[#allocation2 + $0xf0] sm:$0xff]
      %v345 = vld [vmem:[#allocation2 + $0xf8] sm:$0xff]
      %v346 = vld [vmem:[%s251] sm:$0xff]
      %v347 = vld [vmem:[%s251 + $0x8] sm:$0xff]
      %v348 = vld [vmem:[%s251 + $0x10] sm:$0xff]
      %v349 = vld [vmem:[%s251 + $0x18] sm:$0xff]
      %v350 = vld [vmem:[%s251 + $0x20] sm:$0xff]
      %v351 = vld [vmem:[%s251 + $0x28] sm:$0xff]
      %v352 = vld [vmem:[%s251 + $0x30] sm:$0xff]
      %v353 = vld [vmem:[%s251 + $0x38] sm:$0xff]
      %v354 = vld [vmem:[%s251 + $0x40] sm:$0xff]
      %v355 = vld [vmem:[%s251 + $0x48] sm:$0xff]
      %v356 = vld [vmem:[%s251 + $0x50] sm:$0xff]
      %v357 = vld [vmem:[%s251 + $0x58] sm:$0xff]
      %v358 = vld [vmem:[%s251 + $0x60] sm:$0xff]
      %v359 = vld [vmem:[%s251 + $0x68] sm:$0xff]
      %v360 = vld [vmem:[%s251 + $0x70] sm:$0xff]
      %v361 = vld [vmem:[%s251 + $0x78] sm:$0xff]
      %v362 = vld [vmem:[%s251 + $0x80] sm:$0xff]
      %v363 = vld [vmem:[%s251 + $0x88] sm:$0xff]
      %v364 = vld [vmem:[%s251 + $0x90] sm:$0xff]
      %v365 = vld [vmem:[%s251 + $0x98] sm:$0xff]
      %v366 = vld [vmem:[%s251 + $0xa0] sm:$0xff]
      %v367 = vld [vmem:[%s251 + $0xa8] sm:$0xff]
      %v368 = vld [vmem:[%s251 + $0xb0] sm:$0xff]
      %v369 = vld [vmem:[%s251 + $0xb8] sm:$0xff]
      %v370 = vld [vmem:[%s251 + $0xc0] sm:$0xff]
      %v371 = vld [vmem:[%s251 + $0xc8] sm:$0xff]
      %v372 = vld [vmem:[%s251 + $0xd0] sm:$0xff]
      %v373 = vld [vmem:[%s251 + $0xd8] sm:$0xff]
      %v374 = vld [vmem:[%s251 + $0xe0] sm:$0xff]
      %v375 = vld [vmem:[%s251 + $0xe8] sm:$0xff]
      %v376 = vld [vmem:[%s251 + $0xf0] sm:$0xff]
      %v377 = vld [vmem:[%s251 + $0xf8] sm:$0xff]
      %v378 = vld [vmem:[%s258] sm:$0xf]
      %v379 = vld [vmem:[%s258 + $0x4] sm:$0xf]
      %v380 = vld [vmem:[%s258 + $0x8] sm:$0xf]
      %v381 = vld [vmem:[%s258 + $0xc] sm:$0xf]
      %v382 = vld [vmem:[%s258 + $0x10] sm:$0xf]
      %v383 = vld [vmem:[%s258 + $0x14] sm:$0xf]
      %v384 = vld [vmem:[%s258 + $0x18] sm:$0xf]
      %v385 = vld [vmem:[%s258 + $0x1c] sm:$0xf]
      %v386 = vld [vmem:[%s258 + $0x20] sm:$0xf]
      %v387 = vld [vmem:[%s258 + $0x24] sm:$0xf]
      %v388 = vld [vmem:[%s258 + $0x28] sm:$0xf]
      %v389 = vld [vmem:[%s258 + $0x2c] sm:$0xf]
      %v390 = vld [vmem:[%s258 + $0x30] sm:$0xf]
      %v391 = vld [vmem:[%s258 + $0x34] sm:$0xf]
      %v392 = vld [vmem:[%s258 + $0x38] sm:$0xf]
      %v393 = vld [vmem:[%s258 + $0x3c] sm:$0xf]
      %v394 = vld [vmem:[%s258 + $0x40] sm:$0xf]
      %v395 = vld [vmem:[%s258 + $0x44] sm:$0xf]
      %v396 = vld [vmem:[%s258 + $0x48] sm:$0xf]
      %v397 = vld [vmem:[%s258 + $0x4c] sm:$0xf]
      %v398 = vld [vmem:[%s258 + $0x50] sm:$0xf]
      %v399 = vld [vmem:[%s258 + $0x54] sm:$0xf]
      %v400 = vld [vmem:[%s258 + $0x58] sm:$0xf]
      %v401 = vld [vmem:[%s258 + $0x5c] sm:$0xf]
      %v402 = vld [vmem:[%s258 + $0x60] sm:$0xf]
      %v403 = vld [vmem:[%s258 + $0x64] sm:$0xf]
      %v404 = vld [vmem:[%s258 + $0x68] sm:$0xf]
      %v405 = vld [vmem:[%s258 + $0x6c] sm:$0xf]
      %v406 = vld [vmem:[%s258 + $0x70] sm:$0xf]
      %v407 = vld [vmem:[%s258 + $0x74] sm:$0xf]
      %v408 = vld [vmem:[%s258 + $0x78] sm:$0xf]
      %v409 = vld [vmem:[%s258 + $0x7c] sm:$0xf]
      %v442 = vunpack.c.l.b16 %v346
      %v443 = vunpack.c.h.b16 %v346
      %v444 = vunpack.c.l.b16 %v347
      %v445 = vunpack.c.h.b16 %v347
      %v446 = vunpack.c.l.b16 %v348
      %v447 = vunpack.c.h.b16 %v348
      %v448 = vunpack.c.l.b16 %v349
      %v449 = vunpack.c.h.b16 %v349
      %v450 = vunpack.c.l.b16 %v350
      %v451 = vunpack.c.h.b16 %v350
      %v452 = vunpack.c.l.b16 %v351
      %v453 = vunpack.c.h.b16 %v351
      %v454 = vunpack.c.l.b16 %v352
      %v455 = vunpack.c.h.b16 %v352
      %v456 = vunpack.c.l.b16 %v353
      %v457 = vunpack.c.h.b16 %v353
      %v458 = vunpack.c.l.b16 %v354
      %v459 = vunpack.c.h.b16 %v354
      %v460 = vunpack.c.l.b16 %v355
      %v461 = vunpack.c.h.b16 %v355
      %v462 = vunpack.c.l.b16 %v356
      %v463 = vunpack.c.h.b16 %v356
      %v464 = vunpack.c.l.b16 %v357
      %v465 = vunpack.c.h.b16 %v357
      %v466 = vunpack.c.l.b16 %v358
      %v467 = vunpack.c.h.b16 %v358
      %v468 = vunpack.c.l.b16 %v359
      %v469 = vunpack.c.h.b16 %v359
      %v470 = vunpack.c.l.b16 %v360
      %v471 = vunpack.c.h.b16 %v360
      %v472 = vunpack.c.l.b16 %v361
      %v473 = vunpack.c.h.b16 %v361
      %v474 = vunpack.c.l.b16 %v362
      %v475 = vunpack.c.h.b16 %v362
      %v476 = vunpack.c.l.b16 %v363
      %v477 = vunpack.c.h.b16 %v363
      %v478 = vunpack.c.l.b16 %v364
      %v479 = vunpack.c.h.b16 %v364
      %v480 = vunpack.c.l.b16 %v365
      %v481 = vunpack.c.h.b16 %v365
      %v482 = vunpack.c.l.b16 %v366
      %v483 = vunpack.c.h.b16 %v366
      %v484 = vunpack.c.l.b16 %v367
      %v485 = vunpack.c.h.b16 %v367
      %v486 = vunpack.c.l.b16 %v368
      %v487 = vunpack.c.h.b16 %v368
      %v488 = vunpack.c.l.b16 %v369
      %v489 = vunpack.c.h.b16 %v369
      %v490 = vunpack.c.l.b16 %v370
      %v491 = vunpack.c.h.b16 %v370
      %v492 = vunpack.c.l.b16 %v371
      %v493 = vunpack.c.h.b16 %v371
      %v494 = vunpack.c.l.b16 %v372
      %v495 = vunpack.c.h.b16 %v372
      %v496 = vunpack.c.l.b16 %v373
      %v497 = vunpack.c.h.b16 %v373
      %v498 = vunpack.c.l.b16 %v374
      %v499 = vunpack.c.h.b16 %v374
      %v500 = vunpack.c.l.b16 %v375
      %v501 = vunpack.c.h.b16 %v375
      %v502 = vunpack.c.l.b16 %v376
      %v503 = vunpack.c.h.b16 %v376
      %v504 = vunpack.c.l.b16 %v377
      %v505 = vunpack.c.h.b16 %v377
      %v506 = vpack.c.b16 %v444, %v442
      %v507 = vpack.c.b16 %v445, %v443
      %v508 = vpack.c.b16 %v448, %v446
      %v509 = vpack.c.b16 %v449, %v447
      %v510 = vpack.c.b16 %v452, %v450
      %v511 = vpack.c.b16 %v453, %v451
      %v512 = vpack.c.b16 %v456, %v454
      %v513 = vpack.c.b16 %v457, %v455
      %v514 = vpack.c.b16 %v460, %v458
      %v515 = vpack.c.b16 %v461, %v459
      %v516 = vpack.c.b16 %v464, %v462
      %v517 = vpack.c.b16 %v465, %v463
      %v518 = vpack.c.b16 %v468, %v466
      %v519 = vpack.c.b16 %v469, %v467
      %v520 = vpack.c.b16 %v472, %v470
      %v521 = vpack.c.b16 %v473, %v471
      %v522 = vpack.c.b16 %v476, %v474
      %v523 = vpack.c.b16 %v477, %v475
      %v524 = vpack.c.b16 %v480, %v478
      %v525 = vpack.c.b16 %v481, %v479
      %v526 = vpack.c.b16 %v484, %v482
      %v527 = vpack.c.b16 %v485, %v483
      %v528 = vpack.c.b16 %v488, %v486
      %v529 = vpack.c.b16 %v489, %v487
      %v530 = vpack.c.b16 %v492, %v490
      %v531 = vpack.c.b16 %v493, %v491
      %v532 = vpack.c.b16 %v496, %v494
      %v533 = vpack.c.b16 %v497, %v495
      %v534 = vpack.c.b16 %v500, %v498
      %v535 = vpack.c.b16 %v501, %v499
      %v536 = vpack.c.b16 %v504, %v502
      %v537 = vpack.c.b16 %v505, %v503
      %v602 = vunpack.c.l.b16 %v378
      %v603 = vunpack.c.l.b16 %v379
      %v604 = vunpack.c.l.b16 %v380
      %v605 = vunpack.c.l.b16 %v381
      %v606 = vunpack.c.l.b16 %v382
      %v607 = vunpack.c.l.b16 %v383
      %v608 = vunpack.c.l.b16 %v384
      %v609 = vunpack.c.l.b16 %v385
      %v610 = vunpack.c.l.b16 %v386
      %v611 = vunpack.c.l.b16 %v387
      %v612 = vunpack.c.l.b16 %v388
      %v613 = vunpack.c.l.b16 %v389
      %v614 = vunpack.c.l.b16 %v390
      %v615 = vunpack.c.l.b16 %v391
      %v616 = vunpack.c.l.b16 %v392
      %v617 = vunpack.c.l.b16 %v393
      %v618 = vunpack.c.l.b16 %v394
      %v619 = vunpack.c.l.b16 %v395
      %v620 = vunpack.c.l.b16 %v396
      %v621 = vunpack.c.l.b16 %v397
      %v622 = vunpack.c.l.b16 %v398
      %v623 = vunpack.c.l.b16 %v399
      %v624 = vunpack.c.l.b16 %v400
      %v625 = vunpack.c.l.b16 %v401
      %v626 = vunpack.c.l.b16 %v402
      %v627 = vunpack.c.l.b16 %v403
      %v628 = vunpack.c.l.b16 %v404
      %v629 = vunpack.c.l.b16 %v405
      %v630 = vunpack.c.l.b16 %v406
      %v631 = vunpack.c.l.b16 %v407
      %v632 = vunpack.c.l.b16 %v408
      %v633 = vunpack.c.l.b16 %v409
      %v634 = vpack.c.b16 %v603, %v602
      %v635 = vpack.c.b16 %v605, %v604
      %v636 = vpack.c.b16 %v607, %v606
      %v637 = vpack.c.b16 %v609, %v608
      %v638 = vpack.c.b16 %v611, %v610
      %v639 = vpack.c.b16 %v613, %v612
      %v640 = vpack.c.b16 %v615, %v614
      %v641 = vpack.c.b16 %v617, %v616
      %v642 = vpack.c.b16 %v619, %v618
      %v643 = vpack.c.b16 %v621, %v620
      %v644 = vpack.c.b16 %v623, %v622
      %v645 = vpack.c.b16 %v625, %v624
      %v646 = vpack.c.b16 %v627, %v626
      %v647 = vpack.c.b16 %v629, %v628
      %v648 = vpack.c.b16 %v631, %v630
      %v649 = vpack.c.b16 %v633, %v632
      %666 = vmatprep.subr.bf16.mxu0 0
      %667 = vmatpush1.bf16.msra.mxu0 %v634
      %668 = vmatprep.subr.bf16.mxu0 0
      %669 = vmatpush1.bf16.msra.mxu0 %v635
      %670 = vmatprep.subr.bf16.mxu0 0
      %671 = vmatpush1.bf16.msra.mxu0 %v636
      %672 = vmatprep.subr.bf16.mxu0 0
      %673 = vmatpush1.bf16.msra.mxu0 %v637
      %674 = vmatprep.subr.bf16.mxu0 0
      %675 = vmatpush1.bf16.msra.mxu0 %v638
      %676 = vmatprep.subr.bf16.mxu0 0
      %677 = vmatpush1.bf16.msra.mxu0 %v639
      %678 = vmatprep.subr.bf16.mxu0 0
      %679 = vmatpush1.bf16.msra.mxu0 %v640
      %680 = vmatprep.subr.bf16.mxu0 0
      %681 = vmatpush1.bf16.msra.mxu0 %v641
      %682 = vmatprep.subr.bf16.mxu0 0
      %683 = vmatpush1.bf16.msra.mxu0 %v642
      %684 = vmatprep.subr.bf16.mxu0 0
      %685 = vmatpush1.bf16.msra.mxu0 %v643
      %686 = vmatprep.subr.bf16.mxu0 0
      %687 = vmatpush1.bf16.msra.mxu0 %v644
      %688 = vmatprep.subr.bf16.mxu0 0
      %689 = vmatpush1.bf16.msra.mxu0 %v645
      %690 = vmatprep.subr.bf16.mxu0 0
      %691 = vmatpush1.bf16.msra.mxu0 %v646
      %692 = vmatprep.subr.bf16.mxu0 0
      %693 = vmatpush1.bf16.msra.mxu0 %v647
      %694 = vmatprep.subr.bf16.mxu0 0
      %695 = vmatpush1.bf16.msra.mxu0 %v648
      %696 = vmatprep.subr.bf16.mxu0 0
      %697 = vmatpush1.bf16.msra.mxu0 %v649
      %698 = vmatprep.mubr.bf16.mxu0 %v507
      %699 = vmatmul.mubr.bf16.gmra.mrb[0].mxu0 %v506
      %v700 = vpop.f32.mrb[0].mxu0
      %v701 = vadd.f32 0.0, %v700
      %v702 = vpop.f32.mrb[0].mxu0
      %v703 = vpop.f32.mrb[0].mxu0
      %v704 = vadd.f32 0.0, %v703
      %v705 = vpop.f32.mrb[0].mxu0
      %706 = vmatprep.mubr.bf16.mxu0 %v509
      %707 = vmatmul.mubr.bf16.gmra.mrb[0].mxu0 %v508
      %v708 = vpop.f32.mrb[0].mxu0
      %v709 = vadd.f32 0.0, %v708
      %v710 = vpop.f32.mrb[0].mxu0
      %v711 = vpop.f32.mrb[0].mxu0
      %v712 = vadd.f32 0.0, %v711
      %v713 = vpop.f32.mrb[0].mxu0
      %714 = vmatprep.mubr.bf16.mxu0 %v511
      %715 = vmatmul.mubr.bf16.gmra.mrb[0].mxu0 %v510
      %v716 = vpop.f32.mrb[0].mxu0
      %v717 = vadd.f32 0.0, %v716
      %v718 = vpop.f32.mrb[0].mxu0
      %v719 = vpop.f32.mrb[0].mxu0
      %v720 = vadd.f32 0.0, %v719
      %v721 = vpop.f32.mrb[0].mxu0
      %722 = vmatprep.mubr.bf16.mxu0 %v513
      %723 = vmatmul.mubr.bf16.gmra.mrb[0].mxu0 %v512
      %v724 = vpop.f32.mrb[0].mxu0
      %v725 = vadd.f32 0.0, %v724
      %v726 = vpop.f32.mrb[0].mxu0
      %v727 = vpop.f32.mrb[0].mxu0
      %v728 = vadd.f32 0.0, %v727
      %v729 = vpop.f32.mrb[0].mxu0
      %730 = vmatprep.mubr.bf16.mxu0 %v515
      %731 = vmatmul.mubr.bf16.gmra.mrb[0].mxu0 %v514
      %v732 = vpop.f32.mrb[0].mxu0
      %v733 = vadd.f32 0.0, %v732
      %v734 = vpop.f32.mrb[0].mxu0
      %v735 = vpop.f32.mrb[0].mxu0
      %v736 = vadd.f32 0.0, %v735
      %v737 = vpop.f32.mrb[0].mxu0
      %738 = vmatprep.mubr.bf16.mxu0 %v517
      %739 = vmatmul.mubr.bf16.gmra.mrb[0].mxu0 %v516
      %v740 = vpop.f32.mrb[0].mxu0
      %v741 = vadd.f32 0.0, %v740
      %v742 = vpop.f32.mrb[0].mxu0
      %v743 = vpop.f32.mrb[0].mxu0
      %v744 = vadd.f32 0.0, %v743
      %v745 = vpop.f32.mrb[0].mxu0
      %746 = vmatprep.mubr.bf16.mxu0 %v519
      %747 = vmatmul.mubr.bf16.gmra.mrb[0].mxu0 %v518
      %v748 = vpop.f32.mrb[0].mxu0
      %v749 = vadd.f32 0.0, %v748
      %v750 = vpop.f32.mrb[0].mxu0
      %v751 = vpop.f32.mrb[0].mxu0
      %v752 = vadd.f32 0.0, %v751
      %v753 = vpop.f32.mrb[0].mxu0
      %754 = vmatprep.mubr.bf16.mxu0 %v521
      %755 = vmatmul.mubr.bf16.gmra.mrb[0].mxu0 %v520
      %v756 = vpop.f32.mrb[0].mxu0
      %v757 = vadd.f32 0.0, %v756
      %v758 = vpop.f32.mrb[0].mxu0
      %v759 = vpop.f32.mrb[0].mxu0
      %v760 = vadd.f32 0.0, %v759
      %v761 = vpop.f32.mrb[0].mxu0
      %762 = vmatprep.mubr.bf16.mxu0 %v523
      %763 = vmatmul.mubr.bf16.gmra.mrb[0].mxu0 %v522
      %v764 = vpop.f32.mrb[0].mxu0
      %v765 = vadd.f32 0.0, %v764
      %v766 = vpop.f32.mrb[0].mxu0
      %v767 = vpop.f32.mrb[0].mxu0
      %v768 = vadd.f32 0.0, %v767
      %v769 = vpop.f32.mrb[0].mxu0
      %770 = vmatprep.mubr.bf16.mxu0 %v525
      %771 = vmatmul.mubr.bf16.gmra.mrb[0].mxu0 %v524
      %v772 = vpop.f32.mrb[0].mxu0
      %v773 = vadd.f32 0.0, %v772
      %v774 = vpop.f32.mrb[0].mxu0
      %v775 = vpop.f32.mrb[0].mxu0
      %v776 = vadd.f32 0.0, %v775
      %v777 = vpop.f32.mrb[0].mxu0
      %778 = vmatprep.mubr.bf16.mxu0 %v527
      %779 = vmatmul.mubr.bf16.gmra.mrb[0].mxu0 %v526
      %v780 = vpop.f32.mrb[0].mxu0
      %v781 = vadd.f32 0.0, %v780
      %v782 = vpop.f32.mrb[0].mxu0
      %v783 = vpop.f32.mrb[0].mxu0
      %v784 = vadd.f32 0.0, %v783
      %v785 = vpop.f32.mrb[0].mxu0
      %786 = vmatprep.mubr.bf16.mxu0 %v529
      %787 = vmatmul.mubr.bf16.gmra.mrb[0].mxu0 %v528
      %v788 = vpop.f32.mrb[0].mxu0
      %v789 = vadd.f32 0.0, %v788
      %v790 = vpop.f32.mrb[0].mxu0
      %v791 = vpop.f32.mrb[0].mxu0
      %v792 = vadd.f32 0.0, %v791
      %v793 = vpop.f32.mrb[0].mxu0
      %794 = vmatprep.mubr.bf16.mxu0 %v531
      %795 = vmatmul.mubr.bf16.gmra.mrb[0].mxu0 %v530
      %v796 = vpop.f32.mrb[0].mxu0
      %v797 = vadd.f32 0.0, %v796
      %v798 = vpop.f32.mrb[0].mxu0
      %v799 = vpop.f32.mrb[0].mxu0
      %v800 = vadd.f32 0.0, %v799
      %v801 = vpop.f32.mrb[0].mxu0
      %802 = vmatprep.mubr.bf16.mxu0 %v533
      %803 = vmatmul.mubr.bf16.gmra.mrb[0].mxu0 %v532
      %v804 = vpop.f32.mrb[0].mxu0
      %v805 = vadd.f32 0.0, %v804
      %v806 = vpop.f32.mrb[0].mxu0
      %v807 = vpop.f32.mrb[0].mxu0
      %v808 = vadd.f32 0.0, %v807
      %v809 = vpop.f32.mrb[0].mxu0
      %810 = vmatprep.mubr.bf16.mxu0 %v535
      %811 = vmatmul.mubr.bf16.gmra.mrb[0].mxu0 %v534
      %v812 = vpop.f32.mrb[0].mxu0
      %v813 = vadd.f32 0.0, %v812
      %v814 = vpop.f32.mrb[0].mxu0
      %v815 = vpop.f32.mrb[0].mxu0
      %v816 = vadd.f32 0.0, %v815
      %v817 = vpop.f32.mrb[0].mxu0
      %818 = vmatprep.mubr.bf16.mxu0 %v537
      %819 = vmatmul.mubr.bf16.gmra.mrb[0].mxu0 %v536
      %v820 = vpop.f32.mrb[0].mxu0
      %v821 = vadd.f32 0.0, %v820
      %v822 = vpop.f32.mrb[0].mxu0
      %v823 = vpop.f32.mrb[0].mxu0
      %v824 = vadd.f32 0.0, %v823
      %v825 = vpop.f32.mrb[0].mxu0
      %826 = vdwg.mxu0
      %v827 = vadd.f32 %v314, %v701
      %v828 = vadd.f32 %v315, %v704
      %v829 = vadd.f32 %v316, %v709
      %v830 = vadd.f32 %v317, %v712
      %v831 = vadd.f32 %v318, %v717
      %v832 = vadd.f32 %v319, %v720
      %v833 = vadd.f32 %v320, %v725
      %v834 = vadd.f32 %v321, %v728
      %v835 = vadd.f32 %v322, %v733
      %v836 = vadd.f32 %v323, %v736
      %v837 = vadd.f32 %v324, %v741
      %v838 = vadd.f32 %v325, %v744
      %v839 = vadd.f32 %v326, %v749
      %v840 = vadd.f32 %v327, %v752
      %v841 = vadd.f32 %v328, %v757
      %v842 = vadd.f32 %v329, %v760
      %v843 = vadd.f32 %v330, %v765
      %v844 = vadd.f32 %v331, %v768
      %v845 = vadd.f32 %v332, %v773
      %v846 = vadd.f32 %v333, %v776
      %v847 = vadd.f32 %v334, %v781
      %v848 = vadd.f32 %v335, %v784
      %v849 = vadd.f32 %v336, %v789
      %v850 = vadd.f32 %v337, %v792
      %v851 = vadd.f32 %v338, %v797
      %v852 = vadd.f32 %v339, %v800
      %v853 = vadd.f32 %v340, %v805
      %v854 = vadd.f32 %v341, %v808
      %v855 = vadd.f32 %v342, %v813
      %v856 = vadd.f32 %v343, %v816
      %v857 = vadd.f32 %v344, %v821
      %v858 = vadd.f32 %v345, %v824
      %859 = vst [vmem:[#allocation2] sm:$0xff] %v827
      %860 = vst [vmem:[#allocation2 + $0x8] sm:$0xff] %v828
      %861 = vst [vmem:[#allocation2 + $0x10] sm:$0xff] %v829
      %862 = vst [vmem:[#allocation2 + $0x18] sm:$0xff] %v830
      %863 = vst [vmem:[#allocation2 + $0x20] sm:$0xff] %v831
      %864 = vst [vmem:[#allocation2 + $0x28] sm:$0xff] %v832
      %865 = vst [vmem:[#allocation2 + $0x30] sm:$0xff] %v833
      %866 = vst [vmem:[#allocation2 + $0x38] sm:$0xff] %v834
      %867 = vst [vmem:[#allocation2 + $0x40] sm:$0xff] %v835
      %868 = vst [vmem:[#allocation2 + $0x48] sm:$0xff] %v836
      %869 = vst [vmem:[#allocation2 + $0x50] sm:$0xff] %v837
      %870 = vst [vmem:[#allocation2 + $0x58] sm:$0xff] %v838
      %871 = vst [vmem:[#allocation2 + $0x60] sm:$0xff] %v839
      %872 = vst [vmem:[#allocation2 + $0x68] sm:$0xff] %v840
      %873 = vst [vmem:[#allocation2 + $0x70] sm:$0xff] %v841
      %874 = vst [vmem:[#allocation2 + $0x78] sm:$0xff] %v842
      %875 = vst [vmem:[#allocation2 + $0x80] sm:$0xff] %v843
      %876 = vst [vmem:[#allocation2 + $0x88] sm:$0xff] %v844
      %877 = vst [vmem:[#allocation2 + $0x90] sm:$0xff] %v845
      %878 = vst [vmem:[#allocation2 + $0x98] sm:$0xff] %v846
      %879 = vst [vmem:[#allocation2 + $0xa0] sm:$0xff] %v847
      %880 = vst [vmem:[#allocation2 + $0xa8] sm:$0xff] %v848
      %881 = vst [vmem:[#allocation2 + $0xb0] sm:$0xff] %v849
      %882 = vst [vmem:[#allocation2 + $0xb8] sm:$0xff] %v850
      %883 = vst [vmem:[#allocation2 + $0xc0] sm:$0xff] %v851
      %884 = vst [vmem:[#allocation2 + $0xc8] sm:$0xff] %v852
      %885 = vst [vmem:[#allocation2 + $0xd0] sm:$0xff] %v853
      %886 = vst [vmem:[#allocation2 + $0xd8] sm:$0xff] %v854
      %887 = vst [vmem:[#allocation2 + $0xe0] sm:$0xff] %v855
      %888 = vst [vmem:[#allocation2 + $0xe8] sm:$0xff] %v856
      %889 = vst [vmem:[#allocation2 + $0xf0] sm:$0xff] %v857
      %890 = vst [vmem:[#allocation2 + $0xf8] sm:$0xff] %v858
      // Predicated region
      $region33: #{encoder_forward.18} parent=27 // pred_check
        %p891 = pneg %p278
      $region34: #{encoder_forward.18} parent=27 // pred_check_branch
        %893 = sbr.rel (%p891) target = $region36
      $region35: #{encoder_forward.18} parent=27 // pred_region
        %v894 = vld [vmem:[#allocation2] sm:$0xff]
        %v895 = vld [vmem:[#allocation2 + $0x8] sm:$0xff]
        %v896 = vld [vmem:[#allocation2 + $0x10] sm:$0xff]
        %v897 = vld [vmem:[#allocation2 + $0x18] sm:$0xff]
        %v898 = vld [vmem:[#allocation2 + $0x20] sm:$0xff]
        %v899 = vld [vmem:[#allocation2 + $0x28] sm:$0xff]
        %v900 = vld [vmem:[#allocation2 + $0x30] sm:$0xff]
        %v901 = vld [vmem:[#allocation2 + $0x38] sm:$0xff]
        %v902 = vld [vmem:[#allocation2 + $0x40] sm:$0xff]
        %v903 = vld [vmem:[#allocation2 + $0x48] sm:$0xff]
        %v904 = vld [vmem:[#allocation2 + $0x50] sm:$0xff]
        %v905 = vld [vmem:[#allocation2 + $0x58] sm:$0xff]
        %v906 = vld [vmem:[#allocation2 + $0x60] sm:$0xff]
        %v907 = vld [vmem:[#allocation2 + $0x68] sm:$0xff]
        %v908 = vld [vmem:[#allocation2 + $0x70] sm:$0xff]
        %v909 = vld [vmem:[#allocation2 + $0x78] sm:$0xff]
        %v910 = vld [vmem:[#allocation2 + $0x80] sm:$0xff]
        %v911 = vld [vmem:[#allocation2 + $0x88] sm:$0xff]
        %v912 = vld [vmem:[#allocation2 + $0x90] sm:$0xff]
        %v913 = vld [vmem:[#allocation2 + $0x98] sm:$0xff]
        %v914 = vld [vmem:[#allocation2 + $0xa0] sm:$0xff]
        %v915 = vld [vmem:[#allocation2 + $0xa8] sm:$0xff]
        %v916 = vld [vmem:[#allocation2 + $0xb0] sm:$0xff]
        %v917 = vld [vmem:[#allocation2 + $0xb8] sm:$0xff]
        %v918 = vld [vmem:[#allocation2 + $0xc0] sm:$0xff]
        %v919 = vld [vmem:[#allocation2 + $0xc8] sm:$0xff]
        %v920 = vld [vmem:[#allocation2 + $0xd0] sm:$0xff]
        %v921 = vld [vmem:[#allocation2 + $0xd8] sm:$0xff]
        %v922 = vld [vmem:[#allocation2 + $0xe0] sm:$0xff]
        %v923 = vld [vmem:[#allocation2 + $0xe8] sm:$0xff]
        %v924 = vld [vmem:[#allocation2 + $0xf0] sm:$0xff]
        %v925 = vld [vmem:[#allocation2 + $0xf8] sm:$0xff]
        %v926 = vadd.f32 %v894, %v895
        %v927 = vadd.f32 %v926, %v896
        %v928 = vadd.f32 %v927, %v897
        %v929 = vadd.f32 %v928, %v898
        %v930 = vadd.f32 %v929, %v899
        %v931 = vadd.f32 %v930, %v900
        %v932 = vadd.f32 %v931, %v901
        %v933 = vadd.f32 %v932, %v902
        %v934 = vadd.f32 %v933, %v903
        %v935 = vadd.f32 %v934, %v904
        %v936 = vadd.f32 %v935, %v905
        %v937 = vadd.f32 %v936, %v906
        %v938 = vadd.f32 %v937, %v907
        %v939 = vadd.f32 %v938, %v908
        %v940 = vadd.f32 %v939, %v909
        %v941 = vadd.f32 %v940, %v910
        %v942 = vadd.f32 %v941, %v911
        %v943 = vadd.f32 %v942, %v912
        %v944 = vadd.f32 %v943, %v913
        %v945 = vadd.f32 %v944, %v914
        %v946 = vadd.f32 %v945, %v915
        %v947 = vadd.f32 %v946, %v916
        %v948 = vadd.f32 %v947, %v917
        %v949 = vadd.f32 %v948, %v918
        %v950 = vadd.f32 %v949, %v919
        %v951 = vadd.f32 %v950, %v920
        %v952 = vadd.f32 %v951, %v921
        %v953 = vadd.f32 %v952, %v922
        %v954 = vadd.f32 %v953, %v923
        %v955 = vadd.f32 %v954, %v924
        %v956 = vadd.f32 %v955, %v925
        %v957 = vrot.slane %v956, 4
        %v958 = vadd.f32 %v956, %v957
        %v959 = vrot.slane %v958, 2
        %v960 = vadd.f32 %v958, %v959
        %v961 = vrot.slane %v960, 1
        %v962 = vadd.f32 %v960, %v961
        %v963 = vmul.f32 %v894, %v894
        %v964 = vmul.f32 %v895, %v895
        %v965 = vmul.f32 %v896, %v896
        %v966 = vmul.f32 %v897, %v897
        %v967 = vmul.f32 %v898, %v898
        %v968 = vmul.f32 %v899, %v899
        %v969 = vmul.f32 %v900, %v900
        %v970 = vmul.f32 %v901, %v901
        %v971 = vmul.f32 %v902, %v902
        %v972 = vmul.f32 %v903, %v903
        %v973 = vmul.f32 %v904, %v904
        %v974 = vmul.f32 %v905, %v905
        %v975 = vmul.f32 %v906, %v906
        %v976 = vmul.f32 %v907, %v907
        %v977 = vmul.f32 %v908, %v908
        %v978 = vmul.f32 %v909, %v909
        %v979 = vmul.f32 %v910, %v910
        %v980 = vmul.f32 %v911, %v911
        %v981 = vmul.f32 %v912, %v912
        %v982 = vmul.f32 %v913, %v913
        %v983 = vmul.f32 %v914, %v914
        %v984 = vmul.f32 %v915, %v915
        %v985 = vmul.f32 %v916, %v916
        %v986 = vmul.f32 %v917, %v917
        %v987 = vmul.f32 %v918, %v918
        %v988 = vmul.f32 %v919, %v919
        %v989 = vmul.f32 %v920, %v920
        %v990 = vmul.f32 %v921, %v921
        %v991 = vmul.f32 %v922, %v922
        %v992 = vmul.f32 %v923, %v923
        %v993 = vmul.f32 %v924, %v924
        %v994 = vmul.f32 %v925, %v925
        %v995 = vadd.f32 %v963, %v964
        %v996 = vadd.f32 %v995, %v965
        %v997 = vadd.f32 %v996, %v966
        %v998 = vadd.f32 %v997, %v967
        %v999 = vadd.f32 %v998, %v968
        %v1000 = vadd.f32 %v999, %v969
        %v1001 = vadd.f32 %v1000, %v970
        %v1002 = vadd.f32 %v1001, %v971
        %v1003 = vadd.f32 %v1002, %v972
        %v1004 = vadd.f32 %v1003, %v973
        %v1005 = vadd.f32 %v1004, %v974
        %v1006 = vadd.f32 %v1005, %v975
        %v1007 = vadd.f32 %v1006, %v976
        %v1008 = vadd.f32 %v1007, %v977
        %v1009 = vadd.f32 %v1008, %v978
        %v1010 = vadd.f32 %v1009, %v979
        %v1011 = vadd.f32 %v1010, %v980
        %v1012 = vadd.f32 %v1011, %v981
        %v1013 = vadd.f32 %v1012, %v982
        %v1014 = vadd.f32 %v1013, %v983
        %v1015 = vadd.f32 %v1014, %v984
        %v1016 = vadd.f32 %v1015, %v985
        %v1017 = vadd.f32 %v1016, %v986
        %v1018 = vadd.f32 %v1017, %v987
        %v1019 = vadd.f32 %v1018, %v988
        %v1020 = vadd.f32 %v1019, %v989
        %v1021 = vadd.f32 %v1020, %v990
        %v1022 = vadd.f32 %v1021, %v991
        %v1023 = vadd.f32 %v1022, %v992
        %v1024 = vadd.f32 %v1023, %v993
        %v1025 = vadd.f32 %v1024, %v994
        %v1026 = vrot.slane %v1025, 4
        %v1027 = vadd.f32 %v1025, %v1026
        %v1028 = vrot.slane %v1027, 2
        %v1029 = vadd.f32 %v1027, %v1028
        %v1030 = vrot.slane %v1029, 1
        %v1031 = vadd.f32 %v1029, %v1030
        %v1032 = vlaneseq
        %v1033 = vshrl.u32 %v1032, 7
        %vm1034 = vcmp.eq.s32.totalorder %v1033, 0
        %vm1035 = vcmp.eq.s32.totalorder %v1033, 1
        %v1036 = vsel %vm1035, %v1031, 0.0
        %v1037 = vsel %vm1034, %v962, %v1036
        %1038 = vst [vmem:[%s276] sm:$0xff] %v1037
        %v1039 = vpack.c.bf16 %v895, %v894
        %v1040 = vpack.c.bf16 %v897, %v896
        %v1041 = vpack.c.bf16 %v899, %v898
        %v1042 = vpack.c.bf16 %v901, %v900
        %v1043 = vpack.c.bf16 %v903, %v902
        %v1044 = vpack.c.bf16 %v905, %v904
        %v1045 = vpack.c.bf16 %v907, %v906
        %v1046 = vpack.c.bf16 %v909, %v908
        %v1047 = vpack.c.bf16 %v911, %v910
        %v1048 = vpack.c.bf16 %v913, %v912
        %v1049 = vpack.c.bf16 %v915, %v914
        %v1050 = vpack.c.bf16 %v917, %v916
        %v1051 = vpack.c.bf16 %v919, %v918
        %v1052 = vpack.c.bf16 %v921, %v920
        %v1053 = vpack.c.bf16 %v923, %v922
        %v1054 = vpack.c.bf16 %v925, %v924
        %v1071 = vunpack.c.l.b16 %v1039
        %v1072 = vunpack.c.h.b16 %v1039
        %v1073 = vunpack.c.l.b16 %v1040
        %v1074 = vunpack.c.h.b16 %v1040
        %v1075 = vunpack.c.l.b16 %v1041
        %v1076 = vunpack.c.h.b16 %v1041
        %v1077 = vunpack.c.l.b16 %v1042
        %v1078 = vunpack.c.h.b16 %v1042
        %v1079 = vunpack.c.l.b16 %v1043
        %v1080 = vunpack.c.h.b16 %v1043
        %v1081 = vunpack.c.l.b16 %v1044
        %v1082 = vunpack.c.h.b16 %v1044
        %v1083 = vunpack.c.l.b16 %v1045
        %v1084 = vunpack.c.h.b16 %v1045
        %v1085 = vunpack.c.l.b16 %v1046
        %v1086 = vunpack.c.h.b16 %v1046
        %v1087 = vunpack.c.l.b16 %v1047
        %v1088 = vunpack.c.h.b16 %v1047
        %v1089 = vunpack.c.l.b16 %v1048
        %v1090 = vunpack.c.h.b16 %v1048
        %v1091 = vunpack.c.l.b16 %v1049
        %v1092 = vunpack.c.h.b16 %v1049
        %v1093 = vunpack.c.l.b16 %v1050
        %v1094 = vunpack.c.h.b16 %v1050
        %v1095 = vunpack.c.l.b16 %v1051
        %v1096 = vunpack.c.h.b16 %v1051
        %v1097 = vunpack.c.l.b16 %v1052
        %v1098 = vunpack.c.h.b16 %v1052
        %v1099 = vunpack.c.l.b16 %v1053
        %v1100 = vunpack.c.h.b16 %v1053
        %v1101 = vunpack.c.l.b16 %v1054
        %v1102 = vunpack.c.h.b16 %v1054
        %v1103 = vpack.c.b16 %v1071, %v1071
        %v1104 = vpack.c.b16 %v1072, %v1072
        %v1105 = vpack.c.b16 %v1073, %v1073
        %v1106 = vpack.c.b16 %v1074, %v1074
        %v1107 = vpack.c.b16 %v1075, %v1075
        %v1108 = vpack.c.b16 %v1076, %v1076
        %v1109 = vpack.c.b16 %v1077, %v1077
        %v1110 = vpack.c.b16 %v1078, %v1078
        %v1111 = vpack.c.b16 %v1079, %v1079
        %v1112 = vpack.c.b16 %v1080, %v1080
        %v1113 = vpack.c.b16 %v1081, %v1081
        %v1114 = vpack.c.b16 %v1082, %v1082
        %v1115 = vpack.c.b16 %v1083, %v1083
        %v1116 = vpack.c.b16 %v1084, %v1084
        %v1117 = vpack.c.b16 %v1085, %v1085
        %v1118 = vpack.c.b16 %v1086, %v1086
        %v1119 = vpack.c.b16 %v1087, %v1087
        %v1120 = vpack.c.b16 %v1088, %v1088
        %v1121 = vpack.c.b16 %v1089, %v1089
        %v1122 = vpack.c.b16 %v1090, %v1090
        %v1123 = vpack.c.b16 %v1091, %v1091
        %v1124 = vpack.c.b16 %v1092, %v1092
        %v1125 = vpack.c.b16 %v1093, %v1093
        %v1126 = vpack.c.b16 %v1094, %v1094
        %v1127 = vpack.c.b16 %v1095, %v1095
        %v1128 = vpack.c.b16 %v1096, %v1096
        %v1129 = vpack.c.b16 %v1097, %v1097
        %v1130 = vpack.c.b16 %v1098, %v1098
        %v1131 = vpack.c.b16 %v1099, %v1099
        %v1132 = vpack.c.b16 %v1100, %v1100
        %v1133 = vpack.c.b16 %v1101, %v1101
        %v1134 = vpack.c.b16 %v1102, %v1102
        %1167 = vst [vmem:[%s268] sm:$0xf] %v1103
        %1168 = vst [vmem:[%s268 + $0x4] sm:$0xf] %v1104
        %1169 = vst [vmem:[%s268 + $0x8] sm:$0xf] %v1105
        %1170 = vst [vmem:[%s268 + $0xc] sm:$0xf] %v1106
        %1171 = vst [vmem:[%s268 + $0x10] sm:$0xf] %v1107
        %1172 = vst [vmem:[%s268 + $0x14] sm:$0xf] %v1108
        %1173 = vst [vmem:[%s268 + $0x18] sm:$0xf] %v1109
        %1174 = vst [vmem:[%s268 + $0x1c] sm:$0xf] %v1110
        %1175 = vst [vmem:[%s268 + $0x20] sm:$0xf] %v1111
        %1176 = vst [vmem:[%s268 + $0x24] sm:$0xf] %v1112
        %1177 = vst [vmem:[%s268 + $0x28] sm:$0xf] %v1113
        %1178 = vst [vmem:[%s268 + $0x2c] sm:$0xf] %v1114
        %1179 = vst [vmem:[%s268 + $0x30] sm:$0xf] %v1115
        %1180 = vst [vmem:[%s268 + $0x34] sm:$0xf] %v1116
        %1181 = vst [vmem:[%s268 + $0x38] sm:$0xf] %v1117
        %1182 = vst [vmem:[%s268 + $0x3c] sm:$0xf] %v1118
        %1183 = vst [vmem:[%s268 + $0x40] sm:$0xf] %v1119
        %1184 = vst [vmem:[%s268 + $0x44] sm:$0xf] %v1120
        %1185 = vst [vmem:[%s268 + $0x48] sm:$0xf] %v1121
        %1186 = vst [vmem:[%s268 + $0x4c] sm:$0xf] %v1122
        %1187 = vst [vmem:[%s268 + $0x50] sm:$0xf] %v1123
        %1188 = vst [vmem:[%s268 + $0x54] sm:$0xf] %v1124
        %1189 = vst [vmem:[%s268 + $0x58] sm:$0xf] %v1125
        %1190 = vst [vmem:[%s268 + $0x5c] sm:$0xf] %v1126
        %1191 = vst [vmem:[%s268 + $0x60] sm:$0xf] %v1127
        %1192 = vst [vmem:[%s268 + $0x64] sm:$0xf] %v1128
        %1193 = vst [vmem:[%s268 + $0x68] sm:$0xf] %v1129
        %1194 = vst [vmem:[%s268 + $0x6c] sm:$0xf] %v1130
        %1195 = vst [vmem:[%s268 + $0x70] sm:$0xf] %v1131
        %1196 = vst [vmem:[%s268 + $0x74] sm:$0xf] %v1132
        %1197 = vst [vmem:[%s268 + $0x78] sm:$0xf] %v1133
        %1198 = vst [vmem:[%s268 + $0x7c] sm:$0xf] %v1134
      $region36: #{encoder_forward.18} parent=27 // pred_fallthru
        _
      %s1199 = smul.u32 32, %s21
      %p1200 = scmp.lt.s32.totalorder %s20, 1
      %s1201 = scalar_select %p1200, %s20, 1
      %p1202 = scmp.lt.s32.totalorder %s1199, 31
      %s1203 = scalar_select %p1202, %s1199, 31
      %s1204 = smul.addr %s1201, 32
      %s1205 = sadd.s32 %s1203, %s1204
      %s1206 = smul.addr %s1205, 4
      %s1207 = scalar_lea.vmem %s2, %s1206
      %p1208 = scmp.lt.s32.totalorder %s20, 1
      %s1209 = scalar_select %p1208, %s20, 1
      %p1210 = scmp.lt.s32.totalorder %s21, 0
      %s1211 = scalar_select %p1210, %s21, 0
      %s1212 = sadd.s32 %s1211, %s1209
      %s1213 = smul.addr %s1212, 8
      %s1214 = scalar_lea.vmem %s3, %s1213
      // Predicated region
      $region37: #{encoder_forward.18} parent=27 // pred_check
        %p1215 = pneg %p110
      $region38: #{encoder_forward.18} parent=27 // pred_check_branch
        %1217 = sbr.rel (%p1215) target = $region40
      $region39: #{encoder_forward.18} parent=27 // pred_region
        %s1218 = smul.u32 32, %s21
      $region40: #{encoder_forward.18} parent=27 // pred_fallthru
        _
      // Predicated region
      $region41: #{encoder_forward.18} parent=27 // pred_check
        %p1219 = pneg %p138
      $region42: #{encoder_forward.18} parent=27 // pred_check_branch
        %1221 = sbr.rel (%p1219) target = $region44
      $region43: #{encoder_forward.18} parent=27 // pred_region
        _
      $region44: #{encoder_forward.18} parent=27 // pred_fallthru
        _
    $region28: #{encoder_forward.18} parent=5 // pred_fallthru
      _
    %p1222 = scmp.le.s32.totalorder 2, %s10
    // Predicated region
    $region45: #{encoder_forward.18} parent=5 // pred_check
      %p1223 = pneg %p1222
    $region46: #{encoder_forward.18} parent=5 // pred_check_branch
      %1225 = sbr.rel (%p1223) target = $region48
    $region47: #{encoder_forward.18} parent=5 // pred_region
      %s1226 = ssub.s32 %s10, 2
      // Predicated region
      $region49: #{encoder_forward.18} parent=47 // pred_check
        %p1227 = pneg %p116
      $region50: #{encoder_forward.18} parent=47 // pred_check_branch
        %1229 = sbr.rel (%p1227) target = $region52
      $region51: #{encoder_forward.18} parent=47 // pred_region
        %s1230 = smul.u32 32, %s24
        %p1231 = scmp.lt.s32.totalorder %s23, 1
        %s1232 = scalar_select %p1231, %s23, 1
        %p1233 = scmp.lt.s32.totalorder %s1230, 31
        %s1234 = scalar_select %p1233, %s1230, 31
        %s1235 = smul.addr %s1232, 32
        %s1236 = sadd.s32 %s1234, %s1235
        %s1237 = smul.addr %s1236, 4
        %s1238 = scalar_lea.vmem %s2, %s1237
      $region52: #{encoder_forward.18} parent=47 // pred_fallthru
        _
      // Predicated region
      $region53: #{encoder_forward.18} parent=47 // pred_check
        %p1239 = pneg %p144
      $region54: #{encoder_forward.18} parent=47 // pred_check_branch
        %1241 = sbr.rel (%p1239) target = $region56
      $region55: #{encoder_forward.18} parent=47 // pred_region
        %p1242 = scmp.lt.s32.totalorder %s23, 1
        %s1243 = scalar_select %p1242, %s23, 1
        %p1244 = scmp.lt.s32.totalorder %s24, 0
        %s1245 = scalar_select %p1244, %s24, 0
        %s1246 = sadd.s32 %s1245, %s1243
        %s1247 = smul.addr %s1246, 8
        %s1248 = scalar_lea.vmem %s3, %s1247
      $region56: #{encoder_forward.18} parent=47 // pred_fallthru
        _
    $region48: #{encoder_forward.18} parent=5 // pred_fallthru
      _
  $region6: #{encoder_forward.18} parent=0 // loop_footer
    %s14 = sadd.s32 1, %s10
  $region7: #{encoder_forward.18} parent=0 // loop_footer_branch
    %9 = sbr.rel target = $region3
  $region8: #{encoder_forward.18} parent=0 // loop_exit
    _

// kernel: encoder_forward.20
$region0: #{encoder_forward.20}
  #allocation0 [shape = 'u32[]', space=smem, size = 0x4, offset = 0x4, fixed_abs, tag = 'smem constant byte address 0x4 - core index']
  #allocation1 [shape = 'u32[144,128]{1,0:T(1,128)}', space=vmem, size = 0x12000, scoped, tag = 'internal scratch']
  #allocation2 [shape = 'f32[64,128]{1,0:T(8,128)}', space=vmem, size = 0x8000, scoped, tag = 'scratch operand']
  %s0 = inlined_call_operand.vmem [shape: bf16[2,64,384], index: 0, kind: input, shape index: {}]
  %s1 = inlined_call_operand.vmem [shape: bf16[384,128], index: 1, kind: input, shape index: {}]
  %s2 = inlined_call_operand.vmem [shape: bf16[2,64,128], index: 2, kind: output, shape index: {0}]
  %s3 = inlined_call_operand.vmem [shape: f32[2,1,8,128], index: 3, kind: output, shape index: {1}]
  %4 = xla_tuple %s2, %s3
  %s5 = sld [smem:[#allocation0]]
  $region57: #{encoder_forward.20} parent=0
    _
  %s7 = ssub.s32 1, %s5
  %s8 = scalar_select 0, %s7, %s5
  loop: start=0, step=1, limit=4
  $region2: #{encoder_forward.20} parent=0 // loop_pre_header
    _
  $region3: #{encoder_forward.20} parent=0 // loop_header
    %s10 = sphi 0, %s14
    %p11 = scmp.ge.s32.totalorder %s10, 4
    %s17 = sphi 0, %s36
    %s18 = sphi 0, %s32
    %s19 = sphi 0, %s28
    %s20 = sphi 0, %s17
    %s21 = sphi 0, %s18
    %s22 = sphi 0, %s19
    %s23 = sphi 0, %s20
    %s24 = sphi 0, %s21
    %s25 = sphi 0, %s22
    %s43 = sphi 0, %s45
    %s46 = sphi 0, %s43
    %s47 = sphi 0, %s46
    %s63 = sphi 0, %s47
    %s69 = sphi 0, %s71
    %s72 = sphi 0, %s69
    %s73 = sphi 0, %s72
    %s89 = sphi 0, %s73
    %s97 = sphi 0, %s99
    %s100 = sphi 0, %s97
    %s101 = sphi 0, %s100
    %s117 = sphi 0, %s101
    %s125 = sphi 0, %s127
    %s128 = sphi 0, %s125
    %s129 = sphi 0, %s128
    %s145 = sphi 0, %s129
  $region4: #{encoder_forward.20} parent=0 // loop_header_branch
    %13 = sbr.rel (%p11) target = $region8
  $region5: #{encoder_forward.20} parent=0 // loop_body
    %s15 = ssub.s32 %s10, 1
    %s16 = ssub.s32 %s10, 2
    %s26 = sadd.s32 1, %s19
    %p27 = scmp.ge.s32.totalorder %s26, 1
    %s28 = scalar_select %p27, 0, %s26
    %s29 = sadd.s32 1, %s18
    %s30 = scalar_select %p27, %s29, %s18
    %p31 = scmp.ge.s32.totalorder %s30, 1
    %s32 = scalar_select %p31, 0, %s30
    %s33 = sadd.s32 1, %s17
    %s34 = scalar_select %p31, %s33, %s17
    %p35 = scmp.ge.s32.totalorder %s34, 2
    %s36 = scalar_select %p35, 0, %s34
    %s37 = ssub.s32 %s17, %s36
    %s38 = ssub.s32 %s18, %s32
    %s39 = sor.u32 %s37, %s38
    %s40 = ssub.s32 %s19, %s28
    %s41 = sor.u32 %s39, %s40
    %p42 = scmp.eq.s32.totalorder %s41, 0
    %s44 = sadd.s32 %s43, 1
    %s45 = scalar_select %p42, %s43, %s44
    %p48 = pneg %p42
    %p49 = scmp.eq.s32.totalorder %s10, 1
    %p50 = por %p48, %p49
    %p51 = scmp.ne.s32.totalorder %s43, %s46
    %p52 = scmp.eq.s32.totalorder %s10, 0
    %p53 = por %p51, %p52
    %p54 = scmp.ne.s32.totalorder %s43, %s46
    %p55 = scmp.eq.s32.totalorder %s15, 1
    %p56 = por %p54, %p55
    %p57 = scmp.ne.s32.totalorder %s46, %s47
    %p58 = scmp.eq.s32.totalorder %s15, 0
    %p59 = por %p57, %p58
    %p60 = scmp.ne.s32.totalorder %s46, %s47
    %p61 = scmp.eq.s32.totalorder %s16, 1
    %p62 = por %p60, %p61
    %p64 = scmp.ne.s32.totalorder %s47, %s63
    %p65 = scmp.eq.s32.totalorder %s16, 0
    %p66 = por %p64, %p65
    %s67 = ssub.s32 %s19, %s28
    %p68 = scmp.eq.s32.totalorder %s67, 0
    %s70 = sadd.s32 %s69, 1
    %s71 = scalar_select %p68, %s69, %s70
    %p74 = pneg %p68
    %p75 = scmp.eq.s32.totalorder %s10, 1
    %p76 = por %p74, %p75
    %p77 = scmp.ne.s32.totalorder %s69, %s72
    %p78 = scmp.eq.s32.totalorder %s10, 0
    %p79 = por %p77, %p78
    %p80 = scmp.ne.s32.totalorder %s69, %s72
    %p81 = scmp.eq.s32.totalorder %s15, 1
    %p82 = por %p80, %p81
    %p83 = scmp.ne.s32.totalorder %s72, %s73
    %p84 = scmp.eq.s32.totalorder %s15, 0
    %p85 = por %p83, %p84
    %p86 = scmp.ne.s32.totalorder %s72, %s73
    %p87 = scmp.eq.s32.totalorder %s16, 1
    %p88 = por %p86, %p87
    %p90 = scmp.ne.s32.totalorder %s73, %s89
    %p91 = scmp.eq.s32.totalorder %s16, 0
    %p92 = por %p90, %p91
    %s93 = ssub.s32 %s17, %s36
    %s94 = ssub.s32 %s18, %s32
    %s95 = sor.u32 %s93, %s94
    %p96 = scmp.eq.s32.totalorder %s95, 0
    %s98 = sadd.s32 %s97, 1
    %s99 = scalar_select %p96, %s97, %s98
    %p102 = pneg %p96
    %p103 = scmp.eq.s32.totalorder %s10, 1
    %p104 = por %p102, %p103
    %p105 = scmp.ne.s32.totalorder %s97, %s100
    %p106 = scmp.eq.s32.totalorder %s10, 0
    %p107 = por %p105, %p106
    %p108 = scmp.ne.s32.totalorder %s97, %s100
    %p109 = scmp.eq.s32.totalorder %s15, 1
    %p110 = por %p108, %p109
    %p111 = scmp.ne.s32.totalorder %s100, %s101
    %p112 = scmp.eq.s32.totalorder %s15, 0
    %p113 = por %p111, %p112
    %p114 = scmp.ne.s32.totalorder %s100, %s101
    %p115 = scmp.eq.s32.totalorder %s16, 1
    %p116 = por %p114, %p115
    %p118 = scmp.ne.s32.totalorder %s101, %s117
    %p119 = scmp.eq.s32.totalorder %s16, 0
    %p120 = por %p118, %p119
    %s121 = ssub.s32 %s17, %s36
    %s122 = ssub.s32 %s18, %s32
    %s123 = sor.u32 %s121, %s122
    %p124 = scmp.eq.s32.totalorder %s123, 0
    %s126 = sadd.s32 %s125, 1
    %s127 = scalar_select %p124, %s125, %s126
    %p130 = pneg %p124
    %p131 = scmp.eq.s32.totalorder %s10, 1
    %p132 = por %p130, %p131
    %p133 = scmp.ne.s32.totalorder %s125, %s128
    %p134 = scmp.eq.s32.totalorder %s10, 0
    %p135 = por %p133, %p134
    %p136 = scmp.ne.s32.totalorder %s125, %s128
    %p137 = scmp.eq.s32.totalorder %s15, 1
    %p138 = por %p136, %p137
    %p139 = scmp.ne.s32.totalorder %s128, %s129
    %p140 = scmp.eq.s32.totalorder %s15, 0
    %p141 = por %p139, %p140
    %p142 = scmp.ne.s32.totalorder %s128, %s129
    %p143 = scmp.eq.s32.totalorder %s16, 1
    %p144 = por %p142, %p143
    %p146 = scmp.ne.s32.totalorder %s129, %s145
    %p147 = scmp.eq.s32.totalorder %s16, 0
    %p148 = por %p146, %p147
    %p149 = scmp.le.s32.totalorder 1, %s10
    %p150 = scmp.lt.s32.totalorder %s10, 3
    %p151 = pnand %p149, %p150
    %p152 = pneg %p151
    // Predicated region
    $region9: #{encoder_forward.20} parent=5 // pred_check
      _
    $region10: #{encoder_forward.20} parent=5 // pred_check_branch
      %154 = sbr.rel (%p151) target = $region12
    $region11: #{encoder_forward.20} parent=5 // pred_region
      %s155 = ssub.s32 %s10, 1
      // Predicated region
      $region13: #{encoder_forward.20} parent=11 // pred_check
        %p156 = pneg %p85
      $region14: #{encoder_forward.20} parent=11 // pred_check_branch
        %158 = sbr.rel (%p156) target = $region16
      $region15: #{encoder_forward.20} parent=11 // pred_region
        %s159 = smul.u32 48, %s22
        %p160 = scmp.lt.s32.totalorder %s159, 47
        %s161 = scalar_select %p160, %s159, 47
        %s162 = smul.addr %s161, 4
        %s163 = scalar_lea.vmem %s1, %s162
        %s164 = smul.u32 48, %s22
      $region16: #{encoder_forward.20} parent=11 // pred_fallthru
        _
    $region12: #{encoder_forward.20} parent=5 // pred_fallthru
      _
    %p165 = scmp.lt.s32.totalorder %s10, 2
    // Predicated region
    $region17: #{encoder_forward.20} parent=5 // pred_check
      %p166 = pneg %p165
    $region18: #{encoder_forward.20} parent=5 // pred_check_branch
      %168 = sbr.rel (%p166) target = $region20
    $region19: #{encoder_forward.20} parent=5 // pred_region
      // Predicated region
      $region21: #{encoder_forward.20} parent=19 // pred_check
        %p169 = pneg %p53
      $region22: #{encoder_forward.20} parent=19 // pred_check_branch
        %171 = sbr.rel (%p169) target = $region24
      $region23: #{encoder_forward.20} parent=19 // pred_region
        %s172 = smul.u32 8, %s18
        %s173 = smul.u32 3, %s19
        %p174 = scmp.lt.s32.totalorder %s17, 1
        %s175 = scalar_select %p174, %s17, 1
        %p176 = scmp.lt.s32.totalorder %s172, 7
        %s177 = scalar_select %p176, %s172, 7
        %p178 = scmp.lt.s32.totalorder %s173, 2
        %s179 = scalar_select %p178, %s173, 2
        %s180 = smul.addr %s177, 3
        %s181 = sadd.s32 %s179, %s180
        %s182 = smul.addr %s175, 24
        %s183 = sadd.s32 %s181, %s182
        %s184 = smul.addr %s183, 4
        %s185 = scalar_lea.vmem %s0, %s184
        %s186 = smul.u32 8, %s18
        %s187 = smul.u32 3, %s19
      $region24: #{encoder_forward.20} parent=19 // pred_fallthru
        _
    $region20: #{encoder_forward.20} parent=5 // pred_fallthru
      _
    %p188 = scmp.le.s32.totalorder 1, %s10
    %p189 = scmp.lt.s32.totalorder %s10, 3
    %p190 = pnand %p188, %p189
    %p191 = pneg %p190
    // Predicated region
    $region25: #{encoder_forward.20} parent=5 // pred_check
      _
    $region26: #{encoder_forward.20} parent=5 // pred_check_branch
      %193 = sbr.rel (%p190) target = $region28
    $region27: #{encoder_forward.20} parent=5 // pred_region
      %s194 = ssub.s32 %s10, 1
      %s195 = smul.u32 8, %s21
      %s196 = smul.u32 3, %s22
      %p197 = scmp.lt.s32.totalorder %s20, 1
      %s198 = scalar_select %p197, %s20, 1
      %p199 = scmp.lt.s32.totalorder %s195, 7
      %s200 = scalar_select %p199, %s195, 7
      %p201 = scmp.lt.s32.totalorder %s196, 2
      %s202 = scalar_select %p201, %s196, 2
      %s203 = smul.addr %s200, 3
      %s204 = sadd.s32 %s202, %s203
      %s205 = smul.addr %s198, 24
      %s206 = sadd.s32 %s204, %s205
      %s207 = smul.addr %s206, 4
      %s208 = scalar_lea.vmem %s0, %s207
      %p209 = pneg %p59
      %p210 = pneg %p56
      %s211 = smul.u32 48, %s22
      %p212 = scmp.lt.s32.totalorder %s211, 47
      %s213 = scalar_select %p212, %s211, 47
      %s214 = smul.addr %s213, 4
      %s215 = scalar_lea.vmem %s1, %s214
      %p216 = pneg %p85
      %p217 = pneg %p82
      %p218 = pneg %p113
      %p219 = pneg %p110
      %s220 = smul.u32 8, %s21
      %p221 = scmp.lt.s32.totalorder %s20, 1
      %s222 = scalar_select %p221, %s20, 1
      %p223 = scmp.lt.s32.totalorder %s220, 7
      %s224 = scalar_select %p223, %s220, 7
      %s225 = smul.addr %s222, 8
      %s226 = sadd.s32 %s224, %s225
      %s227 = smul.addr %s226, 4
      %s228 = scalar_lea.vmem %s2, %s227
      %p229 = pneg %p141
      %p230 = pneg %p138
      %p231 = scmp.lt.s32.totalorder %s20, 1
      %s232 = scalar_select %p231, %s20, 1
      %p233 = scmp.lt.s32.totalorder %s21, 0
      %s234 = scalar_select %p233, %s21, 0
      %s235 = sadd.s32 %s234, %s232
      %s236 = smul.addr %s235, 8
      %s237 = scalar_lea.vmem %s3, %s236
      %s238 = smul.u32 8, %s21
      %s239 = smul.u32 3, %s22
      %p240 = scmp.lt.s32.totalorder %s20, 1
      %s241 = scalar_select %p240, %s20, 1
      %p242 = scmp.lt.s32.totalorder %s238, 7
      %s243 = scalar_select %p242, %s238, 7
      %p244 = scmp.lt.s32.totalorder %s239, 2
      %s245 = scalar_select %p244, %s239, 2
      %s246 = smul.addr %s243, 3
      %s247 = sadd.s32 %s245, %s246
      %s248 = smul.addr %s241, 24
      %s249 = sadd.s32 %s247, %s248
      %s250 = smul.addr %s249, 4
      %s251 = scalar_lea.vmem %s0, %s250
      %s252 = smul.u32 8, %s21
      %s253 = smul.u32 3, %s22
      %s254 = smul.u32 48, %s22
      %p255 = scmp.lt.s32.totalorder %s254, 47
      %s256 = scalar_select %p255, %s254, 47
      %s257 = smul.addr %s256, 4
      %s258 = scalar_lea.vmem %s1, %s257
      %s259 = smul.u32 48, %s22
      %s260 = smul.u32 8, %s21
      %p261 = scmp.lt.s32.totalorder %s20, 1
      %s262 = scalar_select %p261, %s20, 1
      %p263 = scmp.lt.s32.totalorder %s260, 7
      %s264 = scalar_select %p263, %s260, 7
      %s265 = smul.addr %s262, 8
      %s266 = sadd.s32 %s264, %s265
      %s267 = smul.addr %s266, 4
      %s268 = scalar_lea.vmem %s2, %s267
      %s269 = smul.u32 8, %s21
      %p270 = scmp.lt.s32.totalorder %s20, 1
      %s271 = scalar_select %p270, %s20, 1
      %p272 = scmp.lt.s32.totalorder %s21, 0
      %s273 = scalar_select %p272, %s21, 0
      %s274 = sadd.s32 %s273, %s271
      %s275 = smul.addr %s274, 8
      %s276 = scalar_lea.vmem %s3, %s275
      %p278 = scmp.eq.s32.totalorder %s22, 0
      // Predicated region
      $region29: #{encoder_forward.20} parent=27 // pred_check
        %p279 = pneg %p278
      $region30: #{encoder_forward.20} parent=27 // pred_check_branch
        %281 = sbr.rel (%p279) target = $region32
      $region31: #{encoder_forward.20} parent=27 // pred_region
        %282 = vst [vmem:[#allocation2] sm:$0xff] 0.0
        %283 = vst [vmem:[#allocation2 + $0x8] sm:$0xff] 0.0
        %284 = vst [vmem:[#allocation2 + $0x10] sm:$0xff] 0.0
        %285 = vst [vmem:[#allocation2 + $0x18] sm:$0xff] 0.0
        %286 = vst [vmem:[#allocation2 + $0x20] sm:$0xff] 0.0
        %287 = vst [vmem:[#allocation2 + $0x28] sm:$0xff] 0.0
        %288 = vst [vmem:[#allocation2 + $0x30] sm:$0xff] 0.0
        %289 = vst [vmem:[#allocation2 + $0x38] sm:$0xff] 0.0
      $region32: #{encoder_forward.20} parent=27 // pred_fallthru
        _
      %v290 = vld [vmem:[#allocation2] sm:$0xff]
      %v291 = vld [vmem:[#allocation2 + $0x8] sm:$0xff]
      %v292 = vld [vmem:[#allocation2 + $0x10] sm:$0xff]
      %v293 = vld [vmem:[#allocation2 + $0x18] sm:$0xff]
      %v294 = vld [vmem:[#allocation2 + $0x20] sm:$0xff]
      %v295 = vld [vmem:[#allocation2 + $0x28] sm:$0xff]
      %v296 = vld [vmem:[#allocation2 + $0x30] sm:$0xff]
      %v297 = vld [vmem:[#allocation2 + $0x38] sm:$0xff]
      %v298 = vld [vmem:[%s251] sm:$0xff]
      %v299 = vld [vmem:[%s251 + $0x8] sm:$0xf]
      %v300 = vld [vmem:[%s251 + $0xc] sm:$0xff]
      %v301 = vld [vmem:[%s251 + $0x14] sm:$0xf]
      %v302 = vld [vmem:[%s251 + $0x18] sm:$0xff]
      %v303 = vld [vmem:[%s251 + $0x20] sm:$0xf]
      %v304 = vld [vmem:[%s251 + $0x24] sm:$0xff]
      %v305 = vld [vmem:[%s251 + $0x2c] sm:$0xf]
      %v306 = vld [vmem:[%s251 + $0x30] sm:$0xff]
      %v307 = vld [vmem:[%s251 + $0x38] sm:$0xf]
      %v308 = vld [vmem:[%s251 + $0x3c] sm:$0xff]
      %v309 = vld [vmem:[%s251 + $0x44] sm:$0xf]
      %v310 = vld [vmem:[%s251 + $0x48] sm:$0xff]
      %v311 = vld [vmem:[%s251 + $0x50] sm:$0xf]
      %v312 = vld [vmem:[%s251 + $0x54] sm:$0xff]
      %v313 = vld [vmem:[%s251 + $0x5c] sm:$0xf]
      %v314 = vld [vmem:[%s258] sm:$0xf]
      %v315 = vld [vmem:[%s258 + $0x4] sm:$0xf]
      %v316 = vld [vmem:[%s258 + $0x8] sm:$0xf]
      %v317 = vld [vmem:[%s258 + $0xc] sm:$0xf]
      %v318 = vld [vmem:[%s258 + $0x10] sm:$0xf]
      %v319 = vld [vmem:[%s258 + $0x14] sm:$0xf]
      %v320 = vld [vmem:[%s258 + $0x18] sm:$0xf]
      %v321 = vld [vmem:[%s258 + $0x1c] sm:$0xf]
      %v322 = vld [vmem:[%s258 + $0x20] sm:$0xf]
      %v323 = vld [vmem:[%s258 + $0x24] sm:$0xf]
      %v324 = vld [vmem:[%s258 + $0x28] sm:$0xf]
      %v325 = vld [vmem:[%s258 + $0x2c] sm:$0xf]
      %v326 = vld [vmem:[%s258 + $0x30] sm:$0xf]
      %v327 = vld [vmem:[%s258 + $0x34] sm:$0xf]
      %v328 = vld [vmem:[%s258 + $0x38] sm:$0xf]
      %v329 = vld [vmem:[%s258 + $0x3c] sm:$0xf]
      %v330 = vld [vmem:[%s258 + $0x40] sm:$0xf]
      %v331 = vld [vmem:[%s258 + $0x44] sm:$0xf]
      %v332 = vld [vmem:[%s258 + $0x48] sm:$0xf]
      %v333 = vld [vmem:[%s258 + $0x4c] sm:$0xf]
      %v334 = vld [vmem:[%s258 + $0x50] sm:$0xf]
      %v335 = vld [vmem:[%s258 + $0x54] sm:$0xf]
      %v336 = vld [vmem:[%s258 + $0x58] sm:$0xf]
      %v337 = vld [vmem:[%s258 + $0x5c] sm:$0xf]
      %v338 = vld [vmem:[%s258 + $0x60] sm:$0xf]
      %v339 = vld [vmem:[%s258 + $0x64] sm:$0xf]
      %v340 = vld [vmem:[%s258 + $0x68] sm:$0xf]
      %v341 = vld [vmem:[%s258 + $0x6c] sm:$0xf]
      %v342 = vld [vmem:[%s258 + $0x70] sm:$0xf]
      %v343 = vld [vmem:[%s258 + $0x74] sm:$0xf]
      %v344 = vld [vmem:[%s258 + $0x78] sm:$0xf]
      %v345 = vld [vmem:[%s258 + $0x7c] sm:$0xf]
      %v346 = vld [vmem:[%s258 + $0x80] sm:$0xf]
      %v347 = vld [vmem:[%s258 + $0x84] sm:$0xf]
      %v348 = vld [vmem:[%s258 + $0x88] sm:$0xf]
      %v349 = vld [vmem:[%s258 + $0x8c] sm:$0xf]
      %v350 = vld [vmem:[%s258 + $0x90] sm:$0xf]
      %v351 = vld [vmem:[%s258 + $0x94] sm:$0xf]
      %v352 = vld [vmem:[%s258 + $0x98] sm:$0xf]
      %v353 = vld [vmem:[%s258 + $0x9c] sm:$0xf]
      %v354 = vld [vmem:[%s258 + $0xa0] sm:$0xf]
      %v355 = vld [vmem:[%s258 + $0xa4] sm:$0xf]
      %v356 = vld [vmem:[%s258 + $0xa8] sm:$0xf]
      %v357 = vld [vmem:[%s258 + $0xac] sm:$0xf]
      %v358 = vld [vmem:[%s258 + $0xb0] sm:$0xf]
      %v359 = vld [vmem:[%s258 + $0xb4] sm:$0xf]
      %v360 = vld [vmem:[%s258 + $0xb8] sm:$0xf]
      %v361 = vld [vmem:[%s258 + $0xbc] sm:$0xf]
      %v378 = vunpack.c.l.b16 %v298
      %v379 = vunpack.c.h.b16 %v298
      %v380 = vunpack.c.l.b16 %v299
      %v381 = vunpack.c.l.b16 %v300
      %v382 = vunpack.c.h.b16 %v300
      %v383 = vunpack.c.l.b16 %v301
      %v384 = vunpack.c.l.b16 %v302
      %v385 = vunpack.c.h.b16 %v302
      %v386 = vunpack.c.l.b16 %v303
      %v387 = vunpack.c.l.b16 %v304
      %v388 = vunpack.c.h.b16 %v304
      %v389 = vunpack.c.l.b16 %v305
      %v390 = vunpack.c.l.b16 %v306
      %v391 = vunpack.c.h.b16 %v306
      %v392 = vunpack.c.l.b16 %v307
      %v393 = vunpack.c.l.b16 %v308
      %v394 = vunpack.c.h.b16 %v308
      %v395 = vunpack.c.l.b16 %v309
      %v396 = vunpack.c.l.b16 %v310
      %v397 = vunpack.c.h.b16 %v310
      %v398 = vunpack.c.l.b16 %v311
      %v399 = vunpack.c.l.b16 %v312
      %v400 = vunpack.c.h.b16 %v312
      %v401 = vunpack.c.l.b16 %v313
      %v402 = vpack.c.b16 %v381, %v378
      %v403 = vpack.c.b16 %v382, %v379
      %v404 = vpack.c.b16 %v383, %v380
      %v405 = vpack.c.b16 %v387, %v384
      %v406 = vpack.c.b16 %v388, %v385
      %v407 = vpack.c.b16 %v389, %v386
      %v408 = vpack.c.b16 %v393, %v390
      %v409 = vpack.c.b16 %v394, %v391
      %v410 = vpack.c.b16 %v395, %v392
      %v411 = vpack.c.b16 %v399, %v396
      %v412 = vpack.c.b16 %v400, %v397
      %v413 = vpack.c.b16 %v401, %v398
      %v474 = vunpack.c.l.b16 %v314
      %v475 = vunpack.c.l.b16 %v315
      %v476 = vunpack.c.l.b16 %v316
      %v477 = vunpack.c.l.b16 %v317
      %v478 = vunpack.c.l.b16 %v318
      %v479 = vunpack.c.l.b16 %v319
      %v480 = vunpack.c.l.b16 %v320
      %v481 = vunpack.c.l.b16 %v321
      %v482 = vunpack.c.l.b16 %v322
      %v483 = vunpack.c.l.b16 %v323
      %v484 = vunpack.c.l.b16 %v324
      %v485 = vunpack.c.l.b16 %v325
      %v486 = vunpack.c.l.b16 %v326
      %v487 = vunpack.c.l.b16 %v327
      %v488 = vunpack.c.l.b16 %v328
      %v489 = vunpack.c.l.b16 %v329
      %v490 = vunpack.c.l.b16 %v330
      %v491 = vunpack.c.l.b16 %v331
      %v492 = vunpack.c.l.b16 %v332
      %v493 = vunpack.c.l.b16 %v333
      %v494 = vunpack.c.l.b16 %v334
      %v495 = vunpack.c.l.b16 %v335
      %v496 = vunpack.c.l.b16 %v336
      %v497 = vunpack.c.l.b16 %v337
      %v498 = vunpack.c.l.b16 %v338
      %v499 = vunpack.c.l.b16 %v339
      %v500 = vunpack.c.l.b16 %v340
      %v501 = vunpack.c.l.b16 %v341
      %v502 = vunpack.c.l.b16 %v342
      %v503 = vunpack.c.l.b16 %v343
      %v504 = vunpack.c.l.b16 %v344
      %v505 = vunpack.c.l.b16 %v345
      %v506 = vunpack.c.l.b16 %v346
      %v507 = vunpack.c.l.b16 %v347
      %v508 = vunpack.c.l.b16 %v348
      %v509 = vunpack.c.l.b16 %v349
      %v510 = vunpack.c.l.b16 %v350
      %v511 = vunpack.c.l.b16 %v351
      %v512 = vunpack.c.l.b16 %v352
      %v513 = vunpack.c.l.b16 %v353
      %v514 = vunpack.c.l.b16 %v354
      %v515 = vunpack.c.l.b16 %v355
      %v516 = vunpack.c.l.b16 %v356
      %v517 = vunpack.c.l.b16 %v357
      %v518 = vunpack.c.l.b16 %v358
      %v519 = vunpack.c.l.b16 %v359
      %v520 = vunpack.c.l.b16 %v360
      %v521 = vunpack.c.l.b16 %v361
      %v522 = vpack.c.b16 %v475, %v474
      %v523 = vpack.c.b16 %v477, %v476
      %v524 = vpack.c.b16 %v479, %v478
      %v525 = vpack.c.b16 %v481, %v480
      %v526 = vpack.c.b16 %v483, %v482
      %v527 = vpack.c.b16 %v485, %v484
      %v528 = vpack.c.b16 %v487, %v486
      %v529 = vpack.c.b16 %v489, %v488
      %v530 = vpack.c.b16 %v491, %v490
      %v531 = vpack.c.b16 %v493, %v492
      %v532 = vpack.c.b16 %v495, %v494
      %v533 = vpack.c.b16 %v497, %v496
      %v534 = vpack.c.b16 %v499, %v498
      %v535 = vpack.c.b16 %v501, %v500
      %v536 = vpack.c.b16 %v503, %v502
      %v537 = vpack.c.b16 %v505, %v504
      %v538 = vpack.c.b16 %v507, %v506
      %v539 = vpack.c.b16 %v509, %v508
      %v540 = vpack.c.b16 %v511, %v510
      %v541 = vpack.c.b16 %v513, %v512
      %v542 = vpack.c.b16 %v515, %v514
      %v543 = vpack.c.b16 %v517, %v516
      %v544 = vpack.c.b16 %v519, %v518
      %v545 = vpack.c.b16 %v521, %v520
      %570 = vmatprep.subr.bf16.mxu0 0
      %571 = vmatpush1.bf16.msra.mxu0 %v522
      %572 = vmatprep.subr.bf16.mxu0 0
      %573 = vmatpush1.bf16.msra.mxu0 %v523
      %574 = vmatprep.subr.bf16.mxu0 0
      %575 = vmatpush1.bf16.msra.mxu0 %v524
      %576 = vmatprep.subr.bf16.mxu0 0
      %577 = vmatpush1.bf16.msra.mxu0 %v525
      %578 = vmatprep.subr.bf16.mxu0 0
      %579 = vmatpush1.bf16.msra.mxu0 %v526
      %580 = vmatprep.subr.bf16.mxu0 0
      %581 = vmatpush1.bf16.msra.mxu0 %v527
      %582 = vmatprep.subr.bf16.mxu0 0
      %583 = vmatpush1.bf16.msra.mxu0 %v528
      %584 = vmatprep.subr.bf16.mxu0 0
      %585 = vmatpush1.bf16.msra.mxu0 %v529
      %586 = vmatprep.subr.bf16.mxu0 0
      %587 = vmatpush1.bf16.msra.mxu0 %v530
      %588 = vmatprep.subr.bf16.mxu0 0
      %589 = vmatpush1.bf16.msra.mxu0 %v531
      %590 = vmatprep.subr.bf16.mxu0 0
      %591 = vmatpush1.bf16.msra.mxu0 %v532
      %592 = vmatprep.subr.bf16.mxu0 0
      %593 = vmatpush1.bf16.msra.mxu0 %v533
      %594 = vmatprep.subr.bf16.mxu0 0
      %595 = vmatpush1.bf16.msra.mxu0 %v534
      %596 = vmatprep.subr.bf16.mxu0 0
      %597 = vmatpush1.bf16.msra.mxu0 %v535
      %598 = vmatprep.subr.bf16.mxu0 0
      %599 = vmatpush1.bf16.msra.mxu0 %v536
      %600 = vmatprep.subr.bf16.mxu0 0
      %601 = vmatpush1.bf16.msra.mxu0 %v537
      %602 = vmatprep.mubr.bf16.mxu0 %v403
      %603 = vmatmul.mubr.bf16.gmra.mrb[0].mxu0 %v402
      %v604 = vpop.f32.mrb[0].mxu0
      %v605 = vadd.f32 0.0, %v604
      %v606 = vpop.f32.mrb[0].mxu0
      %v607 = vpop.f32.mrb[0].mxu0
      %v608 = vadd.f32 0.0, %v607
      %v609 = vpop.f32.mrb[0].mxu0
      %610 = vmatprep.mubr.bf16.mxu0 %v406
      %611 = vmatmul.mubr.bf16.gmra.mrb[0].mxu0 %v405
      %v612 = vpop.f32.mrb[0].mxu0
      %v613 = vadd.f32 0.0, %v612
      %v614 = vpop.f32.mrb[0].mxu0
      %v615 = vpop.f32.mrb[0].mxu0
      %v616 = vadd.f32 0.0, %v615
      %v617 = vpop.f32.mrb[0].mxu0
      %618 = vmatprep.mubr.bf16.mxu0 %v409
      %619 = vmatmul.mubr.bf16.gmra.mrb[0].mxu0 %v408
      %v620 = vpop.f32.mrb[0].mxu0
      %v621 = vadd.f32 0.0, %v620
      %v622 = vpop.f32.mrb[0].mxu0
      %v623 = vpop.f32.mrb[0].mxu0
      %v624 = vadd.f32 0.0, %v623
      %v625 = vpop.f32.mrb[0].mxu0
      %626 = vmatprep.mubr.bf16.mxu0 %v412
      %627 = vmatmul.mubr.bf16.gmra.mrb[0].mxu0 %v411
      %v628 = vpop.f32.mrb[0].mxu0
      %v629 = vadd.f32 0.0, %v628
      %v630 = vpop.f32.mrb[0].mxu0
      %v631 = vpop.f32.mrb[0].mxu0
      %v632 = vadd.f32 0.0, %v631
      %v633 = vpop.f32.mrb[0].mxu0
      %634 = vdwg.mxu0
      %635 = vmatprep.subr.bf16.mxu0 0
      %636 = vmatpush1.bf16.msra.mxu0 %v538
      %637 = vmatprep.subr.bf16.mxu0 0
      %638 = vmatpush1.bf16.msra.mxu0 %v539
      %639 = vmatprep.subr.bf16.mxu0 0
      %640 = vmatpush1.bf16.msra.mxu0 %v540
      %641 = vmatprep.subr.bf16.mxu0 0
      %642 = vmatpush1.bf16.msra.mxu0 %v541
      %643 = vmatprep.subr.bf16.mxu0 0
      %644 = vmatpush1.bf16.msra.mxu0 %v542
      %645 = vmatprep.subr.bf16.mxu0 0
      %646 = vmatpush1.bf16.msra.mxu0 %v543
      %647 = vmatprep.subr.bf16.mxu0 0
      %648 = vmatpush1.bf16.msra.mxu0 %v544
      %649 = vmatprep.subr.bf16.mxu0 0
      %650 = vmatpush1.bf16.msra.mxu0 %v545
      %651 = vmatprep.subr.bf16.mxu0 0
      %652 = vmatpush1.bf16.msra.mxu0 0
      %653 = vmatprep.subr.bf16.mxu0 0
      %654 = vmatpush1.bf16.msra.mxu0 0
      %655 = vmatprep.subr.bf16.mxu0 0
      %656 = vmatpush1.bf16.msra.mxu0 0
      %657 = vmatprep.subr.bf16.mxu0 0
      %658 = vmatpush1.bf16.msra.mxu0 0
      %659 = vmatprep.subr.bf16.mxu0 0
      %660 = vmatpush1.bf16.msra.mxu0 0
      %661 = vmatprep.subr.bf16.mxu0 0
      %662 = vmatpush1.bf16.msra.mxu0 0
      %663 = vmatprep.subr.bf16.mxu0 0
      %664 = vmatpush1.bf16.msra.mxu0 0
      %665 = vmatprep.subr.bf16.mxu0 0
      %666 = vmatpush1.bf16.msra.mxu0 0
      %667 = vmatprep.mubr.bf16.mxu0 0
      %668 = vmatmul.mubr.bf16.gmra.mrb[0].mxu0 %v404
      %v669 = vpop.f32.mrb[0].mxu0
      %v670 = vadd.f32 %v605, %v669
      %v671 = vpop.f32.mrb[0].mxu0
      %v672 = vpop.f32.mrb[0].mxu0
      %v673 = vadd.f32 %v608, %v672
      %v674 = vpop.f32.mrb[0].mxu0
      %675 = vmatprep.mubr.bf16.mxu0 0
      %676 = vmatmul.mubr.bf16.gmra.mrb[0].mxu0 %v407
      %v677 = vpop.f32.mrb[0].mxu0
      %v678 = vadd.f32 %v613, %v677
      %v679 = vpop.f32.mrb[0].mxu0
      %v680 = vpop.f32.mrb[0].mxu0
      %v681 = vadd.f32 %v616, %v680
      %v682 = vpop.f32.mrb[0].mxu0
      %683 = vmatprep.mubr.bf16.mxu0 0
      %684 = vmatmul.mubr.bf16.gmra.mrb[0].mxu0 %v410
      %v685 = vpop.f32.mrb[0].mxu0
      %v686 = vadd.f32 %v621, %v685
      %v687 = vpop.f32.mrb[0].mxu0
      %v688 = vpop.f32.mrb[0].mxu0
      %v689 = vadd.f32 %v624, %v688
      %v690 = vpop.f32.mrb[0].mxu0
      %691 = vmatprep.mubr.bf16.mxu0 0
      %692 = vmatmul.mubr.bf16.gmra.mrb[0].mxu0 %v413
      %v693 = vpop.f32.mrb[0].mxu0
      %v694 = vadd.f32 %v629, %v693
      %v695 = vpop.f32.mrb[0].mxu0
      %v696 = vpop.f32.mrb[0].mxu0
      %v697 = vadd.f32 %v632, %v696
      %v698 = vpop.f32.mrb[0].mxu0
      %699 = vdwg.mxu0
      %v700 = vadd.f32 %v290, %v670
      %v701 = vadd.f32 %v291, %v673
      %v702 = vadd.f32 %v292, %v678
      %v703 = vadd.f32 %v293, %v681
      %v704 = vadd.f32 %v294, %v686
      %v705 = vadd.f32 %v295, %v689
      %v706 = vadd.f32 %v296, %v694
      %v707 = vadd.f32 %v297, %v697
      %708 = vst [vmem:[#allocation2] sm:$0xff] %v700
      %709 = vst [vmem:[#allocation2 + $0x8] sm:$0xff] %v701
      %710 = vst [vmem:[#allocation2 + $0x10] sm:$0xff] %v702
      %711 = vst [vmem:[#allocation2 + $0x18] sm:$0xff] %v703
      %712 = vst [vmem:[#allocation2 + $0x20] sm:$0xff] %v704
      %713 = vst [vmem:[#allocation2 + $0x28] sm:$0xff] %v705
      %714 = vst [vmem:[#allocation2 + $0x30] sm:$0xff] %v706
      %715 = vst [vmem:[#allocation2 + $0x38] sm:$0xff] %v707
      // Predicated region
      $region33: #{encoder_forward.20} parent=27 // pred_check
        %p716 = pneg %p278
      $region34: #{encoder_forward.20} parent=27 // pred_check_branch
        %718 = sbr.rel (%p716) target = $region36
      $region35: #{encoder_forward.20} parent=27 // pred_region
        %v719 = vld [vmem:[#allocation2] sm:$0xff]
        %v720 = vld [vmem:[#allocation2 + $0x8] sm:$0xff]
        %v721 = vld [vmem:[#allocation2 + $0x10] sm:$0xff]
        %v722 = vld [vmem:[#allocation2 + $0x18] sm:$0xff]
        %v723 = vld [vmem:[#allocation2 + $0x20] sm:$0xff]
        %v724 = vld [vmem:[#allocation2 + $0x28] sm:$0xff]
        %v725 = vld [vmem:[#allocation2 + $0x30] sm:$0xff]
        %v726 = vld [vmem:[#allocation2 + $0x38] sm:$0xff]
        %v727 = vadd.f32 %v719, %v720
        %v728 = vadd.f32 %v727, %v721
        %v729 = vadd.f32 %v728, %v722
        %v730 = vadd.f32 %v729, %v723
        %v731 = vadd.f32 %v730, %v724
        %v732 = vadd.f32 %v731, %v725
        %v733 = vadd.f32 %v732, %v726
        %v734 = vrot.slane %v733, 4
        %v735 = vadd.f32 %v733, %v734
        %v736 = vrot.slane %v735, 2
        %v737 = vadd.f32 %v735, %v736
        %v738 = vrot.slane %v737, 1
        %v739 = vadd.f32 %v737, %v738
        %v740 = vmul.f32 %v719, %v719
        %v741 = vmul.f32 %v720, %v720
        %v742 = vmul.f32 %v721, %v721
        %v743 = vmul.f32 %v722, %v722
        %v744 = vmul.f32 %v723, %v723
        %v745 = vmul.f32 %v724, %v724
        %v746 = vmul.f32 %v725, %v725
        %v747 = vmul.f32 %v726, %v726
        %v748 = vadd.f32 %v740, %v741
        %v749 = vadd.f32 %v748, %v742
        %v750 = vadd.f32 %v749, %v743
        %v751 = vadd.f32 %v750, %v744
        %v752 = vadd.f32 %v751, %v745
        %v753 = vadd.f32 %v752, %v746
        %v754 = vadd.f32 %v753, %v747
        %v755 = vrot.slane %v754, 4
        %v756 = vadd.f32 %v754, %v755
        %v757 = vrot.slane %v756, 2
        %v758 = vadd.f32 %v756, %v757
        %v759 = vrot.slane %v758, 1
        %v760 = vadd.f32 %v758, %v759
        %v761 = vlaneseq
        %v762 = vshrl.u32 %v761, 7
        %vm763 = vcmp.eq.s32.totalorder %v762, 0
        %vm764 = vcmp.eq.s32.totalorder %v762, 1
        %v765 = vsel %vm764, %v760, 0.0
        %v766 = vsel %vm763, %v739, %v765
        %767 = vst [vmem:[%s276] sm:$0xff] %v766
        %v768 = vpack.c.bf16 %v720, %v719
        %v769 = vpack.c.bf16 %v722, %v721
        %v770 = vpack.c.bf16 %v724, %v723
        %v771 = vpack.c.bf16 %v726, %v725
        %v776 = vunpack.c.l.b16 %v768
        %v777 = vunpack.c.h.b16 %v768
        %v778 = vunpack.c.l.b16 %v769
        %v779 = vunpack.c.h.b16 %v769
        %v780 = vunpack.c.l.b16 %v770
        %v781 = vunpack.c.h.b16 %v770
        %v782 = vunpack.c.l.b16 %v771
        %v783 = vunpack.c.h.b16 %v771
        %v784 = vpack.c.b16 %v776, %v776
        %v785 = vpack.c.b16 %v777, %v777
        %v786 = vpack.c.b16 %v778, %v778
        %v787 = vpack.c.b16 %v779, %v779
        %v788 = vpack.c.b16 %v780, %v780
        %v789 = vpack.c.b16 %v781, %v781
        %v790 = vpack.c.b16 %v782, %v782
        %v791 = vpack.c.b16 %v783, %v783
        %800 = vst [vmem:[%s268] sm:$0xf] %v784
        %801 = vst [vmem:[%s268 + $0x4] sm:$0xf] %v785
        %802 = vst [vmem:[%s268 + $0x8] sm:$0xf] %v786
        %803 = vst [vmem:[%s268 + $0xc] sm:$0xf] %v787
        %804 = vst [vmem:[%s268 + $0x10] sm:$0xf] %v788
        %805 = vst [vmem:[%s268 + $0x14] sm:$0xf] %v789
        %806 = vst [vmem:[%s268 + $0x18] sm:$0xf] %v790
        %807 = vst [vmem:[%s268 + $0x1c] sm:$0xf] %v791
      $region36: #{encoder_forward.20} parent=27 // pred_fallthru
        _
      %s808 = smul.u32 8, %s21
      %p809 = scmp.lt.s32.totalorder %s20, 1
      %s810 = scalar_select %p809, %s20, 1
      %p811 = scmp.lt.s32.totalorder %s808, 7
      %s812 = scalar_select %p811, %s808, 7
      %s813 = smul.addr %s810, 8
      %s814 = sadd.s32 %s812, %s813
      %s815 = smul.addr %s814, 4
      %s816 = scalar_lea.vmem %s2, %s815
      %p817 = scmp.lt.s32.totalorder %s20, 1
      %s818 = scalar_select %p817, %s20, 1
      %p819 = scmp.lt.s32.totalorder %s21, 0
      %s820 = scalar_select %p819, %s21, 0
      %s821 = sadd.s32 %s820, %s818
      %s822 = smul.addr %s821, 8
      %s823 = scalar_lea.vmem %s3, %s822
      // Predicated region
      $region37: #{encoder_forward.20} parent=27 // pred_check
        %p824 = pneg %p110
      $region38: #{encoder_forward.20} parent=27 // pred_check_branch
        %826 = sbr.rel (%p824) target = $region40
      $region39: #{encoder_forward.20} parent=27 // pred_region
        %s827 = smul.u32 8, %s21
      $region40: #{encoder_forward.20} parent=27 // pred_fallthru
        _
      // Predicated region
      $region41: #{encoder_forward.20} parent=27 // pred_check
        %p828 = pneg %p138
      $region42: #{encoder_forward.20} parent=27 // pred_check_branch
        %830 = sbr.rel (%p828) target = $region44
      $region43: #{encoder_forward.20} parent=27 // pred_region
        _
      $region44: #{encoder_forward.20} parent=27 // pred_fallthru
        _
    $region28: #{encoder_forward.20} parent=5 // pred_fallthru
      _
    %p831 = scmp.le.s32.totalorder 2, %s10
    // Predicated region
    $region45: #{encoder_forward.20} parent=5 // pred_check
      %p832 = pneg %p831
    $region46: #{encoder_forward.20} parent=5 // pred_check_branch
      %834 = sbr.rel (%p832) target = $region48
    $region47: #{encoder_forward.20} parent=5 // pred_region
      %s835 = ssub.s32 %s10, 2
      // Predicated region
      $region49: #{encoder_forward.20} parent=47 // pred_check
        %p836 = pneg %p116
      $region50: #{encoder_forward.20} parent=47 // pred_check_branch
        %838 = sbr.rel (%p836) target = $region52
      $region51: #{encoder_forward.20} parent=47 // pred_region
        %s839 = smul.u32 8, %s24
        %p840 = scmp.lt.s32.totalorder %s23, 1
        %s841 = scalar_select %p840, %s23, 1
        %p842 = scmp.lt.s32.totalorder %s839, 7
        %s843 = scalar_select %p842, %s839, 7
        %s844 = smul.addr %s841, 8
        %s845 = sadd.s32 %s843, %s844
        %s846 = smul.addr %s845, 4
        %s847 = scalar_lea.vmem %s2, %s846
      $region52: #{encoder_forward.20} parent=47 // pred_fallthru
        _
      // Predicated region
      $region53: #{encoder_forward.20} parent=47 // pred_check
        %p848 = pneg %p144
      $region54: #{encoder_forward.20} parent=47 // pred_check_branch
        %850 = sbr.rel (%p848) target = $region56
      $region55: #{encoder_forward.20} parent=47 // pred_region
        %p851 = scmp.lt.s32.totalorder %s23, 1
        %s852 = scalar_select %p851, %s23, 1
        %p853 = scmp.lt.s32.totalorder %s24, 0
        %s854 = scalar_select %p853, %s24, 0
        %s855 = sadd.s32 %s854, %s852
        %s856 = smul.addr %s855, 8
        %s857 = scalar_lea.vmem %s3, %s856
      $region56: #{encoder_forward.20} parent=47 // pred_fallthru
        _
    $region48: #{encoder_forward.20} parent=5 // pred_fallthru
      _
  $region6: #{encoder_forward.20} parent=0 // loop_footer
    %s14 = sadd.s32 1, %s10
  $region7: #{encoder_forward.20} parent=0 // loop_footer_branch
    %9 = sbr.rel target = $region3
  $region8: #{encoder_forward.20} parent=0 // loop_exit
    _

// kernel: encoder_forward.21
$region0: #{encoder_forward.21}
  #allocation0 [shape = 'u32[]', space=smem, size = 0x4, offset = 0x4, fixed_abs, tag = 'smem constant byte address 0x4 - core index']
  #allocation1 [shape = 'u32[144,128]{1,0:T(1,128)}', space=vmem, size = 0x12000, scoped, tag = 'internal scratch']
  %s0 = inlined_call_operand.vmem [shape: bf16[2,64,128], index: 0, kind: input, shape index: {}]
  %s1 = inlined_call_operand.vmem [shape: f32[2,1,128], index: 1, kind: input, shape index: {}]
  %s2 = inlined_call_operand.vmem [shape: f32[2,1,128], index: 2, kind: input, shape index: {}]
  %s3 = inlined_call_operand.vmem [shape: bf16[2,64,128], index: 3, kind: output, shape index: {}]
  %s4 = sld [smem:[#allocation0]]
  $region45: #{encoder_forward.21} parent=0
    _
  %s6 = ssub.s32 1, %s4
  %s7 = scalar_select 0, %s6, %s4
  loop: start=0, step=1, limit=4
  $region2: #{encoder_forward.21} parent=0 // loop_pre_header
    _
  $region3: #{encoder_forward.21} parent=0 // loop_header
    %s9 = sphi 0, %s13
    %p10 = scmp.ge.s32.totalorder %s9, 4
    %s16 = sphi 0, %s28
    %s17 = sphi 0, %s24
    %s18 = sphi 0, %s16
    %s19 = sphi 0, %s17
    %s20 = sphi 0, %s18
    %s21 = sphi 0, %s19
    %s33 = sphi 0, %s35
    %s36 = sphi 0, %s33
    %s37 = sphi 0, %s36
    %s53 = sphi 0, %s37
    %s59 = sphi 0, %s61
    %s62 = sphi 0, %s59
    %s63 = sphi 0, %s62
    %s79 = sphi 0, %s63
    %s85 = sphi 0, %s87
    %s88 = sphi 0, %s85
    %s89 = sphi 0, %s88
    %s105 = sphi 0, %s89
    %s113 = sphi 0, %s115
    %s116 = sphi 0, %s113
    %s117 = sphi 0, %s116
    %s133 = sphi 0, %s117
  $region4: #{encoder_forward.21} parent=0 // loop_header_branch
    %12 = sbr.rel (%p10) target = $region8
  $region5: #{encoder_forward.21} parent=0 // loop_body
    %s14 = ssub.s32 %s9, 1
    %s15 = ssub.s32 %s9, 2
    %s22 = sadd.s32 1, %s17
    %p23 = scmp.ge.s32.totalorder %s22, 1
    %s24 = scalar_select %p23, 0, %s22
    %s25 = sadd.s32 1, %s16
    %s26 = scalar_select %p23, %s25, %s16
    %p27 = scmp.ge.s32.totalorder %s26, 2
    %s28 = scalar_select %p27, 0, %s26
    %s29 = ssub.s32 %s16, %s28
    %s30 = ssub.s32 %s17, %s24
    %s31 = sor.u32 %s29, %s30
    %p32 = scmp.eq.s32.totalorder %s31, 0
    %s34 = sadd.s32 %s33, 1
    %s35 = scalar_select %p32, %s33, %s34
    %p38 = pneg %p32
    %p39 = scmp.eq.s32.totalorder %s9, 1
    %p40 = por %p38, %p39
    %p41 = scmp.ne.s32.totalorder %s33, %s36
    %p42 = scmp.eq.s32.totalorder %s9, 0
    %p43 = por %p41, %p42
    %p44 = scmp.ne.s32.totalorder %s33, %s36
    %p45 = scmp.eq.s32.totalorder %s14, 1
    %p46 = por %p44, %p45
    %p47 = scmp.ne.s32.totalorder %s36, %s37
    %p48 = scmp.eq.s32.totalorder %s14, 0
    %p49 = por %p47, %p48
    %p50 = scmp.ne.s32.totalorder %s36, %s37
    %p51 = scmp.eq.s32.totalorder %s15, 1
    %p52 = por %p50, %p51
    %p54 = scmp.ne.s32.totalorder %s37, %s53
    %p55 = scmp.eq.s32.totalorder %s15, 0
    %p56 = por %p54, %p55
    %s57 = ssub.s32 %s16, %s28
    %p58 = scmp.eq.s32.totalorder %s57, 0
    %s60 = sadd.s32 %s59, 1
    %s61 = scalar_select %p58, %s59, %s60
    %p64 = pneg %p58
    %p65 = scmp.eq.s32.totalorder %s9, 1
    %p66 = por %p64, %p65
    %p67 = scmp.ne.s32.totalorder %s59, %s62
    %p68 = scmp.eq.s32.totalorder %s9, 0
    %p69 = por %p67, %p68
    %p70 = scmp.ne.s32.totalorder %s59, %s62
    %p71 = scmp.eq.s32.totalorder %s14, 1
    %p72 = por %p70, %p71
    %p73 = scmp.ne.s32.totalorder %s62, %s63
    %p74 = scmp.eq.s32.totalorder %s14, 0
    %p75 = por %p73, %p74
    %p76 = scmp.ne.s32.totalorder %s62, %s63
    %p77 = scmp.eq.s32.totalorder %s15, 1
    %p78 = por %p76, %p77
    %p80 = scmp.ne.s32.totalorder %s63, %s79
    %p81 = scmp.eq.s32.totalorder %s15, 0
    %p82 = por %p80, %p81
    %s83 = ssub.s32 %s16, %s28
    %p84 = scmp.eq.s32.totalorder %s83, 0
    %s86 = sadd.s32 %s85, 1
    %s87 = scalar_select %p84, %s85, %s86
    %p90 = pneg %p84
    %p91 = scmp.eq.s32.totalorder %s9, 1
    %p92 = por %p90, %p91
    %p93 = scmp.ne.s32.totalorder %s85, %s88
    %p94 = scmp.eq.s32.totalorder %s9, 0
    %p95 = por %p93, %p94
    %p96 = scmp.ne.s32.totalorder %s85, %s88
    %p97 = scmp.eq.s32.totalorder %s14, 1
    %p98 = por %p96, %p97
    %p99 = scmp.ne.s32.totalorder %s88, %s89
    %p100 = scmp.eq.s32.totalorder %s14, 0
    %p101 = por %p99, %p100
    %p102 = scmp.ne.s32.totalorder %s88, %s89
    %p103 = scmp.eq.s32.totalorder %s15, 1
    %p104 = por %p102, %p103
    %p106 = scmp.ne.s32.totalorder %s89, %s105
    %p107 = scmp.eq.s32.totalorder %s15, 0
    %p108 = por %p106, %p107
    %s109 = ssub.s32 %s16, %s28
    %s110 = ssub.s32 %s17, %s24
    %s111 = sor.u32 %s109, %s110
    %p112 = scmp.eq.s32.totalorder %s111, 0
    %s114 = sadd.s32 %s113, 1
    %s115 = scalar_select %p112, %s113, %s114
    %p118 = pneg %p112
    %p119 = scmp.eq.s32.totalorder %s9, 1
    %p120 = por %p118, %p119
    %p121 = scmp.ne.s32.totalorder %s113, %s116
    %p122 = scmp.eq.s32.totalorder %s9, 0
    %p123 = por %p121, %p122
    %p124 = scmp.ne.s32.totalorder %s113, %s116
    %p125 = scmp.eq.s32.totalorder %s14, 1
    %p126 = por %p124, %p125
    %p127 = scmp.ne.s32.totalorder %s116, %s117
    %p128 = scmp.eq.s32.totalorder %s14, 0
    %p129 = por %p127, %p128
    %p130 = scmp.ne.s32.totalorder %s116, %s117
    %p131 = scmp.eq.s32.totalorder %s15, 1
    %p132 = por %p130, %p131
    %p134 = scmp.ne.s32.totalorder %s117, %s133
    %p135 = scmp.eq.s32.totalorder %s15, 0
    %p136 = por %p134, %p135
    %p137 = scmp.le.s32.totalorder 1, %s9
    %p138 = scmp.lt.s32.totalorder %s9, 3
    %p139 = pnand %p137, %p138
    %p140 = pneg %p139
    // Predicated region
    $region9: #{encoder_forward.21} parent=5 // pred_check
      _
    $region10: #{encoder_forward.21} parent=5 // pred_check_branch
      %142 = sbr.rel (%p139) target = $region12
    $region11: #{encoder_forward.21} parent=5 // pred_region
      %s143 = ssub.s32 %s9, 1
    $region12: #{encoder_forward.21} parent=5 // pred_fallthru
      _
    %p144 = scmp.lt.s32.totalorder %s9, 2
    // Predicated region
    $region13: #{encoder_forward.21} parent=5 // pred_check
      %p145 = pneg %p144
    $region14: #{encoder_forward.21} parent=5 // pred_check_branch
      %147 = sbr.rel (%p145) target = $region16
    $region15: #{encoder_forward.21} parent=5 // pred_region
      // Predicated region
      $region17: #{encoder_forward.21} parent=15 // pred_check
        %p148 = pneg %p43
      $region18: #{encoder_forward.21} parent=15 // pred_check_branch
        %150 = sbr.rel (%p148) target = $region20
      $region19: #{encoder_forward.21} parent=15 // pred_region
        %s151 = smul.u32 8, %s17
        %p152 = scmp.lt.s32.totalorder %s16, 1
        %s153 = scalar_select %p152, %s16, 1
        %p154 = scmp.lt.s32.totalorder %s151, 7
        %s155 = scalar_select %p154, %s151, 7
        %s156 = smul.addr %s153, 8
        %s157 = sadd.s32 %s155, %s156
        %s158 = smul.addr %s157, 4
        %s159 = scalar_lea.vmem %s0, %s158
        %s160 = smul.u32 8, %s17
      $region20: #{encoder_forward.21} parent=15 // pred_fallthru
        _
      // Predicated region
      $region21: #{encoder_forward.21} parent=15 // pred_check
        %p161 = pneg %p69
      $region22: #{encoder_forward.21} parent=15 // pred_check_branch
        %163 = sbr.rel (%p161) target = $region24
      $region23: #{encoder_forward.21} parent=15 // pred_region
        %p164 = scmp.lt.s32.totalorder %s16, 1
        %s165 = scalar_select %p164, %s16, 1
        %s166 = scalar_lea.vmem %s1, %s165
      $region24: #{encoder_forward.21} parent=15 // pred_fallthru
        _
      // Predicated region
      $region25: #{encoder_forward.21} parent=15 // pred_check
        %p167 = pneg %p95
      $region26: #{encoder_forward.21} parent=15 // pred_check_branch
        %169 = sbr.rel (%p167) target = $region28
      $region27: #{encoder_forward.21} parent=15 // pred_region
        %p170 = scmp.lt.s32.totalorder %s16, 1
        %s171 = scalar_select %p170, %s16, 1
        %s172 = scalar_lea.vmem %s2, %s171
      $region28: #{encoder_forward.21} parent=15 // pred_fallthru
        _
    $region16: #{encoder_forward.21} parent=5 // pred_fallthru
      _
    %p173 = scmp.le.s32.totalorder 1, %s9
    %p174 = scmp.lt.s32.totalorder %s9, 3
    %p175 = pnand %p173, %p174
    %p176 = pneg %p175
    // Predicated region
    $region29: #{encoder_forward.21} parent=5 // pred_check
      _
    $region30: #{encoder_forward.21} parent=5 // pred_check_branch
      %178 = sbr.rel (%p175) target = $region32
    $region31: #{encoder_forward.21} parent=5 // pred_region
      %s179 = ssub.s32 %s9, 1
      %s180 = smul.u32 8, %s19
      %p181 = scmp.lt.s32.totalorder %s18, 1
      %s182 = scalar_select %p181, %s18, 1
      %p183 = scmp.lt.s32.totalorder %s180, 7
      %s184 = scalar_select %p183, %s180, 7
      %s185 = smul.addr %s182, 8
      %s186 = sadd.s32 %s184, %s185
      %s187 = smul.addr %s186, 4
      %s188 = scalar_lea.vmem %s0, %s187
      %p189 = pneg %p49
      %p190 = pneg %p46
      %p191 = scmp.lt.s32.totalorder %s18, 1
      %s192 = scalar_select %p191, %s18, 1
      %s193 = scalar_lea.vmem %s1, %s192
      %p194 = pneg %p75
      %p195 = pneg %p72
      %p196 = scmp.lt.s32.totalorder %s18, 1
      %s197 = scalar_select %p196, %s18, 1
      %s198 = scalar_lea.vmem %s2, %s197
      %p199 = pneg %p101
      %p200 = pneg %p98
      %p201 = pneg %p129
      %p202 = pneg %p126
      %s203 = smul.u32 8, %s19
      %p204 = scmp.lt.s32.totalorder %s18, 1
      %s205 = scalar_select %p204, %s18, 1
      %p206 = scmp.lt.s32.totalorder %s203, 7
      %s207 = scalar_select %p206, %s203, 7
      %s208 = smul.addr %s205, 8
      %s209 = sadd.s32 %s207, %s208
      %s210 = smul.addr %s209, 4
      %s211 = scalar_lea.vmem %s3, %s210
      %s212 = smul.u32 8, %s19
      %p213 = scmp.lt.s32.totalorder %s18, 1
      %s214 = scalar_select %p213, %s18, 1
      %p215 = scmp.lt.s32.totalorder %s212, 7
      %s216 = scalar_select %p215, %s212, 7
      %s217 = smul.addr %s214, 8
      %s218 = sadd.s32 %s216, %s217
      %s219 = smul.addr %s218, 4
      %s220 = scalar_lea.vmem %s0, %s219
      %s221 = smul.u32 8, %s19
      %p222 = scmp.lt.s32.totalorder %s18, 1
      %s223 = scalar_select %p222, %s18, 1
      %s224 = scalar_lea.vmem %s1, %s223
      %p225 = scmp.lt.s32.totalorder %s18, 1
      %s226 = scalar_select %p225, %s18, 1
      %s227 = scalar_lea.vmem %s2, %s226
      %s228 = smul.u32 8, %s19
      %p229 = scmp.lt.s32.totalorder %s18, 1
      %s230 = scalar_select %p229, %s18, 1
      %p231 = scmp.lt.s32.totalorder %s228, 7
      %s232 = scalar_select %p231, %s228, 7
      %s233 = smul.addr %s230, 8
      %s234 = sadd.s32 %s232, %s233
      %s235 = smul.addr %s234, 4
      %s236 = scalar_lea.vmem %s3, %s235
      %s237 = smul.u32 8, %s19
      %v238 = vld [vmem:[%s220] sm:$0xf]
      %v239 = vld [vmem:[%s220 + $0x4] sm:$0xf]
      %v240 = vld [vmem:[%s220 + $0x8] sm:$0xf]
      %v241 = vld [vmem:[%s220 + $0xc] sm:$0xf]
      %v242 = vld [vmem:[%s220 + $0x10] sm:$0xf]
      %v243 = vld [vmem:[%s220 + $0x14] sm:$0xf]
      %v244 = vld [vmem:[%s220 + $0x18] sm:$0xf]
      %v245 = vld [vmem:[%s220 + $0x1c] sm:$0xf]
      %v246 = vunpack.c.l.bf16 %v238
      %v247 = vunpack.c.l.bf16 %v239
      %v248 = vunpack.c.l.bf16 %v240
      %v249 = vunpack.c.l.bf16 %v241
      %v250 = vunpack.c.l.bf16 %v242
      %v251 = vunpack.c.l.bf16 %v243
      %v252 = vunpack.c.l.bf16 %v244
      %v253 = vunpack.c.l.bf16 %v245
      %v254 = vld [vmem:[%s224] sm:$0x1]
      %v256 = vlaneseq
      %v257 = vshrl.u32 %v256, 7
      %v258 = vsub.s32 0, %v257
      %v259 = vrot.slane %v254, %v258
      %v261 = vmul.f32 %v246, %v259
      %v262 = vmul.f32 %v247, %v259
      %v263 = vmul.f32 %v248, %v259
      %v264 = vmul.f32 %v249, %v259
      %v265 = vmul.f32 %v250, %v259
      %v266 = vmul.f32 %v251, %v259
      %v267 = vmul.f32 %v252, %v259
      %v268 = vmul.f32 %v253, %v259
      %v269 = vld [vmem:[%s227] sm:$0x1]
      %v271 = vlaneseq
      %v272 = vshrl.u32 %v271, 7
      %v273 = vsub.s32 0, %v272
      %v274 = vrot.slane %v269, %v273
      %v276 = vadd.f32 %v261, %v274
      %v277 = vadd.f32 %v262, %v274
      %v278 = vadd.f32 %v263, %v274
      %v279 = vadd.f32 %v264, %v274
      %v280 = vadd.f32 %v265, %v274
      %v281 = vadd.f32 %v266, %v274
      %v282 = vadd.f32 %v267, %v274
      %v283 = vadd.f32 %v268, %v274
      %v284 = vmax.f32 %v276, 0.0
      %v285 = vmax.f32 %v277, 0.0
      %v286 = vmax.f32 %v278, 0.0
      %v287 = vmax.f32 %v279, 0.0
      %v288 = vmax.f32 %v280, 0.0
      %v289 = vmax.f32 %v281, 0.0
      %v290 = vmax.f32 %v282, 0.0
      %v291 = vmax.f32 %v283, 0.0
      %v292 = vpack.c.bf16 %v285, %v284
      %v293 = vpack.c.bf16 %v287, %v286
      %v294 = vpack.c.bf16 %v289, %v288
      %v295 = vpack.c.bf16 %v291, %v290
      %v300 = vunpack.c.l.b16 %v292
      %v301 = vunpack.c.h.b16 %v292
      %v302 = vunpack.c.l.b16 %v293
      %v303 = vunpack.c.h.b16 %v293
      %v304 = vunpack.c.l.b16 %v294
      %v305 = vunpack.c.h.b16 %v294
      %v306 = vunpack.c.l.b16 %v295
      %v307 = vunpack.c.h.b16 %v295
      %v308 = vpack.c.b16 %v300, %v300
      %v309 = vpack.c.b16 %v301, %v301
      %v310 = vpack.c.b16 %v302, %v302
      %v311 = vpack.c.b16 %v303, %v303
      %v312 = vpack.c.b16 %v304, %v304
      %v313 = vpack.c.b16 %v305, %v305
      %v314 = vpack.c.b16 %v306, %v306
      %v315 = vpack.c.b16 %v307, %v307
      %324 = vst [vmem:[%s236] sm:$0xf] %v308
      %325 = vst [vmem:[%s236 + $0x4] sm:$0xf] %v309
      %326 = vst [vmem:[%s236 + $0x8] sm:$0xf] %v310
      %327 = vst [vmem:[%s236 + $0xc] sm:$0xf] %v311
      %328 = vst [vmem:[%s236 + $0x10] sm:$0xf] %v312
      %329 = vst [vmem:[%s236 + $0x14] sm:$0xf] %v313
      %330 = vst [vmem:[%s236 + $0x18] sm:$0xf] %v314
      %331 = vst [vmem:[%s236 + $0x1c] sm:$0xf] %v315
      %s332 = smul.u32 8, %s19
      %p333 = scmp.lt.s32.totalorder %s18, 1
      %s334 = scalar_select %p333, %s18, 1
      %p335 = scmp.lt.s32.totalorder %s332, 7
      %s336 = scalar_select %p335, %s332, 7
      %s337 = smul.addr %s334, 8
      %s338 = sadd.s32 %s336, %s337
      %s339 = smul.addr %s338, 4
      %s340 = scalar_lea.vmem %s3, %s339
      // Predicated region
      $region33: #{encoder_forward.21} parent=31 // pred_check
        %p341 = pneg %p126
      $region34: #{encoder_forward.21} parent=31 // pred_check_branch
        %343 = sbr.rel (%p341) target = $region36
      $region35: #{encoder_forward.21} parent=31 // pred_region
        %s344 = smul.u32 8, %s19
      $region36: #{encoder_forward.21} parent=31 // pred_fallthru
        _
    $region32: #{encoder_forward.21} parent=5 // pred_fallthru
      _
    %p345 = scmp.le.s32.totalorder 2, %s9
    // Predicated region
    $region37: #{encoder_forward.21} parent=5 // pred_check
      %p346 = pneg %p345
    $region38: #{encoder_forward.21} parent=5 // pred_check_branch
      %348 = sbr.rel (%p346) target = $region40
    $region39: #{encoder_forward.21} parent=5 // pred_region
      %s349 = ssub.s32 %s9, 2
      // Predicated region
      $region41: #{encoder_forward.21} parent=39 // pred_check
        %p350 = pneg %p132
      $region42: #{encoder_forward.21} parent=39 // pred_check_branch
        %352 = sbr.rel (%p350) target = $region44
      $region43: #{encoder_forward.21} parent=39 // pred_region
        %s353 = smul.u32 8, %s21
        %p354 = scmp.lt.s32.totalorder %s20, 1
        %s355 = scalar_select %p354, %s20, 1
        %p356 = scmp.lt.s32.totalorder %s353, 7
        %s357 = scalar_select %p356, %s353, 7
        %s358 = smul.addr %s355, 8
        %s359 = sadd.s32 %s357, %s358
        %s360 = smul.addr %s359, 4
        %s361 = scalar_lea.vmem %s3, %s360
      $region44: #{encoder_forward.21} parent=39 // pred_fallthru
        _
    $region40: #{encoder_forward.21} parent=5 // pred_fallthru
      _
  $region6: #{encoder_forward.21} parent=0 // loop_footer
    %s13 = sadd.s32 1, %s9
  $region7: #{encoder_forward.21} parent=0 // loop_footer_branch
    %8 = sbr.rel target = $region3
  $region8: #{encoder_forward.21} parent=0 // loop_exit
    _

// kernel: encoder_forward.23
$region0: #{encoder_forward.23}
  #allocation0 [shape = 'u32[]', space=smem, size = 0x4, offset = 0x4, fixed_abs, tag = 'smem constant byte address 0x4 - core index']
  #allocation1 [shape = 'u32[144,128]{1,0:T(1,128)}', space=vmem, size = 0x12000, scoped, tag = 'internal scratch']
  %s0 = inlined_call_operand.vmem [shape: bf16[2,16,128], index: 0, kind: input, shape index: {}]
  %s1 = inlined_call_operand.vmem [shape: f32[2,1,128], index: 1, kind: input, shape index: {}]
  %s2 = inlined_call_operand.vmem [shape: f32[2,1,128], index: 2, kind: input, shape index: {}]
  %s3 = inlined_call_operand.vmem [shape: bf16[2,16,128], index: 3, kind: output, shape index: {}]
  %s4 = sld [smem:[#allocation0]]
  $region45: #{encoder_forward.23} parent=0
    _
  %s6 = ssub.s32 1, %s4
  %s7 = scalar_select 0, %s6, %s4
  loop: start=0, step=1, limit=4
  $region2: #{encoder_forward.23} parent=0 // loop_pre_header
    _
  $region3: #{encoder_forward.23} parent=0 // loop_header
    %s9 = sphi 0, %s13
    %p10 = scmp.ge.s32.totalorder %s9, 4
    %s16 = sphi 0, %s28
    %s17 = sphi 0, %s24
    %s18 = sphi 0, %s16
    %s19 = sphi 0, %s17
    %s20 = sphi 0, %s18
    %s21 = sphi 0, %s19
    %s33 = sphi 0, %s35
    %s36 = sphi 0, %s33
    %s37 = sphi 0, %s36
    %s53 = sphi 0, %s37
    %s59 = sphi 0, %s61
    %s62 = sphi 0, %s59
    %s63 = sphi 0, %s62
    %s79 = sphi 0, %s63
    %s85 = sphi 0, %s87
    %s88 = sphi 0, %s85
    %s89 = sphi 0, %s88
    %s105 = sphi 0, %s89
    %s113 = sphi 0, %s115
    %s116 = sphi 0, %s113
    %s117 = sphi 0, %s116
    %s133 = sphi 0, %s117
  $region4: #{encoder_forward.23} parent=0 // loop_header_branch
    %12 = sbr.rel (%p10) target = $region8
  $region5: #{encoder_forward.23} parent=0 // loop_body
    %s14 = ssub.s32 %s9, 1
    %s15 = ssub.s32 %s9, 2
    %s22 = sadd.s32 1, %s17
    %p23 = scmp.ge.s32.totalorder %s22, 1
    %s24 = scalar_select %p23, 0, %s22
    %s25 = sadd.s32 1, %s16
    %s26 = scalar_select %p23, %s25, %s16
    %p27 = scmp.ge.s32.totalorder %s26, 2
    %s28 = scalar_select %p27, 0, %s26
    %s29 = ssub.s32 %s16, %s28
    %s30 = ssub.s32 %s17, %s24
    %s31 = sor.u32 %s29, %s30
    %p32 = scmp.eq.s32.totalorder %s31, 0
    %s34 = sadd.s32 %s33, 1
    %s35 = scalar_select %p32, %s33, %s34
    %p38 = pneg %p32
    %p39 = scmp.eq.s32.totalorder %s9, 1
    %p40 = por %p38, %p39
    %p41 = scmp.ne.s32.totalorder %s33, %s36
    %p42 = scmp.eq.s32.totalorder %s9, 0
    %p43 = por %p41, %p42
    %p44 = scmp.ne.s32.totalorder %s33, %s36
    %p45 = scmp.eq.s32.totalorder %s14, 1
    %p46 = por %p44, %p45
    %p47 = scmp.ne.s32.totalorder %s36, %s37
    %p48 = scmp.eq.s32.totalorder %s14, 0
    %p49 = por %p47, %p48
    %p50 = scmp.ne.s32.totalorder %s36, %s37
    %p51 = scmp.eq.s32.totalorder %s15, 1
    %p52 = por %p50, %p51
    %p54 = scmp.ne.s32.totalorder %s37, %s53
    %p55 = scmp.eq.s32.totalorder %s15, 0
    %p56 = por %p54, %p55
    %s57 = ssub.s32 %s16, %s28
    %p58 = scmp.eq.s32.totalorder %s57, 0
    %s60 = sadd.s32 %s59, 1
    %s61 = scalar_select %p58, %s59, %s60
    %p64 = pneg %p58
    %p65 = scmp.eq.s32.totalorder %s9, 1
    %p66 = por %p64, %p65
    %p67 = scmp.ne.s32.totalorder %s59, %s62
    %p68 = scmp.eq.s32.totalorder %s9, 0
    %p69 = por %p67, %p68
    %p70 = scmp.ne.s32.totalorder %s59, %s62
    %p71 = scmp.eq.s32.totalorder %s14, 1
    %p72 = por %p70, %p71
    %p73 = scmp.ne.s32.totalorder %s62, %s63
    %p74 = scmp.eq.s32.totalorder %s14, 0
    %p75 = por %p73, %p74
    %p76 = scmp.ne.s32.totalorder %s62, %s63
    %p77 = scmp.eq.s32.totalorder %s15, 1
    %p78 = por %p76, %p77
    %p80 = scmp.ne.s32.totalorder %s63, %s79
    %p81 = scmp.eq.s32.totalorder %s15, 0
    %p82 = por %p80, %p81
    %s83 = ssub.s32 %s16, %s28
    %p84 = scmp.eq.s32.totalorder %s83, 0
    %s86 = sadd.s32 %s85, 1
    %s87 = scalar_select %p84, %s85, %s86
    %p90 = pneg %p84
    %p91 = scmp.eq.s32.totalorder %s9, 1
    %p92 = por %p90, %p91
    %p93 = scmp.ne.s32.totalorder %s85, %s88
    %p94 = scmp.eq.s32.totalorder %s9, 0
    %p95 = por %p93, %p94
    %p96 = scmp.ne.s32.totalorder %s85, %s88
    %p97 = scmp.eq.s32.totalorder %s14, 1
    %p98 = por %p96, %p97
    %p99 = scmp.ne.s32.totalorder %s88, %s89
    %p100 = scmp.eq.s32.totalorder %s14, 0
    %p101 = por %p99, %p100
    %p102 = scmp.ne.s32.totalorder %s88, %s89
    %p103 = scmp.eq.s32.totalorder %s15, 1
    %p104 = por %p102, %p103
    %p106 = scmp.ne.s32.totalorder %s89, %s105
    %p107 = scmp.eq.s32.totalorder %s15, 0
    %p108 = por %p106, %p107
    %s109 = ssub.s32 %s16, %s28
    %s110 = ssub.s32 %s17, %s24
    %s111 = sor.u32 %s109, %s110
    %p112 = scmp.eq.s32.totalorder %s111, 0
    %s114 = sadd.s32 %s113, 1
    %s115 = scalar_select %p112, %s113, %s114
    %p118 = pneg %p112
    %p119 = scmp.eq.s32.totalorder %s9, 1
    %p120 = por %p118, %p119
    %p121 = scmp.ne.s32.totalorder %s113, %s116
    %p122 = scmp.eq.s32.totalorder %s9, 0
    %p123 = por %p121, %p122
    %p124 = scmp.ne.s32.totalorder %s113, %s116
    %p125 = scmp.eq.s32.totalorder %s14, 1
    %p126 = por %p124, %p125
    %p127 = scmp.ne.s32.totalorder %s116, %s117
    %p128 = scmp.eq.s32.totalorder %s14, 0
    %p129 = por %p127, %p128
    %p130 = scmp.ne.s32.totalorder %s116, %s117
    %p131 = scmp.eq.s32.totalorder %s15, 1
    %p132 = por %p130, %p131
    %p134 = scmp.ne.s32.totalorder %s117, %s133
    %p135 = scmp.eq.s32.totalorder %s15, 0
    %p136 = por %p134, %p135
    %p137 = scmp.le.s32.totalorder 1, %s9
    %p138 = scmp.lt.s32.totalorder %s9, 3
    %p139 = pnand %p137, %p138
    %p140 = pneg %p139
    // Predicated region
    $region9: #{encoder_forward.23} parent=5 // pred_check
      _
    $region10: #{encoder_forward.23} parent=5 // pred_check_branch
      %142 = sbr.rel (%p139) target = $region12
    $region11: #{encoder_forward.23} parent=5 // pred_region
      %s143 = ssub.s32 %s9, 1
    $region12: #{encoder_forward.23} parent=5 // pred_fallthru
      _
    %p144 = scmp.lt.s32.totalorder %s9, 2
    // Predicated region
    $region13: #{encoder_forward.23} parent=5 // pred_check
      %p145 = pneg %p144
    $region14: #{encoder_forward.23} parent=5 // pred_check_branch
      %147 = sbr.rel (%p145) target = $region16
    $region15: #{encoder_forward.23} parent=5 // pred_region
      // Predicated region
      $region17: #{encoder_forward.23} parent=15 // pred_check
        %p148 = pneg %p43
      $region18: #{encoder_forward.23} parent=15 // pred_check_branch
        %150 = sbr.rel (%p148) target = $region20
      $region19: #{encoder_forward.23} parent=15 // pred_region
        %s151 = smul.u32 2, %s17
        %p152 = scmp.lt.s32.totalorder %s16, 1
        %s153 = scalar_select %p152, %s16, 1
        %p154 = scmp.lt.s32.totalorder %s151, 1
        %s155 = scalar_select %p154, %s151, 1
        %s156 = smul.addr %s153, 2
        %s157 = sadd.s32 %s155, %s156
        %s158 = smul.addr %s157, 4
        %s159 = scalar_lea.vmem %s0, %s158
        %s160 = smul.u32 2, %s17
      $region20: #{encoder_forward.23} parent=15 // pred_fallthru
        _
      // Predicated region
      $region21: #{encoder_forward.23} parent=15 // pred_check
        %p161 = pneg %p69
      $region22: #{encoder_forward.23} parent=15 // pred_check_branch
        %163 = sbr.rel (%p161) target = $region24
      $region23: #{encoder_forward.23} parent=15 // pred_region
        %p164 = scmp.lt.s32.totalorder %s16, 1
        %s165 = scalar_select %p164, %s16, 1
        %s166 = scalar_lea.vmem %s1, %s165
      $region24: #{encoder_forward.23} parent=15 // pred_fallthru
        _
      // Predicated region
      $region25: #{encoder_forward.23} parent=15 // pred_check
        %p167 = pneg %p95
      $region26: #{encoder_forward.23} parent=15 // pred_check_branch
        %169 = sbr.rel (%p167) target = $region28
      $region27: #{encoder_forward.23} parent=15 // pred_region
        %p170 = scmp.lt.s32.totalorder %s16, 1
        %s171 = scalar_select %p170, %s16, 1
        %s172 = scalar_lea.vmem %s2, %s171
      $region28: #{encoder_forward.23} parent=15 // pred_fallthru
        _
    $region16: #{encoder_forward.23} parent=5 // pred_fallthru
      _
    %p173 = scmp.le.s32.totalorder 1, %s9
    %p174 = scmp.lt.s32.totalorder %s9, 3
    %p175 = pnand %p173, %p174
    %p176 = pneg %p175
    // Predicated region
    $region29: #{encoder_forward.23} parent=5 // pred_check
      _
    $region30: #{encoder_forward.23} parent=5 // pred_check_branch
      %178 = sbr.rel (%p175) target = $region32
    $region31: #{encoder_forward.23} parent=5 // pred_region
      %s179 = ssub.s32 %s9, 1
      %s180 = smul.u32 2, %s19
      %p181 = scmp.lt.s32.totalorder %s18, 1
      %s182 = scalar_select %p181, %s18, 1
      %p183 = scmp.lt.s32.totalorder %s180, 1
      %s184 = scalar_select %p183, %s180, 1
      %s185 = smul.addr %s182, 2
      %s186 = sadd.s32 %s184, %s185
      %s187 = smul.addr %s186, 4
      %s188 = scalar_lea.vmem %s0, %s187
      %p189 = pneg %p49
      %p190 = pneg %p46
      %p191 = scmp.lt.s32.totalorder %s18, 1
      %s192 = scalar_select %p191, %s18, 1
      %s193 = scalar_lea.vmem %s1, %s192
      %p194 = pneg %p75
      %p195 = pneg %p72
      %p196 = scmp.lt.s32.totalorder %s18, 1
      %s197 = scalar_select %p196, %s18, 1
      %s198 = scalar_lea.vmem %s2, %s197
      %p199 = pneg %p101
      %p200 = pneg %p98
      %p201 = pneg %p129
      %p202 = pneg %p126
      %s203 = smul.u32 2, %s19
      %p204 = scmp.lt.s32.totalorder %s18, 1
      %s205 = scalar_select %p204, %s18, 1
      %p206 = scmp.lt.s32.totalorder %s203, 1
      %s207 = scalar_select %p206, %s203, 1
      %s208 = smul.addr %s205, 2
      %s209 = sadd.s32 %s207, %s208
      %s210 = smul.addr %s209, 4
      %s211 = scalar_lea.vmem %s3, %s210
      %s212 = smul.u32 2, %s19
      %p213 = scmp.lt.s32.totalorder %s18, 1
      %s214 = scalar_select %p213, %s18, 1
      %p215 = scmp.lt.s32.totalorder %s212, 1
      %s216 = scalar_select %p215, %s212, 1
      %s217 = smul.addr %s214, 2
      %s218 = sadd.s32 %s216, %s217
      %s219 = smul.addr %s218, 4
      %s220 = scalar_lea.vmem %s0, %s219
      %s221 = smul.u32 2, %s19
      %p222 = scmp.lt.s32.totalorder %s18, 1
      %s223 = scalar_select %p222, %s18, 1
      %s224 = scalar_lea.vmem %s1, %s223
      %p225 = scmp.lt.s32.totalorder %s18, 1
      %s226 = scalar_select %p225, %s18, 1
      %s227 = scalar_lea.vmem %s2, %s226
      %s228 = smul.u32 2, %s19
      %p229 = scmp.lt.s32.totalorder %s18, 1
      %s230 = scalar_select %p229, %s18, 1
      %p231 = scmp.lt.s32.totalorder %s228, 1
      %s232 = scalar_select %p231, %s228, 1
      %s233 = smul.addr %s230, 2
      %s234 = sadd.s32 %s232, %s233
      %s235 = smul.addr %s234, 4
      %s236 = scalar_lea.vmem %s3, %s235
      %s237 = smul.u32 2, %s19
      %v238 = vld [vmem:[%s220] sm:$0xf]
      %v239 = vld [vmem:[%s220 + $0x4] sm:$0xf]
      %v240 = vunpack.c.l.bf16 %v238
      %v241 = vunpack.c.l.bf16 %v239
      %v242 = vld [vmem:[%s224] sm:$0x1]
      %v244 = vlaneseq
      %v245 = vshrl.u32 %v244, 7
      %v246 = vsub.s32 0, %v245
      %v247 = vrot.slane %v242, %v246
      %v249 = vmul.f32 %v240, %v247
      %v250 = vmul.f32 %v241, %v247
      %v251 = vld [vmem:[%s227] sm:$0x1]
      %v253 = vlaneseq
      %v254 = vshrl.u32 %v253, 7
      %v255 = vsub.s32 0, %v254
      %v256 = vrot.slane %v251, %v255
      %v258 = vadd.f32 %v249, %v256
      %v259 = vadd.f32 %v250, %v256
      %v260 = vmax.f32 %v258, 0.0
      %v261 = vmax.f32 %v259, 0.0
      %v262 = vpack.c.bf16 %v261, %v260
      %v264 = vunpack.c.l.b16 %v262
      %v265 = vunpack.c.h.b16 %v262
      %v266 = vpack.c.b16 %v264, %v264
      %v267 = vpack.c.b16 %v265, %v265
      %270 = vst [vmem:[%s236] sm:$0xf] %v266
      %271 = vst [vmem:[%s236 + $0x4] sm:$0xf] %v267
      %s272 = smul.u32 2, %s19
      %p273 = scmp.lt.s32.totalorder %s18, 1
      %s274 = scalar_select %p273, %s18, 1
      %p275 = scmp.lt.s32.totalorder %s272, 1
      %s276 = scalar_select %p275, %s272, 1
      %s277 = smul.addr %s274, 2
      %s278 = sadd.s32 %s276, %s277
      %s279 = smul.addr %s278, 4
      %s280 = scalar_lea.vmem %s3, %s279
      // Predicated region
      $region33: #{encoder_forward.23} parent=31 // pred_check
        %p281 = pneg %p126
      $region34: #{encoder_forward.23} parent=31 // pred_check_branch
        %283 = sbr.rel (%p281) target = $region36
      $region35: #{encoder_forward.23} parent=31 // pred_region
        %s284 = smul.u32 2, %s19
      $region36: #{encoder_forward.23} parent=31 // pred_fallthru
        _
    $region32: #{encoder_forward.23} parent=5 // pred_fallthru
      _
    %p285 = scmp.le.s32.totalorder 2, %s9
    // Predicated region
    $region37: #{encoder_forward.23} parent=5 // pred_check
      %p286 = pneg %p285
    $region38: #{encoder_forward.23} parent=5 // pred_check_branch
      %288 = sbr.rel (%p286) target = $region40
    $region39: #{encoder_forward.23} parent=5 // pred_region
      %s289 = ssub.s32 %s9, 2
      // Predicated region
      $region41: #{encoder_forward.23} parent=39 // pred_check
        %p290 = pneg %p132
      $region42: #{encoder_forward.23} parent=39 // pred_check_branch
        %292 = sbr.rel (%p290) target = $region44
      $region43: #{encoder_forward.23} parent=39 // pred_region
        %s293 = smul.u32 2, %s21
        %p294 = scmp.lt.s32.totalorder %s20, 1
        %s295 = scalar_select %p294, %s20, 1
        %p296 = scmp.lt.s32.totalorder %s293, 1
        %s297 = scalar_select %p296, %s293, 1
        %s298 = smul.addr %s295, 2
        %s299 = sadd.s32 %s297, %s298
        %s300 = smul.addr %s299, 4
        %s301 = scalar_lea.vmem %s3, %s300
      $region44: #{encoder_forward.23} parent=39 // pred_fallthru
        _
    $region40: #{encoder_forward.23} parent=5 // pred_fallthru
      _
  $region6: #{encoder_forward.23} parent=0 // loop_footer
    %s13 = sadd.s32 1, %s9
  $region7: #{encoder_forward.23} parent=0 // loop_footer_branch
    %8 = sbr.rel target = $region3
  $region8: #{encoder_forward.23} parent=0 // loop_exit
    _

// kernel: encoder_forward.22
$region0: #{encoder_forward.22}
  #allocation0 [shape = 'u32[]', space=smem, size = 0x4, offset = 0x4, fixed_abs, tag = 'smem constant byte address 0x4 - core index']
  #allocation1 [shape = 'u32[144,128]{1,0:T(1,128)}', space=vmem, size = 0x12000, scoped, tag = 'internal scratch']
  #allocation2 [shape = 'f32[16,128]{1,0:T(8,128)}', space=vmem, size = 0x2000, scoped, tag = 'scratch operand']
  %s0 = inlined_call_operand.vmem [shape: bf16[2,16,640], index: 0, kind: input, shape index: {}]
  %s1 = inlined_call_operand.vmem [shape: bf16[640,128], index: 1, kind: input, shape index: {}]
  %s2 = inlined_call_operand.vmem [shape: bf16[2,16,128], index: 2, kind: output, shape index: {0}]
  %s3 = inlined_call_operand.vmem [shape: f32[2,1,8,128], index: 3, kind: output, shape index: {1}]
  %4 = xla_tuple %s2, %s3
  %s5 = sld [smem:[#allocation0]]
  $region57: #{encoder_forward.22} parent=0
    _
  %s7 = ssub.s32 1, %s5
  %s8 = scalar_select 0, %s7, %s5
  loop: start=0, step=1, limit=4
  $region2: #{encoder_forward.22} parent=0 // loop_pre_header
    _
  $region3: #{encoder_forward.22} parent=0 // loop_header
    %s10 = sphi 0, %s14
    %p11 = scmp.ge.s32.totalorder %s10, 4
    %s17 = sphi 0, %s36
    %s18 = sphi 0, %s32
    %s19 = sphi 0, %s28
    %s20 = sphi 0, %s17
    %s21 = sphi 0, %s18
    %s22 = sphi 0, %s19
    %s23 = sphi 0, %s20
    %s24 = sphi 0, %s21
    %s25 = sphi 0, %s22
    %s43 = sphi 0, %s45
    %s46 = sphi 0, %s43
    %s47 = sphi 0, %s46
    %s63 = sphi 0, %s47
    %s69 = sphi 0, %s71
    %s72 = sphi 0, %s69
    %s73 = sphi 0, %s72
    %s89 = sphi 0, %s73
    %s97 = sphi 0, %s99
    %s100 = sphi 0, %s97
    %s101 = sphi 0, %s100
    %s117 = sphi 0, %s101
    %s125 = sphi 0, %s127
    %s128 = sphi 0, %s125
    %s129 = sphi 0, %s128
    %s145 = sphi 0, %s129
  $region4: #{encoder_forward.22} parent=0 // loop_header_branch
    %13 = sbr.rel (%p11) target = $region8
  $region5: #{encoder_forward.22} parent=0 // loop_body
    %s15 = ssub.s32 %s10, 1
    %s16 = ssub.s32 %s10, 2
    %s26 = sadd.s32 1, %s19
    %p27 = scmp.ge.s32.totalorder %s26, 1
    %s28 = scalar_select %p27, 0, %s26
    %s29 = sadd.s32 1, %s18
    %s30 = scalar_select %p27, %s29, %s18
    %p31 = scmp.ge.s32.totalorder %s30, 1
    %s32 = scalar_select %p31, 0, %s30
    %s33 = sadd.s32 1, %s17
    %s34 = scalar_select %p31, %s33, %s17
    %p35 = scmp.ge.s32.totalorder %s34, 2
    %s36 = scalar_select %p35, 0, %s34
    %s37 = ssub.s32 %s17, %s36
    %s38 = ssub.s32 %s18, %s32
    %s39 = sor.u32 %s37, %s38
    %s40 = ssub.s32 %s19, %s28
    %s41 = sor.u32 %s39, %s40
    %p42 = scmp.eq.s32.totalorder %s41, 0
    %s44 = sadd.s32 %s43, 1
    %s45 = scalar_select %p42, %s43, %s44
    %p48 = pneg %p42
    %p49 = scmp.eq.s32.totalorder %s10, 1
    %p50 = por %p48, %p49
    %p51 = scmp.ne.s32.totalorder %s43, %s46
    %p52 = scmp.eq.s32.totalorder %s10, 0
    %p53 = por %p51, %p52
    %p54 = scmp.ne.s32.totalorder %s43, %s46
    %p55 = scmp.eq.s32.totalorder %s15, 1
    %p56 = por %p54, %p55
    %p57 = scmp.ne.s32.totalorder %s46, %s47
    %p58 = scmp.eq.s32.totalorder %s15, 0
    %p59 = por %p57, %p58
    %p60 = scmp.ne.s32.totalorder %s46, %s47
    %p61 = scmp.eq.s32.totalorder %s16, 1
    %p62 = por %p60, %p61
    %p64 = scmp.ne.s32.totalorder %s47, %s63
    %p65 = scmp.eq.s32.totalorder %s16, 0
    %p66 = por %p64, %p65
    %s67 = ssub.s32 %s19, %s28
    %p68 = scmp.eq.s32.totalorder %s67, 0
    %s70 = sadd.s32 %s69, 1
    %s71 = scalar_select %p68, %s69, %s70
    %p74 = pneg %p68
    %p75 = scmp.eq.s32.totalorder %s10, 1
    %p76 = por %p74, %p75
    %p77 = scmp.ne.s32.totalorder %s69, %s72
    %p78 = scmp.eq.s32.totalorder %s10, 0
    %p79 = por %p77, %p78
    %p80 = scmp.ne.s32.totalorder %s69, %s72
    %p81 = scmp.eq.s32.totalorder %s15, 1
    %p82 = por %p80, %p81
    %p83 = scmp.ne.s32.totalorder %s72, %s73
    %p84 = scmp.eq.s32.totalorder %s15, 0
    %p85 = por %p83, %p84
    %p86 = scmp.ne.s32.totalorder %s72, %s73
    %p87 = scmp.eq.s32.totalorder %s16, 1
    %p88 = por %p86, %p87
    %p90 = scmp.ne.s32.totalorder %s73, %s89
    %p91 = scmp.eq.s32.totalorder %s16, 0
    %p92 = por %p90, %p91
    %s93 = ssub.s32 %s17, %s36
    %s94 = ssub.s32 %s18, %s32
    %s95 = sor.u32 %s93, %s94
    %p96 = scmp.eq.s32.totalorder %s95, 0
    %s98 = sadd.s32 %s97, 1
    %s99 = scalar_select %p96, %s97, %s98
    %p102 = pneg %p96
    %p103 = scmp.eq.s32.totalorder %s10, 1
    %p104 = por %p102, %p103
    %p105 = scmp.ne.s32.totalorder %s97, %s100
    %p106 = scmp.eq.s32.totalorder %s10, 0
    %p107 = por %p105, %p106
    %p108 = scmp.ne.s32.totalorder %s97, %s100
    %p109 = scmp.eq.s32.totalorder %s15, 1
    %p110 = por %p108, %p109
    %p111 = scmp.ne.s32.totalorder %s100, %s101
    %p112 = scmp.eq.s32.totalorder %s15, 0
    %p113 = por %p111, %p112
    %p114 = scmp.ne.s32.totalorder %s100, %s101
    %p115 = scmp.eq.s32.totalorder %s16, 1
    %p116 = por %p114, %p115
    %p118 = scmp.ne.s32.totalorder %s101, %s117
    %p119 = scmp.eq.s32.totalorder %s16, 0
    %p120 = por %p118, %p119
    %s121 = ssub.s32 %s17, %s36
    %s122 = ssub.s32 %s18, %s32
    %s123 = sor.u32 %s121, %s122
    %p124 = scmp.eq.s32.totalorder %s123, 0
    %s126 = sadd.s32 %s125, 1
    %s127 = scalar_select %p124, %s125, %s126
    %p130 = pneg %p124
    %p131 = scmp.eq.s32.totalorder %s10, 1
    %p132 = por %p130, %p131
    %p133 = scmp.ne.s32.totalorder %s125, %s128
    %p134 = scmp.eq.s32.totalorder %s10, 0
    %p135 = por %p133, %p134
    %p136 = scmp.ne.s32.totalorder %s125, %s128
    %p137 = scmp.eq.s32.totalorder %s15, 1
    %p138 = por %p136, %p137
    %p139 = scmp.ne.s32.totalorder %s128, %s129
    %p140 = scmp.eq.s32.totalorder %s15, 0
    %p141 = por %p139, %p140
    %p142 = scmp.ne.s32.totalorder %s128, %s129
    %p143 = scmp.eq.s32.totalorder %s16, 1
    %p144 = por %p142, %p143
    %p146 = scmp.ne.s32.totalorder %s129, %s145
    %p147 = scmp.eq.s32.totalorder %s16, 0
    %p148 = por %p146, %p147
    %p149 = scmp.le.s32.totalorder 1, %s10
    %p150 = scmp.lt.s32.totalorder %s10, 3
    %p151 = pnand %p149, %p150
    %p152 = pneg %p151
    // Predicated region
    $region9: #{encoder_forward.22} parent=5 // pred_check
      _
    $region10: #{encoder_forward.22} parent=5 // pred_check_branch
      %154 = sbr.rel (%p151) target = $region12
    $region11: #{encoder_forward.22} parent=5 // pred_region
      %s155 = ssub.s32 %s10, 1
      // Predicated region
      $region13: #{encoder_forward.22} parent=11 // pred_check
        %p156 = pneg %p85
      $region14: #{encoder_forward.22} parent=11 // pred_check_branch
        %158 = sbr.rel (%p156) target = $region16
      $region15: #{encoder_forward.22} parent=11 // pred_region
        %s159 = smul.u32 80, %s22
        %p160 = scmp.lt.s32.totalorder %s159, 79
        %s161 = scalar_select %p160, %s159, 79
        %s162 = smul.addr %s161, 4
        %s163 = scalar_lea.vmem %s1, %s162
        %s164 = smul.u32 80, %s22
      $region16: #{encoder_forward.22} parent=11 // pred_fallthru
        _
    $region12: #{encoder_forward.22} parent=5 // pred_fallthru
      _
    %p165 = scmp.lt.s32.totalorder %s10, 2
    // Predicated region
    $region17: #{encoder_forward.22} parent=5 // pred_check
      %p166 = pneg %p165
    $region18: #{encoder_forward.22} parent=5 // pred_check_branch
      %168 = sbr.rel (%p166) target = $region20
    $region19: #{encoder_forward.22} parent=5 // pred_region
      // Predicated region
      $region21: #{encoder_forward.22} parent=19 // pred_check
        %p169 = pneg %p53
      $region22: #{encoder_forward.22} parent=19 // pred_check_branch
        %171 = sbr.rel (%p169) target = $region24
      $region23: #{encoder_forward.22} parent=19 // pred_region
        %s172 = smul.u32 2, %s18
        %s173 = smul.u32 5, %s19
        %p174 = scmp.lt.s32.totalorder %s17, 1
        %s175 = scalar_select %p174, %s17, 1
        %p176 = scmp.lt.s32.totalorder %s172, 1
        %s177 = scalar_select %p176, %s172, 1
        %p178 = scmp.lt.s32.totalorder %s173, 4
        %s179 = scalar_select %p178, %s173, 4
        %s180 = smul.addr %s177, 5
        %s181 = sadd.s32 %s179, %s180
        %s182 = smul.addr %s175, 10
        %s183 = sadd.s32 %s181, %s182
        %s184 = smul.addr %s183, 4
        %s185 = scalar_lea.vmem %s0, %s184
        %s186 = smul.u32 2, %s18
        %s187 = smul.u32 5, %s19
      $region24: #{encoder_forward.22} parent=19 // pred_fallthru
        _
    $region20: #{encoder_forward.22} parent=5 // pred_fallthru
      _
    %p188 = scmp.le.s32.totalorder 1, %s10
    %p189 = scmp.lt.s32.totalorder %s10, 3
    %p190 = pnand %p188, %p189
    %p191 = pneg %p190
    // Predicated region
    $region25: #{encoder_forward.22} parent=5 // pred_check
      _
    $region26: #{encoder_forward.22} parent=5 // pred_check_branch
      %193 = sbr.rel (%p190) target = $region28
    $region27: #{encoder_forward.22} parent=5 // pred_region
      %s194 = ssub.s32 %s10, 1
      %s195 = smul.u32 2, %s21
      %s196 = smul.u32 5, %s22
      %p197 = scmp.lt.s32.totalorder %s20, 1
      %s198 = scalar_select %p197, %s20, 1
      %p199 = scmp.lt.s32.totalorder %s195, 1
      %s200 = scalar_select %p199, %s195, 1
      %p201 = scmp.lt.s32.totalorder %s196, 4
      %s202 = scalar_select %p201, %s196, 4
      %s203 = smul.addr %s200, 5
      %s204 = sadd.s32 %s202, %s203
      %s205 = smul.addr %s198, 10
      %s206 = sadd.s32 %s204, %s205
      %s207 = smul.addr %s206, 4
      %s208 = scalar_lea.vmem %s0, %s207
      %p209 = pneg %p59
      %p210 = pneg %p56
      %s211 = smul.u32 80, %s22
      %p212 = scmp.lt.s32.totalorder %s211, 79
      %s213 = scalar_select %p212, %s211, 79
      %s214 = smul.addr %s213, 4
      %s215 = scalar_lea.vmem %s1, %s214
      %p216 = pneg %p85
      %p217 = pneg %p82
      %p218 = pneg %p113
      %p219 = pneg %p110
      %s220 = smul.u32 2, %s21
      %p221 = scmp.lt.s32.totalorder %s20, 1
      %s222 = scalar_select %p221, %s20, 1
      %p223 = scmp.lt.s32.totalorder %s220, 1
      %s224 = scalar_select %p223, %s220, 1
      %s225 = smul.addr %s222, 2
      %s226 = sadd.s32 %s224, %s225
      %s227 = smul.addr %s226, 4
      %s228 = scalar_lea.vmem %s2, %s227
      %p229 = pneg %p141
      %p230 = pneg %p138
      %p231 = scmp.lt.s32.totalorder %s20, 1
      %s232 = scalar_select %p231, %s20, 1
      %p233 = scmp.lt.s32.totalorder %s21, 0
      %s234 = scalar_select %p233, %s21, 0
      %s235 = sadd.s32 %s234, %s232
      %s236 = smul.addr %s235, 8
      %s237 = scalar_lea.vmem %s3, %s236
      %s238 = smul.u32 2, %s21
      %s239 = smul.u32 5, %s22
      %p240 = scmp.lt.s32.totalorder %s20, 1
      %s241 = scalar_select %p240, %s20, 1
      %p242 = scmp.lt.s32.totalorder %s238, 1
      %s243 = scalar_select %p242, %s238, 1
      %p244 = scmp.lt.s32.totalorder %s239, 4
      %s245 = scalar_select %p244, %s239, 4
      %s246 = smul.addr %s243, 5
      %s247 = sadd.s32 %s245, %s246
      %s248 = smul.addr %s241, 10
      %s249 = sadd.s32 %s247, %s248
      %s250 = smul.addr %s249, 4
      %s251 = scalar_lea.vmem %s0, %s250
      %s252 = smul.u32 2, %s21
      %s253 = smul.u32 5, %s22
      %s254 = smul.u32 80, %s22
      %p255 = scmp.lt.s32.totalorder %s254, 79
      %s256 = scalar_select %p255, %s254, 79
      %s257 = smul.addr %s256, 4
      %s258 = scalar_lea.vmem %s1, %s257
      %s259 = smul.u32 80, %s22
      %s260 = smul.u32 2, %s21
      %p261 = scmp.lt.s32.totalorder %s20, 1
      %s262 = scalar_select %p261, %s20, 1
      %p263 = scmp.lt.s32.totalorder %s260, 1
      %s264 = scalar_select %p263, %s260, 1
      %s265 = smul.addr %s262, 2
      %s266 = sadd.s32 %s264, %s265
      %s267 = smul.addr %s266, 4
      %s268 = scalar_lea.vmem %s2, %s267
      %s269 = smul.u32 2, %s21
      %p270 = scmp.lt.s32.totalorder %s20, 1
      %s271 = scalar_select %p270, %s20, 1
      %p272 = scmp.lt.s32.totalorder %s21, 0
      %s273 = scalar_select %p272, %s21, 0
      %s274 = sadd.s32 %s273, %s271
      %s275 = smul.addr %s274, 8
      %s276 = scalar_lea.vmem %s3, %s275
      %p278 = scmp.eq.s32.totalorder %s22, 0
      // Predicated region
      $region29: #{encoder_forward.22} parent=27 // pred_check
        %p279 = pneg %p278
      $region30: #{encoder_forward.22} parent=27 // pred_check_branch
        %281 = sbr.rel (%p279) target = $region32
      $region31: #{encoder_forward.22} parent=27 // pred_region
        %282 = vst [vmem:[#allocation2] sm:$0xff] 0.0
        %283 = vst [vmem:[#allocation2 + $0x8] sm:$0xff] 0.0
      $region32: #{encoder_forward.22} parent=27 // pred_fallthru
        _
      %v284 = vld [vmem:[#allocation2] sm:$0xff]
      %v285 = vld [vmem:[#allocation2 + $0x8] sm:$0xff]
      %v286 = vld [vmem:[%s251] sm:$0xff]
      %v287 = vld [vmem:[%s251 + $0x8] sm:$0xff]
      %v288 = vld [vmem:[%s251 + $0x10] sm:$0xf]
      %v289 = vld [vmem:[%s251 + $0x14] sm:$0xff]
      %v290 = vld [vmem:[%s251 + $0x1c] sm:$0xff]
      %v291 = vld [vmem:[%s251 + $0x24] sm:$0xf]
      %v292 = vld [vmem:[%s258] sm:$0xf]
      %v293 = vld [vmem:[%s258 + $0x4] sm:$0xf]
      %v294 = vld [vmem:[%s258 + $0x8] sm:$0xf]
      %v295 = vld [vmem:[%s258 + $0xc] sm:$0xf]
      %v296 = vld [vmem:[%s258 + $0x10] sm:$0xf]
      %v297 = vld [vmem:[%s258 + $0x14] sm:$0xf]
      %v298 = vld [vmem:[%s258 + $0x18] sm:$0xf]
      %v299 = vld [vmem:[%s258 + $0x1c] sm:$0xf]
      %v300 = vld [vmem:[%s258 + $0x20] sm:$0xf]
      %v301 = vld [vmem:[%s258 + $0x24] sm:$0xf]
      %v302 = vld [vmem:[%s258 + $0x28] sm:$0xf]
      %v303 = vld [vmem:[%s258 + $0x2c] sm:$0xf]
      %v304 = vld [vmem:[%s258 + $0x30] sm:$0xf]
      %v305 = vld [vmem:[%s258 + $0x34] sm:$0xf]
      %v306 = vld [vmem:[%s258 + $0x38] sm:$0xf]
      %v307 = vld [vmem:[%s258 + $0x3c] sm:$0xf]
      %v308 = vld [vmem:[%s258 + $0x40] sm:$0xf]
      %v309 = vld [vmem:[%s258 + $0x44] sm:$0xf]
      %v310 = vld [vmem:[%s258 + $0x48] sm:$0xf]
      %v311 = vld [vmem:[%s258 + $0x4c] sm:$0xf]
      %v312 = vld [vmem:[%s258 + $0x50] sm:$0xf]
      %v313 = vld [vmem:[%s258 + $0x54] sm:$0xf]
      %v314 = vld [vmem:[%s258 + $0x58] sm:$0xf]
      %v315 = vld [vmem:[%s258 + $0x5c] sm:$0xf]
      %v316 = vld [vmem:[%s258 + $0x60] sm:$0xf]
      %v317 = vld [vmem:[%s258 + $0x64] sm:$0xf]
      %v318 = vld [vmem:[%s258 + $0x68] sm:$0xf]
      %v319 = vld [vmem:[%s258 + $0x6c] sm:$0xf]
      %v320 = vld [vmem:[%s258 + $0x70] sm:$0xf]
      %v321 = vld [vmem:[%s258 + $0x74] sm:$0xf]
      %v322 = vld [vmem:[%s258 + $0x78] sm:$0xf]
      %v323 = vld [vmem:[%s258 + $0x7c] sm:$0xf]
      %v324 = vld [vmem:[%s258 + $0x80] sm:$0xf]
      %v325 = vld [vmem:[%s258 + $0x84] sm:$0xf]
      %v326 = vld [vmem:[%s258 + $0x88] sm:$0xf]
      %v327 = vld [vmem:[%s258 + $0x8c] sm:$0xf]
      %v328 = vld [vmem:[%s258 + $0x90] sm:$0xf]
      %v329 = vld [vmem:[%s258 + $0x94] sm:$0xf]
      %v330 = vld [vmem:[%s258 + $0x98] sm:$0xf]
      %v331 = vld [vmem:[%s258 + $0x9c] sm:$0xf]
      %v332 = vld [vmem:[%s258 + $0xa0] sm:$0xf]
      %v333 = vld [vmem:[%s258 + $0xa4] sm:$0xf]
      %v334 = vld [vmem:[%s258 + $0xa8] sm:$0xf]
      %v335 = vld [vmem:[%s258 + $0xac] sm:$0xf]
      %v336 = vld [vmem:[%s258 + $0xb0] sm:$0xf]
      %v337 = vld [vmem:[%s258 + $0xb4] sm:$0xf]
      %v338 = vld [vmem:[%s258 + $0xb8] sm:$0xf]
      %v339 = vld [vmem:[%s258 + $0xbc] sm:$0xf]
      %v340 = vld [vmem:[%s258 + $0xc0] sm:$0xf]
      %v341 = vld [vmem:[%s258 + $0xc4] sm:$0xf]
      %v342 = vld [vmem:[%s258 + $0xc8] sm:$0xf]
      %v343 = vld [vmem:[%s258 + $0xcc] sm:$0xf]
      %v344 = vld [vmem:[%s258 + $0xd0] sm:$0xf]
      %v345 = vld [vmem:[%s258 + $0xd4] sm:$0xf]
      %v346 = vld [vmem:[%s258 + $0xd8] sm:$0xf]
      %v347 = vld [vmem:[%s258 + $0xdc] sm:$0xf]
      %v348 = vld [vmem:[%s258 + $0xe0] sm:$0xf]
      %v349 = vld [vmem:[%s258 + $0xe4] sm:$0xf]
      %v350 = vld [vmem:[%s258 + $0xe8] sm:$0xf]
      %v351 = vld [vmem:[%s258 + $0xec] sm:$0xf]
      %v352 = vld [vmem:[%s258 + $0xf0] sm:$0xf]
      %v353 = vld [vmem:[%s258 + $0xf4] sm:$0xf]
      %v354 = vld [vmem:[%s258 + $0xf8] sm:$0xf]
      %v355 = vld [vmem:[%s258 + $0xfc] sm:$0xf]
      %v356 = vld [vmem:[%s258 + $0x100] sm:$0xf]
      %v357 = vld [vmem:[%s258 + $0x104] sm:$0xf]
      %v358 = vld [vmem:[%s258 + $0x108] sm:$0xf]
      %v359 = vld [vmem:[%s258 + $0x10c] sm:$0xf]
      %v360 = vld [vmem:[%s258 + $0x110] sm:$0xf]
      %v361 = vld [vmem:[%s258 + $0x114] sm:$0xf]
      %v362 = vld [vmem:[%s258 + $0x118] sm:$0xf]
      %v363 = vld [vmem:[%s258 + $0x11c] sm:$0xf]
      %v364 = vld [vmem:[%s258 + $0x120] sm:$0xf]
      %v365 = vld [vmem:[%s258 + $0x124] sm:$0xf]
      %v366 = vld [vmem:[%s258 + $0x128] sm:$0xf]
      %v367 = vld [vmem:[%s258 + $0x12c] sm:$0xf]
      %v368 = vld [vmem:[%s258 + $0x130] sm:$0xf]
      %v369 = vld [vmem:[%s258 + $0x134] sm:$0xf]
      %v370 = vld [vmem:[%s258 + $0x138] sm:$0xf]
      %v371 = vld [vmem:[%s258 + $0x13c] sm:$0xf]
      %v378 = vunpack.c.l.b16 %v286
      %v379 = vunpack.c.h.b16 %v286
      %v380 = vunpack.c.l.b16 %v287
      %v381 = vunpack.c.h.b16 %v287
      %v382 = vunpack.c.l.b16 %v288
      %v383 = vunpack.c.l.b16 %v289
      %v384 = vunpack.c.h.b16 %v289
      %v385 = vunpack.c.l.b16 %v290
      %v386 = vunpack.c.h.b16 %v290
      %v387 = vunpack.c.l.b16 %v291
      %v388 = vpack.c.b16 %v383, %v378
      %v389 = vpack.c.b16 %v384, %v379
      %v390 = vpack.c.b16 %v385, %v380
      %v391 = vpack.c.b16 %v386, %v381
      %v392 = vpack.c.b16 %v387, %v382
      %v478 = vunpack.c.l.b16 %v292
      %v479 = vunpack.c.l.b16 %v293
      %v480 = vunpack.c.l.b16 %v294
      %v481 = vunpack.c.l.b16 %v295
      %v482 = vunpack.c.l.b16 %v296
      %v483 = vunpack.c.l.b16 %v297
      %v484 = vunpack.c.l.b16 %v298
      %v485 = vunpack.c.l.b16 %v299
      %v486 = vunpack.c.l.b16 %v300
      %v487 = vunpack.c.l.b16 %v301
      %v488 = vunpack.c.l.b16 %v302
      %v489 = vunpack.c.l.b16 %v303
      %v490 = vunpack.c.l.b16 %v304
      %v491 = vunpack.c.l.b16 %v305
      %v492 = vunpack.c.l.b16 %v306
      %v493 = vunpack.c.l.b16 %v307
      %v494 = vunpack.c.l.b16 %v308
      %v495 = vunpack.c.l.b16 %v309
      %v496 = vunpack.c.l.b16 %v310
      %v497 = vunpack.c.l.b16 %v311
      %v498 = vunpack.c.l.b16 %v312
      %v499 = vunpack.c.l.b16 %v313
      %v500 = vunpack.c.l.b16 %v314
      %v501 = vunpack.c.l.b16 %v315
      %v502 = vunpack.c.l.b16 %v316
      %v503 = vunpack.c.l.b16 %v317
      %v504 = vunpack.c.l.b16 %v318
      %v505 = vunpack.c.l.b16 %v319
      %v506 = vunpack.c.l.b16 %v320
      %v507 = vunpack.c.l.b16 %v321
      %v508 = vunpack.c.l.b16 %v322
      %v509 = vunpack.c.l.b16 %v323
      %v510 = vunpack.c.l.b16 %v324
      %v511 = vunpack.c.l.b16 %v325
      %v512 = vunpack.c.l.b16 %v326
      %v513 = vunpack.c.l.b16 %v327
      %v514 = vunpack.c.l.b16 %v328
      %v515 = vunpack.c.l.b16 %v329
      %v516 = vunpack.c.l.b16 %v330
      %v517 = vunpack.c.l.b16 %v331
      %v518 = vunpack.c.l.b16 %v332
      %v519 = vunpack.c.l.b16 %v333
      %v520 = vunpack.c.l.b16 %v334
      %v521 = vunpack.c.l.b16 %v335
      %v522 = vunpack.c.l.b16 %v336
      %v523 = vunpack.c.l.b16 %v337
      %v524 = vunpack.c.l.b16 %v338
      %v525 = vunpack.c.l.b16 %v339
      %v526 = vunpack.c.l.b16 %v340
      %v527 = vunpack.c.l.b16 %v341
      %v528 = vunpack.c.l.b16 %v342
      %v529 = vunpack.c.l.b16 %v343
      %v530 = vunpack.c.l.b16 %v344
      %v531 = vunpack.c.l.b16 %v345
      %v532 = vunpack.c.l.b16 %v346
      %v533 = vunpack.c.l.b16 %v347
      %v534 = vunpack.c.l.b16 %v348
      %v535 = vunpack.c.l.b16 %v349
      %v536 = vunpack.c.l.b16 %v350
      %v537 = vunpack.c.l.b16 %v351
      %v538 = vunpack.c.l.b16 %v352
      %v539 = vunpack.c.l.b16 %v353
      %v540 = vunpack.c.l.b16 %v354
      %v541 = vunpack.c.l.b16 %v355
      %v542 = vunpack.c.l.b16 %v356
      %v543 = vunpack.c.l.b16 %v357
      %v544 = vunpack.c.l.b16 %v358
      %v545 = vunpack.c.l.b16 %v359
      %v546 = vunpack.c.l.b16 %v360
      %v547 = vunpack.c.l.b16 %v361
      %v548 = vunpack.c.l.b16 %v362
      %v549 = vunpack.c.l.b16 %v363
      %v550 = vunpack.c.l.b16 %v364
      %v551 = vunpack.c.l.b16 %v365
      %v552 = vunpack.c.l.b16 %v366
      %v553 = vunpack.c.l.b16 %v367
      %v554 = vunpack.c.l.b16 %v368
      %v555 = vunpack.c.l.b16 %v369
      %v556 = vunpack.c.l.b16 %v370
      %v557 = vunpack.c.l.b16 %v371
      %v558 = vpack.c.b16 %v479, %v478
      %v559 = vpack.c.b16 %v481, %v480
      %v560 = vpack.c.b16 %v483, %v482
      %v561 = vpack.c.b16 %v485, %v484
      %v562 = vpack.c.b16 %v487, %v486
      %v563 = vpack.c.b16 %v489, %v488
      %v564 = vpack.c.b16 %v491, %v490
      %v565 = vpack.c.b16 %v493, %v492
      %v566 = vpack.c.b16 %v495, %v494
      %v567 = vpack.c.b16 %v497, %v496
      %v568 = vpack.c.b16 %v499, %v498
      %v569 = vpack.c.b16 %v501, %v500
      %v570 = vpack.c.b16 %v503, %v502
      %v571 = vpack.c.b16 %v505, %v504
      %v572 = vpack.c.b16 %v507, %v506
      %v573 = vpack.c.b16 %v509, %v508
      %v574 = vpack.c.b16 %v511, %v510
      %v575 = vpack.c.b16 %v513, %v512
      %v576 = vpack.c.b16 %v515, %v514
      %v577 = vpack.c.b16 %v517, %v516
      %v578 = vpack.c.b16 %v519, %v518
      %v579 = vpack.c.b16 %v521, %v520
      %v580 = vpack.c.b16 %v523, %v522
      %v581 = vpack.c.b16 %v525, %v524
      %v582 = vpack.c.b16 %v527, %v526
      %v583 = vpack.c.b16 %v529, %v528
      %v584 = vpack.c.b16 %v531, %v530
      %v585 = vpack.c.b16 %v533, %v532
      %v586 = vpack.c.b16 %v535, %v534
      %v587 = vpack.c.b16 %v537, %v536
      %v588 = vpack.c.b16 %v539, %v538
      %v589 = vpack.c.b16 %v541, %v540
      %v590 = vpack.c.b16 %v543, %v542
      %v591 = vpack.c.b16 %v545, %v544
      %v592 = vpack.c.b16 %v547, %v546
      %v593 = vpack.c.b16 %v549, %v548
      %v594 = vpack.c.b16 %v551, %v550
      %v595 = vpack.c.b16 %v553, %v552
      %v596 = vpack.c.b16 %v555, %v554
      %v597 = vpack.c.b16 %v557, %v556
      %638 = vmatprep.subr.bf16.mxu0 0
      %639 = vmatpush1.bf16.msra.mxu0 %v558
      %640 = vmatprep.subr.bf16.mxu0 0
      %641 = vmatpush1.bf16.msra.mxu0 %v559
      %642 = vmatprep.subr.bf16.mxu0 0
      %643 = vmatpush1.bf16.msra.mxu0 %v560
      %644 = vmatprep.subr.bf16.mxu0 0
      %645 = vmatpush1.bf16.msra.mxu0 %v561
      %646 = vmatprep.subr.bf16.mxu0 0
      %647 = vmatpush1.bf16.msra.mxu0 %v562
      %648 = vmatprep.subr.bf16.mxu0 0
      %649 = vmatpush1.bf16.msra.mxu0 %v563
      %650 = vmatprep.subr.bf16.mxu0 0
      %651 = vmatpush1.bf16.msra.mxu0 %v564
      %652 = vmatprep.subr.bf16.mxu0 0
      %653 = vmatpush1.bf16.msra.mxu0 %v565
      %654 = vmatprep.subr.bf16.mxu0 0
      %655 = vmatpush1.bf16.msra.mxu0 %v566
      %656 = vmatprep.subr.bf16.mxu0 0
      %657 = vmatpush1.bf16.msra.mxu0 %v567
      %658 = vmatprep.subr.bf16.mxu0 0
      %659 = vmatpush1.bf16.msra.mxu0 %v568
      %660 = vmatprep.subr.bf16.mxu0 0
      %661 = vmatpush1.bf16.msra.mxu0 %v569
      %662 = vmatprep.subr.bf16.mxu0 0
      %663 = vmatpush1.bf16.msra.mxu0 %v570
      %664 = vmatprep.subr.bf16.mxu0 0
      %665 = vmatpush1.bf16.msra.mxu0 %v571
      %666 = vmatprep.subr.bf16.mxu0 0
      %667 = vmatpush1.bf16.msra.mxu0 %v572
      %668 = vmatprep.subr.bf16.mxu0 0
      %669 = vmatpush1.bf16.msra.mxu0 %v573
      %670 = vmatprep.mubr.bf16.mxu0 %v389
      %671 = vmatmul.mubr.bf16.gmra.mrb[0].mxu0 %v388
      %v672 = vpop.f32.mrb[0].mxu0
      %v673 = vadd.f32 0.0, %v672
      %v674 = vpop.f32.mrb[0].mxu0
      %v675 = vpop.f32.mrb[0].mxu0
      %v676 = vadd.f32 0.0, %v675
      %v677 = vpop.f32.mrb[0].mxu0
      %678 = vdwg.mxu0
      %679 = vmatprep.subr.bf16.mxu0 0
      %680 = vmatpush1.bf16.msra.mxu0 %v574
      %681 = vmatprep.subr.bf16.mxu0 0
      %682 = vmatpush1.bf16.msra.mxu0 %v575
      %683 = vmatprep.subr.bf16.mxu0 0
      %684 = vmatpush1.bf16.msra.mxu0 %v576
      %685 = vmatprep.subr.bf16.mxu0 0
      %686 = vmatpush1.bf16.msra.mxu0 %v577
      %687 = vmatprep.subr.bf16.mxu0 0
      %688 = vmatpush1.bf16.msra.mxu0 %v578
      %689 = vmatprep.subr.bf16.mxu0 0
      %690 = vmatpush1.bf16.msra.mxu0 %v579
      %691 = vmatprep.subr.bf16.mxu0 0
      %692 = vmatpush1.bf16.msra.mxu0 %v580
      %693 = vmatprep.subr.bf16.mxu0 0
      %694 = vmatpush1.bf16.msra.mxu0 %v581
      %695 = vmatprep.subr.bf16.mxu0 0
      %696 = vmatpush1.bf16.msra.mxu0 %v582
      %697 = vmatprep.subr.bf16.mxu0 0
      %698 = vmatpush1.bf16.msra.mxu0 %v583
      %699 = vmatprep.subr.bf16.mxu0 0
      %700 = vmatpush1.bf16.msra.mxu0 %v584
      %701 = vmatprep.subr.bf16.mxu0 0
      %702 = vmatpush1.bf16.msra.mxu0 %v585
      %703 = vmatprep.subr.bf16.mxu0 0
      %704 = vmatpush1.bf16.msra.mxu0 %v586
      %705 = vmatprep.subr.bf16.mxu0 0
      %706 = vmatpush1.bf16.msra.mxu0 %v587
      %707 = vmatprep.subr.bf16.mxu0 0
      %708 = vmatpush1.bf16.msra.mxu0 %v588
      %709 = vmatprep.subr.bf16.mxu0 0
      %710 = vmatpush1.bf16.msra.mxu0 %v589
      %711 = vmatprep.mubr.bf16.mxu0 %v391
      %712 = vmatmul.mubr.bf16.gmra.mrb[0].mxu0 %v390
      %v713 = vpop.f32.mrb[0].mxu0
      %v714 = vadd.f32 %v673, %v713
      %v715 = vpop.f32.mrb[0].mxu0
      %v716 = vpop.f32.mrb[0].mxu0
      %v717 = vadd.f32 %v676, %v716
      %v718 = vpop.f32.mrb[0].mxu0
      %719 = vdwg.mxu0
      %720 = vmatprep.subr.bf16.mxu0 0
      %721 = vmatpush1.bf16.msra.mxu0 %v590
      %722 = vmatprep.subr.bf16.mxu0 0
      %723 = vmatpush1.bf16.msra.mxu0 %v591
      %724 = vmatprep.subr.bf16.mxu0 0
      %725 = vmatpush1.bf16.msra.mxu0 %v592
      %726 = vmatprep.subr.bf16.mxu0 0
      %727 = vmatpush1.bf16.msra.mxu0 %v593
      %728 = vmatprep.subr.bf16.mxu0 0
      %729 = vmatpush1.bf16.msra.mxu0 %v594
      %730 = vmatprep.subr.bf16.mxu0 0
      %731 = vmatpush1.bf16.msra.mxu0 %v595
      %732 = vmatprep.subr.bf16.mxu0 0
      %733 = vmatpush1.bf16.msra.mxu0 %v596
      %734 = vmatprep.subr.bf16.mxu0 0
      %735 = vmatpush1.bf16.msra.mxu0 %v597
      %736 = vmatprep.subr.bf16.mxu0 0
      %737 = vmatpush1.bf16.msra.mxu0 0
      %738 = vmatprep.subr.bf16.mxu0 0
      %739 = vmatpush1.bf16.msra.mxu0 0
      %740 = vmatprep.subr.bf16.mxu0 0
      %741 = vmatpush1.bf16.msra.mxu0 0
      %742 = vmatprep.subr.bf16.mxu0 0
      %743 = vmatpush1.bf16.msra.mxu0 0
      %744 = vmatprep.subr.bf16.mxu0 0
      %745 = vmatpush1.bf16.msra.mxu0 0
      %746 = vmatprep.subr.bf16.mxu0 0
      %747 = vmatpush1.bf16.msra.mxu0 0
      %748 = vmatprep.subr.bf16.mxu0 0
      %749 = vmatpush1.bf16.msra.mxu0 0
      %750 = vmatprep.subr.bf16.mxu0 0
      %751 = vmatpush1.bf16.msra.mxu0 0
      %752 = vmatprep.mubr.bf16.mxu0 0
      %753 = vmatmul.mubr.bf16.gmra.mrb[0].mxu0 %v392
      %v754 = vpop.f32.mrb[0].mxu0
      %v755 = vadd.f32 %v714, %v754
      %v756 = vpop.f32.mrb[0].mxu0
      %v757 = vpop.f32.mrb[0].mxu0
      %v758 = vadd.f32 %v717, %v757
      %v759 = vpop.f32.mrb[0].mxu0
      %760 = vdwg.mxu0
      %v761 = vadd.f32 %v284, %v755
      %v762 = vadd.f32 %v285, %v758
      %763 = vst [vmem:[#allocation2] sm:$0xff] %v761
      %764 = vst [vmem:[#allocation2 + $0x8] sm:$0xff] %v762
      // Predicated region
      $region33: #{encoder_forward.22} parent=27 // pred_check
        %p765 = pneg %p278
      $region34: #{encoder_forward.22} parent=27 // pred_check_branch
        %767 = sbr.rel (%p765) target = $region36
      $region35: #{encoder_forward.22} parent=27 // pred_region
        %v768 = vld [vmem:[#allocation2] sm:$0xff]
        %v769 = vld [vmem:[#allocation2 + $0x8] sm:$0xff]
        %v770 = vadd.f32 %v768, %v769
        %v771 = vrot.slane %v770, 4
        %v772 = vadd.f32 %v770, %v771
        %v773 = vrot.slane %v772, 2
        %v774 = vadd.f32 %v772, %v773
        %v775 = vrot.slane %v774, 1
        %v776 = vadd.f32 %v774, %v775
        %v777 = vmul.f32 %v768, %v768
        %v778 = vmul.f32 %v769, %v769
        %v779 = vadd.f32 %v777, %v778
        %v780 = vrot.slane %v779, 4
        %v781 = vadd.f32 %v779, %v780
        %v782 = vrot.slane %v781, 2
        %v783 = vadd.f32 %v781, %v782
        %v784 = vrot.slane %v783, 1
        %v785 = vadd.f32 %v783, %v784
        %v786 = vlaneseq
        %v787 = vshrl.u32 %v786, 7
        %vm788 = vcmp.eq.s32.totalorder %v787, 0
        %vm789 = vcmp.eq.s32.totalorder %v787, 1
        %v790 = vsel %vm789, %v785, 0.0
        %v791 = vsel %vm788, %v776, %v790
        %792 = vst [vmem:[%s276] sm:$0xff] %v791
        %v793 = vpack.c.bf16 %v769, %v768
        %v795 = vunpack.c.l.b16 %v793
        %v796 = vunpack.c.h.b16 %v793
        %v797 = vpack.c.b16 %v795, %v795
        %v798 = vpack.c.b16 %v796, %v796
        %801 = vst [vmem:[%s268] sm:$0xf] %v797
        %802 = vst [vmem:[%s268 + $0x4] sm:$0xf] %v798
      $region36: #{encoder_forward.22} parent=27 // pred_fallthru
        _
      %s803 = smul.u32 2, %s21
      %p804 = scmp.lt.s32.totalorder %s20, 1
      %s805 = scalar_select %p804, %s20, 1
      %p806 = scmp.lt.s32.totalorder %s803, 1
      %s807 = scalar_select %p806, %s803, 1
      %s808 = smul.addr %s805, 2
      %s809 = sadd.s32 %s807, %s808
      %s810 = smul.addr %s809, 4
      %s811 = scalar_lea.vmem %s2, %s810
      %p812 = scmp.lt.s32.totalorder %s20, 1
      %s813 = scalar_select %p812, %s20, 1
      %p814 = scmp.lt.s32.totalorder %s21, 0
      %s815 = scalar_select %p814, %s21, 0
      %s816 = sadd.s32 %s815, %s813
      %s817 = smul.addr %s816, 8
      %s818 = scalar_lea.vmem %s3, %s817
      // Predicated region
      $region37: #{encoder_forward.22} parent=27 // pred_check
        %p819 = pneg %p110
      $region38: #{encoder_forward.22} parent=27 // pred_check_branch
        %821 = sbr.rel (%p819) target = $region40
      $region39: #{encoder_forward.22} parent=27 // pred_region
        %s822 = smul.u32 2, %s21
      $region40: #{encoder_forward.22} parent=27 // pred_fallthru
        _
      // Predicated region
      $region41: #{encoder_forward.22} parent=27 // pred_check
        %p823 = pneg %p138
      $region42: #{encoder_forward.22} parent=27 // pred_check_branch
        %825 = sbr.rel (%p823) target = $region44
      $region43: #{encoder_forward.22} parent=27 // pred_region
        _
      $region44: #{encoder_forward.22} parent=27 // pred_fallthru
        _
    $region28: #{encoder_forward.22} parent=5 // pred_fallthru
      _
    %p826 = scmp.le.s32.totalorder 2, %s10
    // Predicated region
    $region45: #{encoder_forward.22} parent=5 // pred_check
      %p827 = pneg %p826
    $region46: #{encoder_forward.22} parent=5 // pred_check_branch
      %829 = sbr.rel (%p827) target = $region48
    $region47: #{encoder_forward.22} parent=5 // pred_region
      %s830 = ssub.s32 %s10, 2
      // Predicated region
      $region49: #{encoder_forward.22} parent=47 // pred_check
        %p831 = pneg %p116
      $region50: #{encoder_forward.22} parent=47 // pred_check_branch
        %833 = sbr.rel (%p831) target = $region52
      $region51: #{encoder_forward.22} parent=47 // pred_region
        %s834 = smul.u32 2, %s24
        %p835 = scmp.lt.s32.totalorder %s23, 1
        %s836 = scalar_select %p835, %s23, 1
        %p837 = scmp.lt.s32.totalorder %s834, 1
        %s838 = scalar_select %p837, %s834, 1
        %s839 = smul.addr %s836, 2
        %s840 = sadd.s32 %s838, %s839
        %s841 = smul.addr %s840, 4
        %s842 = scalar_lea.vmem %s2, %s841
      $region52: #{encoder_forward.22} parent=47 // pred_fallthru
        _
      // Predicated region
      $region53: #{encoder_forward.22} parent=47 // pred_check
        %p843 = pneg %p144
      $region54: #{encoder_forward.22} parent=47 // pred_check_branch
        %845 = sbr.rel (%p843) target = $region56
      $region55: #{encoder_forward.22} parent=47 // pred_region
        %p846 = scmp.lt.s32.totalorder %s23, 1
        %s847 = scalar_select %p846, %s23, 1
        %p848 = scmp.lt.s32.totalorder %s24, 0
        %s849 = scalar_select %p848, %s24, 0
        %s850 = sadd.s32 %s849, %s847
        %s851 = smul.addr %s850, 8
        %s852 = scalar_lea.vmem %s3, %s851
      $region56: #{encoder_forward.22} parent=47 // pred_fallthru
        _
    $region48: #{encoder_forward.22} parent=5 // pred_fallthru
      _
  $region6: #{encoder_forward.22} parent=0 // loop_footer
    %s14 = sadd.s32 1, %s10
  $region7: #{encoder_forward.22} parent=0 // loop_footer_branch
    %9 = sbr.rel target = $region3
  $region8: #{encoder_forward.22} parent=0 // loop_exit
    _

// kernel: encoder_forward.27
$region0: #{encoder_forward.27}
  #allocation0 [shape = 'u32[]', space=smem, size = 0x4, offset = 0x4, fixed_abs, tag = 'smem constant byte address 0x4 - core index']
  #allocation1 [shape = 'u32[144,128]{1,0:T(1,128)}', space=vmem, size = 0x12000, scoped, tag = 'internal scratch']
  %s0 = inlined_call_operand.vmem [shape: bf16[2,16,128], index: 0, kind: input, shape index: {}]
  %s1 = inlined_call_operand.vmem [shape: f32[2,1,128], index: 1, kind: input, shape index: {}]
  %s2 = inlined_call_operand.vmem [shape: f32[2,1,128], index: 2, kind: input, shape index: {}]
  %s3 = inlined_call_operand.vmem [shape: bf16[2,16,128], index: 3, kind: input, shape index: {}]
  %s4 = inlined_call_operand.vmem [shape: bf16[2,16,128], index: 4, kind: output, shape index: {}]
  %s5 = sld [smem:[#allocation0]]
  $region49: #{encoder_forward.27} parent=0
    _
  %s7 = ssub.s32 1, %s5
  %s8 = scalar_select 0, %s7, %s5
  loop: start=0, step=1, limit=4
  $region2: #{encoder_forward.27} parent=0 // loop_pre_header
    _
  $region3: #{encoder_forward.27} parent=0 // loop_header
    %s10 = sphi 0, %s14
    %p11 = scmp.ge.s32.totalorder %s10, 4
    %s17 = sphi 0, %s29
    %s18 = sphi 0, %s25
    %s19 = sphi 0, %s17
    %s20 = sphi 0, %s18
    %s21 = sphi 0, %s19
    %s22 = sphi 0, %s20
    %s34 = sphi 0, %s36
    %s37 = sphi 0, %s34
    %s38 = sphi 0, %s37
    %s54 = sphi 0, %s38
    %s60 = sphi 0, %s62
    %s63 = sphi 0, %s60
    %s64 = sphi 0, %s63
    %s80 = sphi 0, %s64
    %s86 = sphi 0, %s88
    %s89 = sphi 0, %s86
    %s90 = sphi 0, %s89
    %s106 = sphi 0, %s90
    %s114 = sphi 0, %s116
    %s117 = sphi 0, %s114
    %s118 = sphi 0, %s117
    %s134 = sphi 0, %s118
    %s142 = sphi 0, %s144
    %s145 = sphi 0, %s142
    %s146 = sphi 0, %s145
    %s162 = sphi 0, %s146
  $region4: #{encoder_forward.27} parent=0 // loop_header_branch
    %13 = sbr.rel (%p11) target = $region8
  $region5: #{encoder_forward.27} parent=0 // loop_body
    %s15 = ssub.s32 %s10, 1
    %s16 = ssub.s32 %s10, 2
    %s23 = sadd.s32 1, %s18
    %p24 = scmp.ge.s32.totalorder %s23, 1
    %s25 = scalar_select %p24, 0, %s23
    %s26 = sadd.s32 1, %s17
    %s27 = scalar_select %p24, %s26, %s17
    %p28 = scmp.ge.s32.totalorder %s27, 2
    %s29 = scalar_select %p28, 0, %s27
    %s30 = ssub.s32 %s17, %s29
    %s31 = ssub.s32 %s18, %s25
    %s32 = sor.u32 %s30, %s31
    %p33 = scmp.eq.s32.totalorder %s32, 0
    %s35 = sadd.s32 %s34, 1
    %s36 = scalar_select %p33, %s34, %s35
    %p39 = pneg %p33
    %p40 = scmp.eq.s32.totalorder %s10, 1
    %p41 = por %p39, %p40
    %p42 = scmp.ne.s32.totalorder %s34, %s37
    %p43 = scmp.eq.s32.totalorder %s10, 0
    %p44 = por %p42, %p43
    %p45 = scmp.ne.s32.totalorder %s34, %s37
    %p46 = scmp.eq.s32.totalorder %s15, 1
    %p47 = por %p45, %p46
    %p48 = scmp.ne.s32.totalorder %s37, %s38
    %p49 = scmp.eq.s32.totalorder %s15, 0
    %p50 = por %p48, %p49
    %p51 = scmp.ne.s32.totalorder %s37, %s38
    %p52 = scmp.eq.s32.totalorder %s16, 1
    %p53 = por %p51, %p52
    %p55 = scmp.ne.s32.totalorder %s38, %s54
    %p56 = scmp.eq.s32.totalorder %s16, 0
    %p57 = por %p55, %p56
    %s58 = ssub.s32 %s17, %s29
    %p59 = scmp.eq.s32.totalorder %s58, 0
    %s61 = sadd.s32 %s60, 1
    %s62 = scalar_select %p59, %s60, %s61
    %p65 = pneg %p59
    %p66 = scmp.eq.s32.totalorder %s10, 1
    %p67 = por %p65, %p66
    %p68 = scmp.ne.s32.totalorder %s60, %s63
    %p69 = scmp.eq.s32.totalorder %s10, 0
    %p70 = por %p68, %p69
    %p71 = scmp.ne.s32.totalorder %s60, %s63
    %p72 = scmp.eq.s32.totalorder %s15, 1
    %p73 = por %p71, %p72
    %p74 = scmp.ne.s32.totalorder %s63, %s64
    %p75 = scmp.eq.s32.totalorder %s15, 0
    %p76 = por %p74, %p75
    %p77 = scmp.ne.s32.totalorder %s63, %s64
    %p78 = scmp.eq.s32.totalorder %s16, 1
    %p79 = por %p77, %p78
    %p81 = scmp.ne.s32.totalorder %s64, %s80
    %p82 = scmp.eq.s32.totalorder %s16, 0
    %p83 = por %p81, %p82
    %s84 = ssub.s32 %s17, %s29
    %p85 = scmp.eq.s32.totalorder %s84, 0
    %s87 = sadd.s32 %s86, 1
    %s88 = scalar_select %p85, %s86, %s87
    %p91 = pneg %p85
    %p92 = scmp.eq.s32.totalorder %s10, 1
    %p93 = por %p91, %p92
    %p94 = scmp.ne.s32.totalorder %s86, %s89
    %p95 = scmp.eq.s32.totalorder %s10, 0
    %p96 = por %p94, %p95
    %p97 = scmp.ne.s32.totalorder %s86, %s89
    %p98 = scmp.eq.s32.totalorder %s15, 1
    %p99 = por %p97, %p98
    %p100 = scmp.ne.s32.totalorder %s89, %s90
    %p101 = scmp.eq.s32.totalorder %s15, 0
    %p102 = por %p100, %p101
    %p103 = scmp.ne.s32.totalorder %s89, %s90
    %p104 = scmp.eq.s32.totalorder %s16, 1
    %p105 = por %p103, %p104
    %p107 = scmp.ne.s32.totalorder %s90, %s106
    %p108 = scmp.eq.s32.totalorder %s16, 0
    %p109 = por %p107, %p108
    %s110 = ssub.s32 %s17, %s29
    %s111 = ssub.s32 %s18, %s25
    %s112 = sor.u32 %s110, %s111
    %p113 = scmp.eq.s32.totalorder %s112, 0
    %s115 = sadd.s32 %s114, 1
    %s116 = scalar_select %p113, %s114, %s115
    %p119 = pneg %p113
    %p120 = scmp.eq.s32.totalorder %s10, 1
    %p121 = por %p119, %p120
    %p122 = scmp.ne.s32.totalorder %s114, %s117
    %p123 = scmp.eq.s32.totalorder %s10, 0
    %p124 = por %p122, %p123
    %p125 = scmp.ne.s32.totalorder %s114, %s117
    %p126 = scmp.eq.s32.totalorder %s15, 1
    %p127 = por %p125, %p126
    %p128 = scmp.ne.s32.totalorder %s117, %s118
    %p129 = scmp.eq.s32.totalorder %s15, 0
    %p130 = por %p128, %p129
    %p131 = scmp.ne.s32.totalorder %s117, %s118
    %p132 = scmp.eq.s32.totalorder %s16, 1
    %p133 = por %p131, %p132
    %p135 = scmp.ne.s32.totalorder %s118, %s134
    %p136 = scmp.eq.s32.totalorder %s16, 0
    %p137 = por %p135, %p136
    %s138 = ssub.s32 %s17, %s29
    %s139 = ssub.s32 %s18, %s25
    %s140 = sor.u32 %s138, %s139
    %p141 = scmp.eq.s32.totalorder %s140, 0
    %s143 = sadd.s32 %s142, 1
    %s144 = scalar_select %p141, %s142, %s143
    %p147 = pneg %p141
    %p148 = scmp.eq.s32.totalorder %s10, 1
    %p149 = por %p147, %p148
    %p150 = scmp.ne.s32.totalorder %s142, %s145
    %p151 = scmp.eq.s32.totalorder %s10, 0
    %p152 = por %p150, %p151
    %p153 = scmp.ne.s32.totalorder %s142, %s145
    %p154 = scmp.eq.s32.totalorder %s15, 1
    %p155 = por %p153, %p154
    %p156 = scmp.ne.s32.totalorder %s145, %s146
    %p157 = scmp.eq.s32.totalorder %s15, 0
    %p158 = por %p156, %p157
    %p159 = scmp.ne.s32.totalorder %s145, %s146
    %p160 = scmp.eq.s32.totalorder %s16, 1
    %p161 = por %p159, %p160
    %p163 = scmp.ne.s32.totalorder %s146, %s162
    %p164 = scmp.eq.s32.totalorder %s16, 0
    %p165 = por %p163, %p164
    %p166 = scmp.le.s32.totalorder 1, %s10
    %p167 = scmp.lt.s32.totalorder %s10, 3
    %p168 = pnand %p166, %p167
    %p169 = pneg %p168
    // Predicated region
    $region9: #{encoder_forward.27} parent=5 // pred_check
      _
    $region10: #{encoder_forward.27} parent=5 // pred_check_branch
      %171 = sbr.rel (%p168) target = $region12
    $region11: #{encoder_forward.27} parent=5 // pred_region
      %s172 = ssub.s32 %s10, 1
    $region12: #{encoder_forward.27} parent=5 // pred_fallthru
      _
    %p173 = scmp.lt.s32.totalorder %s10, 2
    // Predicated region
    $region13: #{encoder_forward.27} parent=5 // pred_check
      %p174 = pneg %p173
    $region14: #{encoder_forward.27} parent=5 // pred_check_branch
      %176 = sbr.rel (%p174) target = $region16
    $region15: #{encoder_forward.27} parent=5 // pred_region
      // Predicated region
      $region17: #{encoder_forward.27} parent=15 // pred_check
        %p177 = pneg %p44
      $region18: #{encoder_forward.27} parent=15 // pred_check_branch
        %179 = sbr.rel (%p177) target = $region20
      $region19: #{encoder_forward.27} parent=15 // pred_region
        %s180 = smul.u32 2, %s18
        %p181 = scmp.lt.s32.totalorder %s17, 1
        %s182 = scalar_select %p181, %s17, 1
        %p183 = scmp.lt.s32.totalorder %s180, 1
        %s184 = scalar_select %p183, %s180, 1
        %s185 = smul.addr %s182, 2
        %s186 = sadd.s32 %s184, %s185
        %s187 = smul.addr %s186, 4
        %s188 = scalar_lea.vmem %s0, %s187
        %s189 = smul.u32 2, %s18
      $region20: #{encoder_forward.27} parent=15 // pred_fallthru
        _
      // Predicated region
      $region21: #{encoder_forward.27} parent=15 // pred_check
        %p190 = pneg %p70
      $region22: #{encoder_forward.27} parent=15 // pred_check_branch
        %192 = sbr.rel (%p190) target = $region24
      $region23: #{encoder_forward.27} parent=15 // pred_region
        %p193 = scmp.lt.s32.totalorder %s17, 1
        %s194 = scalar_select %p193, %s17, 1
        %s195 = scalar_lea.vmem %s1, %s194
      $region24: #{encoder_forward.27} parent=15 // pred_fallthru
        _
      // Predicated region
      $region25: #{encoder_forward.27} parent=15 // pred_check
        %p196 = pneg %p96
      $region26: #{encoder_forward.27} parent=15 // pred_check_branch
        %198 = sbr.rel (%p196) target = $region28
      $region27: #{encoder_forward.27} parent=15 // pred_region
        %p199 = scmp.lt.s32.totalorder %s17, 1
        %s200 = scalar_select %p199, %s17, 1
        %s201 = scalar_lea.vmem %s2, %s200
      $region28: #{encoder_forward.27} parent=15 // pred_fallthru
        _
      // Predicated region
      $region29: #{encoder_forward.27} parent=15 // pred_check
        %p202 = pneg %p124
      $region30: #{encoder_forward.27} parent=15 // pred_check_branch
        %204 = sbr.rel (%p202) target = $region32
      $region31: #{encoder_forward.27} parent=15 // pred_region
        %s205 = smul.u32 2, %s18
        %p206 = scmp.lt.s32.totalorder %s17, 1
        %s207 = scalar_select %p206, %s17, 1
        %p208 = scmp.lt.s32.totalorder %s205, 1
        %s209 = scalar_select %p208, %s205, 1
        %s210 = smul.addr %s207, 2
        %s211 = sadd.s32 %s209, %s210
        %s212 = smul.addr %s211, 4
        %s213 = scalar_lea.vmem %s3, %s212
        %s214 = smul.u32 2, %s18
      $region32: #{encoder_forward.27} parent=15 // pred_fallthru
        _
    $region16: #{encoder_forward.27} parent=5 // pred_fallthru
      _
    %p215 = scmp.le.s32.totalorder 1, %s10
    %p216 = scmp.lt.s32.totalorder %s10, 3
    %p217 = pnand %p215, %p216
    %p218 = pneg %p217
    // Predicated region
    $region33: #{encoder_forward.27} parent=5 // pred_check
      _
    $region34: #{encoder_forward.27} parent=5 // pred_check_branch
      %220 = sbr.rel (%p217) target = $region36
    $region35: #{encoder_forward.27} parent=5 // pred_region
      %s221 = ssub.s32 %s10, 1
      %s222 = smul.u32 2, %s20
      %p223 = scmp.lt.s32.totalorder %s19, 1
      %s224 = scalar_select %p223, %s19, 1
      %p225 = scmp.lt.s32.totalorder %s222, 1
      %s226 = scalar_select %p225, %s222, 1
      %s227 = smul.addr %s224, 2
      %s228 = sadd.s32 %s226, %s227
      %s229 = smul.addr %s228, 4
      %s230 = scalar_lea.vmem %s0, %s229
      %p231 = pneg %p50
      %p232 = pneg %p47
      %p233 = scmp.lt.s32.totalorder %s19, 1
      %s234 = scalar_select %p233, %s19, 1
      %s235 = scalar_lea.vmem %s1, %s234
      %p236 = pneg %p76
      %p237 = pneg %p73
      %p238 = scmp.lt.s32.totalorder %s19, 1
      %s239 = scalar_select %p238, %s19, 1
      %s240 = scalar_lea.vmem %s2, %s239
      %p241 = pneg %p102
      %p242 = pneg %p99
      %s243 = smul.u32 2, %s20
      %p244 = scmp.lt.s32.totalorder %s19, 1
      %s245 = scalar_select %p244, %s19, 1
      %p246 = scmp.lt.s32.totalorder %s243, 1
      %s247 = scalar_select %p246, %s243, 1
      %s248 = smul.addr %s245, 2
      %s249 = sadd.s32 %s247, %s248
      %s250 = smul.addr %s249, 4
      %s251 = scalar_lea.vmem %s3, %s250
      %p252 = pneg %p130
      %p253 = pneg %p127
      %p254 = pneg %p158
      %p255 = pneg %p155
      %s256 = smul.u32 2, %s20
      %p257 = scmp.lt.s32.totalorder %s19, 1
      %s258 = scalar_select %p257, %s19, 1
      %p259 = scmp.lt.s32.totalorder %s256, 1
      %s260 = scalar_select %p259, %s256, 1
      %s261 = smul.addr %s258, 2
      %s262 = sadd.s32 %s260, %s261
      %s263 = smul.addr %s262, 4
      %s264 = scalar_lea.vmem %s4, %s263
      %s265 = smul.u32 2, %s20
      %p266 = scmp.lt.s32.totalorder %s19, 1
      %s267 = scalar_select %p266, %s19, 1
      %p268 = scmp.lt.s32.totalorder %s265, 1
      %s269 = scalar_select %p268, %s265, 1
      %s270 = smul.addr %s267, 2
      %s271 = sadd.s32 %s269, %s270
      %s272 = smul.addr %s271, 4
      %s273 = scalar_lea.vmem %s0, %s272
      %s274 = smul.u32 2, %s20
      %p275 = scmp.lt.s32.totalorder %s19, 1
      %s276 = scalar_select %p275, %s19, 1
      %s277 = scalar_lea.vmem %s1, %s276
      %p278 = scmp.lt.s32.totalorder %s19, 1
      %s279 = scalar_select %p278, %s19, 1
      %s280 = scalar_lea.vmem %s2, %s279
      %s281 = smul.u32 2, %s20
      %p282 = scmp.lt.s32.totalorder %s19, 1
      %s283 = scalar_select %p282, %s19, 1
      %p284 = scmp.lt.s32.totalorder %s281, 1
      %s285 = scalar_select %p284, %s281, 1
      %s286 = smul.addr %s283, 2
      %s287 = sadd.s32 %s285, %s286
      %s288 = smul.addr %s287, 4
      %s289 = scalar_lea.vmem %s3, %s288
      %s290 = smul.u32 2, %s20
      %s291 = smul.u32 2, %s20
      %p292 = scmp.lt.s32.totalorder %s19, 1
      %s293 = scalar_select %p292, %s19, 1
      %p294 = scmp.lt.s32.totalorder %s291, 1
      %s295 = scalar_select %p294, %s291, 1
      %s296 = smul.addr %s293, 2
      %s297 = sadd.s32 %s295, %s296
      %s298 = smul.addr %s297, 4
      %s299 = scalar_lea.vmem %s4, %s298
      %s300 = smul.u32 2, %s20
      %v301 = vld [vmem:[%s273] sm:$0xf]
      %v302 = vld [vmem:[%s273 + $0x4] sm:$0xf]
      %v303 = vunpack.c.l.bf16 %v301
      %v304 = vunpack.c.l.bf16 %v302
      %v305 = vld [vmem:[%s277] sm:$0x1]
      %v307 = vlaneseq
      %v308 = vshrl.u32 %v307, 7
      %v309 = vsub.s32 0, %v308
      %v310 = vrot.slane %v305, %v309
      %v312 = vmul.f32 %v303, %v310
      %v313 = vmul.f32 %v304, %v310
      %v314 = vld [vmem:[%s280] sm:$0x1]
      %v316 = vlaneseq
      %v317 = vshrl.u32 %v316, 7
      %v318 = vsub.s32 0, %v317
      %v319 = vrot.slane %v314, %v318
      %v321 = vadd.f32 %v312, %v319
      %v322 = vadd.f32 %v313, %v319
      %v323 = vld [vmem:[%s289] sm:$0xf]
      %v324 = vld [vmem:[%s289 + $0x4] sm:$0xf]
      %v325 = vunpack.c.l.bf16 %v323
      %v326 = vunpack.c.l.bf16 %v324
      %v327 = vadd.f32 %v321, %v325
      %v328 = vadd.f32 %v322, %v326
      %v329 = vpack.c.bf16 %v328, %v327
      %v331 = vunpack.c.l.b16 %v329
      %v332 = vunpack.c.h.b16 %v329
      %v333 = vpack.c.b16 %v331, %v331
      %v334 = vpack.c.b16 %v332, %v332
      %337 = vst [vmem:[%s299] sm:$0xf] %v333
      %338 = vst [vmem:[%s299 + $0x4] sm:$0xf] %v334
      %s339 = smul.u32 2, %s20
      %p340 = scmp.lt.s32.totalorder %s19, 1
      %s341 = scalar_select %p340, %s19, 1
      %p342 = scmp.lt.s32.totalorder %s339, 1
      %s343 = scalar_select %p342, %s339, 1
      %s344 = smul.addr %s341, 2
      %s345 = sadd.s32 %s343, %s344
      %s346 = smul.addr %s345, 4
      %s347 = scalar_lea.vmem %s4, %s346
      // Predicated region
      $region37: #{encoder_forward.27} parent=35 // pred_check
        %p348 = pneg %p155
      $region38: #{encoder_forward.27} parent=35 // pred_check_branch
        %350 = sbr.rel (%p348) target = $region40
      $region39: #{encoder_forward.27} parent=35 // pred_region
        %s351 = smul.u32 2, %s20
      $region40: #{encoder_forward.27} parent=35 // pred_fallthru
        _
    $region36: #{encoder_forward.27} parent=5 // pred_fallthru
      _
    %p352 = scmp.le.s32.totalorder 2, %s10
    // Predicated region
    $region41: #{encoder_forward.27} parent=5 // pred_check
      %p353 = pneg %p352
    $region42: #{encoder_forward.27} parent=5 // pred_check_branch
      %355 = sbr.rel (%p353) target = $region44
    $region43: #{encoder_forward.27} parent=5 // pred_region
      %s356 = ssub.s32 %s10, 2
      // Predicated region
      $region45: #{encoder_forward.27} parent=43 // pred_check
        %p357 = pneg %p161
      $region46: #{encoder_forward.27} parent=43 // pred_check_branch
        %359 = sbr.rel (%p357) target = $region48
      $region47: #{encoder_forward.27} parent=43 // pred_region
        %s360 = smul.u32 2, %s22
        %p361 = scmp.lt.s32.totalorder %s21, 1
        %s362 = scalar_select %p361, %s21, 1
        %p363 = scmp.lt.s32.totalorder %s360, 1
        %s364 = scalar_select %p363, %s360, 1
        %s365 = smul.addr %s362, 2
        %s366 = sadd.s32 %s364, %s365
        %s367 = smul.addr %s366, 4
        %s368 = scalar_lea.vmem %s4, %s367
      $region48: #{encoder_forward.27} parent=43 // pred_fallthru
        _
    $region44: #{encoder_forward.27} parent=5 // pred_fallthru
      _
  $region6: #{encoder_forward.27} parent=0 // loop_footer
    %s14 = sadd.s32 1, %s10
  $region7: #{encoder_forward.27} parent=0 // loop_footer_branch
    %9 = sbr.rel target = $region3
  $region8: #{encoder_forward.27} parent=0 // loop_exit
    _

// kernel: encoder_forward.24
$region0: #{encoder_forward.24}
  #allocation0 [shape = 'u32[]', space=smem, size = 0x4, offset = 0x4, fixed_abs, tag = 'smem constant byte address 0x4 - core index']
  #allocation1 [shape = 'u32[144,128]{1,0:T(1,128)}', space=vmem, size = 0x12000, scoped, tag = 'internal scratch']
  #allocation2 [shape = 'f32[16,128]{1,0:T(8,128)}', space=vmem, size = 0x2000, scoped, tag = 'scratch operand']
  %s0 = inlined_call_operand.vmem [shape: bf16[2,16,1152], index: 0, kind: input, shape index: {}]
  %s1 = inlined_call_operand.vmem [shape: bf16[1152,128], index: 1, kind: input, shape index: {}]
  %s2 = inlined_call_operand.vmem [shape: bf16[2,16,128], index: 2, kind: output, shape index: {0}]
  %s3 = inlined_call_operand.vmem [shape: f32[2,1,8,128], index: 3, kind: output, shape index: {1}]
  %4 = xla_tuple %s2, %s3
  %s5 = sld [smem:[#allocation0]]
  $region57: #{encoder_forward.24} parent=0
    _
  %s7 = ssub.s32 1, %s5
  %s8 = scalar_select 0, %s7, %s5
  loop: start=0, step=1, limit=4
  $region2: #{encoder_forward.24} parent=0 // loop_pre_header
    _
  $region3: #{encoder_forward.24} parent=0 // loop_header
    %s10 = sphi 0, %s14
    %p11 = scmp.ge.s32.totalorder %s10, 4
    %s17 = sphi 0, %s36
    %s18 = sphi 0, %s32
    %s19 = sphi 0, %s28
    %s20 = sphi 0, %s17
    %s21 = sphi 0, %s18
    %s22 = sphi 0, %s19
    %s23 = sphi 0, %s20
    %s24 = sphi 0, %s21
    %s25 = sphi 0, %s22
    %s43 = sphi 0, %s45
    %s46 = sphi 0, %s43
    %s47 = sphi 0, %s46
    %s63 = sphi 0, %s47
    %s69 = sphi 0, %s71
    %s72 = sphi 0, %s69
    %s73 = sphi 0, %s72
    %s89 = sphi 0, %s73
    %s97 = sphi 0, %s99
    %s100 = sphi 0, %s97
    %s101 = sphi 0, %s100
    %s117 = sphi 0, %s101
    %s125 = sphi 0, %s127
    %s128 = sphi 0, %s125
    %s129 = sphi 0, %s128
    %s145 = sphi 0, %s129
  $region4: #{encoder_forward.24} parent=0 // loop_header_branch
    %13 = sbr.rel (%p11) target = $region8
  $region5: #{encoder_forward.24} parent=0 // loop_body
    %s15 = ssub.s32 %s10, 1
    %s16 = ssub.s32 %s10, 2
    %s26 = sadd.s32 1, %s19
    %p27 = scmp.ge.s32.totalorder %s26, 1
    %s28 = scalar_select %p27, 0, %s26
    %s29 = sadd.s32 1, %s18
    %s30 = scalar_select %p27, %s29, %s18
    %p31 = scmp.ge.s32.totalorder %s30, 1
    %s32 = scalar_select %p31, 0, %s30
    %s33 = sadd.s32 1, %s17
    %s34 = scalar_select %p31, %s33, %s17
    %p35 = scmp.ge.s32.totalorder %s34, 2
    %s36 = scalar_select %p35, 0, %s34
    %s37 = ssub.s32 %s17, %s36
    %s38 = ssub.s32 %s18, %s32
    %s39 = sor.u32 %s37, %s38
    %s40 = ssub.s32 %s19, %s28
    %s41 = sor.u32 %s39, %s40
    %p42 = scmp.eq.s32.totalorder %s41, 0
    %s44 = sadd.s32 %s43, 1
    %s45 = scalar_select %p42, %s43, %s44
    %p48 = pneg %p42
    %p49 = scmp.eq.s32.totalorder %s10, 1
    %p50 = por %p48, %p49
    %p51 = scmp.ne.s32.totalorder %s43, %s46
    %p52 = scmp.eq.s32.totalorder %s10, 0
    %p53 = por %p51, %p52
    %p54 = scmp.ne.s32.totalorder %s43, %s46
    %p55 = scmp.eq.s32.totalorder %s15, 1
    %p56 = por %p54, %p55
    %p57 = scmp.ne.s32.totalorder %s46, %s47
    %p58 = scmp.eq.s32.totalorder %s15, 0
    %p59 = por %p57, %p58
    %p60 = scmp.ne.s32.totalorder %s46, %s47
    %p61 = scmp.eq.s32.totalorder %s16, 1
    %p62 = por %p60, %p61
    %p64 = scmp.ne.s32.totalorder %s47, %s63
    %p65 = scmp.eq.s32.totalorder %s16, 0
    %p66 = por %p64, %p65
    %s67 = ssub.s32 %s19, %s28
    %p68 = scmp.eq.s32.totalorder %s67, 0
    %s70 = sadd.s32 %s69, 1
    %s71 = scalar_select %p68, %s69, %s70
    %p74 = pneg %p68
    %p75 = scmp.eq.s32.totalorder %s10, 1
    %p76 = por %p74, %p75
    %p77 = scmp.ne.s32.totalorder %s69, %s72
    %p78 = scmp.eq.s32.totalorder %s10, 0
    %p79 = por %p77, %p78
    %p80 = scmp.ne.s32.totalorder %s69, %s72
    %p81 = scmp.eq.s32.totalorder %s15, 1
    %p82 = por %p80, %p81
    %p83 = scmp.ne.s32.totalorder %s72, %s73
    %p84 = scmp.eq.s32.totalorder %s15, 0
    %p85 = por %p83, %p84
    %p86 = scmp.ne.s32.totalorder %s72, %s73
    %p87 = scmp.eq.s32.totalorder %s16, 1
    %p88 = por %p86, %p87
    %p90 = scmp.ne.s32.totalorder %s73, %s89
    %p91 = scmp.eq.s32.totalorder %s16, 0
    %p92 = por %p90, %p91
    %s93 = ssub.s32 %s17, %s36
    %s94 = ssub.s32 %s18, %s32
    %s95 = sor.u32 %s93, %s94
    %p96 = scmp.eq.s32.totalorder %s95, 0
    %s98 = sadd.s32 %s97, 1
    %s99 = scalar_select %p96, %s97, %s98
    %p102 = pneg %p96
    %p103 = scmp.eq.s32.totalorder %s10, 1
    %p104 = por %p102, %p103
    %p105 = scmp.ne.s32.totalorder %s97, %s100
    %p106 = scmp.eq.s32.totalorder %s10, 0
    %p107 = por %p105, %p106
    %p108 = scmp.ne.s32.totalorder %s97, %s100
    %p109 = scmp.eq.s32.totalorder %s15, 1
    %p110 = por %p108, %p109
    %p111 = scmp.ne.s32.totalorder %s100, %s101
    %p112 = scmp.eq.s32.totalorder %s15, 0
    %p113 = por %p111, %p112
    %p114 = scmp.ne.s32.totalorder %s100, %s101
    %p115 = scmp.eq.s32.totalorder %s16, 1
    %p116 = por %p114, %p115
    %p118 = scmp.ne.s32.totalorder %s101, %s117
    %p119 = scmp.eq.s32.totalorder %s16, 0
    %p120 = por %p118, %p119
    %s121 = ssub.s32 %s17, %s36
    %s122 = ssub.s32 %s18, %s32
    %s123 = sor.u32 %s121, %s122
    %p124 = scmp.eq.s32.totalorder %s123, 0
    %s126 = sadd.s32 %s125, 1
    %s127 = scalar_select %p124, %s125, %s126
    %p130 = pneg %p124
    %p131 = scmp.eq.s32.totalorder %s10, 1
    %p132 = por %p130, %p131
    %p133 = scmp.ne.s32.totalorder %s125, %s128
    %p134 = scmp.eq.s32.totalorder %s10, 0
    %p135 = por %p133, %p134
    %p136 = scmp.ne.s32.totalorder %s125, %s128
    %p137 = scmp.eq.s32.totalorder %s15, 1
    %p138 = por %p136, %p137
    %p139 = scmp.ne.s32.totalorder %s128, %s129
    %p140 = scmp.eq.s32.totalorder %s15, 0
    %p141 = por %p139, %p140
    %p142 = scmp.ne.s32.totalorder %s128, %s129
    %p143 = scmp.eq.s32.totalorder %s16, 1
    %p144 = por %p142, %p143
    %p146 = scmp.ne.s32.totalorder %s129, %s145
    %p147 = scmp.eq.s32.totalorder %s16, 0
    %p148 = por %p146, %p147
    %p149 = scmp.le.s32.totalorder 1, %s10
    %p150 = scmp.lt.s32.totalorder %s10, 3
    %p151 = pnand %p149, %p150
    %p152 = pneg %p151
    // Predicated region
    $region9: #{encoder_forward.24} parent=5 // pred_check
      _
    $region10: #{encoder_forward.24} parent=5 // pred_check_branch
      %154 = sbr.rel (%p151) target = $region12
    $region11: #{encoder_forward.24} parent=5 // pred_region
      %s155 = ssub.s32 %s10, 1
      // Predicated region
      $region13: #{encoder_forward.24} parent=11 // pred_check
        %p156 = pneg %p85
      $region14: #{encoder_forward.24} parent=11 // pred_check_branch
        %158 = sbr.rel (%p156) target = $region16
      $region15: #{encoder_forward.24} parent=11 // pred_region
        %s159 = smul.u32 144, %s22
        %p160 = scmp.lt.s32.totalorder %s159, 143
        %s161 = scalar_select %p160, %s159, 143
        %s162 = smul.addr %s161, 4
        %s163 = scalar_lea.vmem %s1, %s162
        %s164 = smul.u32 144, %s22
      $region16: #{encoder_forward.24} parent=11 // pred_fallthru
        _
    $region12: #{encoder_forward.24} parent=5 // pred_fallthru
      _
    %p165 = scmp.lt.s32.totalorder %s10, 2
    // Predicated region
    $region17: #{encoder_forward.24} parent=5 // pred_check
      %p166 = pneg %p165
    $region18: #{encoder_forward.24} parent=5 // pred_check_branch
      %168 = sbr.rel (%p166) target = $region20
    $region19: #{encoder_forward.24} parent=5 // pred_region
      // Predicated region
      $region21: #{encoder_forward.24} parent=19 // pred_check
        %p169 = pneg %p53
      $region22: #{encoder_forward.24} parent=19 // pred_check_branch
        %171 = sbr.rel (%p169) target = $region24
      $region23: #{encoder_forward.24} parent=19 // pred_region
        %s172 = smul.u32 2, %s18
        %s173 = smul.u32 9, %s19
        %p174 = scmp.lt.s32.totalorder %s17, 1
        %s175 = scalar_select %p174, %s17, 1
        %p176 = scmp.lt.s32.totalorder %s172, 1
        %s177 = scalar_select %p176, %s172, 1
        %p178 = scmp.lt.s32.totalorder %s173, 8
        %s179 = scalar_select %p178, %s173, 8
        %s180 = smul.addr %s177, 9
        %s181 = sadd.s32 %s179, %s180
        %s182 = smul.addr %s175, 18
        %s183 = sadd.s32 %s181, %s182
        %s184 = smul.addr %s183, 4
        %s185 = scalar_lea.vmem %s0, %s184
        %s186 = smul.u32 2, %s18
        %s187 = smul.u32 9, %s19
      $region24: #{encoder_forward.24} parent=19 // pred_fallthru
        _
    $region20: #{encoder_forward.24} parent=5 // pred_fallthru
      _
    %p188 = scmp.le.s32.totalorder 1, %s10
    %p189 = scmp.lt.s32.totalorder %s10, 3
    %p190 = pnand %p188, %p189
    %p191 = pneg %p190
    // Predicated region
    $region25: #{encoder_forward.24} parent=5 // pred_check
      _
    $region26: #{encoder_forward.24} parent=5 // pred_check_branch
      %193 = sbr.rel (%p190) target = $region28
    $region27: #{encoder_forward.24} parent=5 // pred_region
      %s194 = ssub.s32 %s10, 1
      %s195 = smul.u32 2, %s21
      %s196 = smul.u32 9, %s22
      %p197 = scmp.lt.s32.totalorder %s20, 1
      %s198 = scalar_select %p197, %s20, 1
      %p199 = scmp.lt.s32.totalorder %s195, 1
      %s200 = scalar_select %p199, %s195, 1
      %p201 = scmp.lt.s32.totalorder %s196, 8
      %s202 = scalar_select %p201, %s196, 8
      %s203 = smul.addr %s200, 9
      %s204 = sadd.s32 %s202, %s203
      %s205 = smul.addr %s198, 18
      %s206 = sadd.s32 %s204, %s205
      %s207 = smul.addr %s206, 4
      %s208 = scalar_lea.vmem %s0, %s207
      %p209 = pneg %p59
      %p210 = pneg %p56
      %s211 = smul.u32 144, %s22
      %p212 = scmp.lt.s32.totalorder %s211, 143
      %s213 = scalar_select %p212, %s211, 143
      %s214 = smul.addr %s213, 4
      %s215 = scalar_lea.vmem %s1, %s214
      %p216 = pneg %p85
      %p217 = pneg %p82
      %p218 = pneg %p113
      %p219 = pneg %p110
      %s220 = smul.u32 2, %s21
      %p221 = scmp.lt.s32.totalorder %s20, 1
      %s222 = scalar_select %p221, %s20, 1
      %p223 = scmp.lt.s32.totalorder %s220, 1
      %s224 = scalar_select %p223, %s220, 1
      %s225 = smul.addr %s222, 2
      %s226 = sadd.s32 %s224, %s225
      %s227 = smul.addr %s226, 4
      %s228 = scalar_lea.vmem %s2, %s227
      %p229 = pneg %p141
      %p230 = pneg %p138
      %p231 = scmp.lt.s32.totalorder %s20, 1
      %s232 = scalar_select %p231, %s20, 1
      %p233 = scmp.lt.s32.totalorder %s21, 0
      %s234 = scalar_select %p233, %s21, 0
      %s235 = sadd.s32 %s234, %s232
      %s236 = smul.addr %s235, 8
      %s237 = scalar_lea.vmem %s3, %s236
      %s238 = smul.u32 2, %s21
      %s239 = smul.u32 9, %s22
      %p240 = scmp.lt.s32.totalorder %s20, 1
      %s241 = scalar_select %p240, %s20, 1
      %p242 = scmp.lt.s32.totalorder %s238, 1
      %s243 = scalar_select %p242, %s238, 1
      %p244 = scmp.lt.s32.totalorder %s239, 8
      %s245 = scalar_select %p244, %s239, 8
      %s246 = smul.addr %s243, 9
      %s247 = sadd.s32 %s245, %s246
      %s248 = smul.addr %s241, 18
      %s249 = sadd.s32 %s247, %s248
      %s250 = smul.addr %s249, 4
      %s251 = scalar_lea.vmem %s0, %s250
      %s252 = smul.u32 2, %s21
      %s253 = smul.u32 9, %s22
      %s254 = smul.u32 144, %s22
      %p255 = scmp.lt.s32.totalorder %s254, 143
      %s256 = scalar_select %p255, %s254, 143
      %s257 = smul.addr %s256, 4
      %s258 = scalar_lea.vmem %s1, %s257
      %s259 = smul.u32 144, %s22
      %s260 = smul.u32 2, %s21
      %p261 = scmp.lt.s32.totalorder %s20, 1
      %s262 = scalar_select %p261, %s20, 1
      %p263 = scmp.lt.s32.totalorder %s260, 1
      %s264 = scalar_select %p263, %s260, 1
      %s265 = smul.addr %s262, 2
      %s266 = sadd.s32 %s264, %s265
      %s267 = smul.addr %s266, 4
      %s268 = scalar_lea.vmem %s2, %s267
      %s269 = smul.u32 2, %s21
      %p270 = scmp.lt.s32.totalorder %s20, 1
      %s271 = scalar_select %p270, %s20, 1
      %p272 = scmp.lt.s32.totalorder %s21, 0
      %s273 = scalar_select %p272, %s21, 0
      %s274 = sadd.s32 %s273, %s271
      %s275 = smul.addr %s274, 8
      %s276 = scalar_lea.vmem %s3, %s275
      %p278 = scmp.eq.s32.totalorder %s22, 0
      // Predicated region
      $region29: #{encoder_forward.24} parent=27 // pred_check
        %p279 = pneg %p278
      $region30: #{encoder_forward.24} parent=27 // pred_check_branch
        %281 = sbr.rel (%p279) target = $region32
      $region31: #{encoder_forward.24} parent=27 // pred_region
        %282 = vst [vmem:[#allocation2] sm:$0xff] 0.0
        %283 = vst [vmem:[#allocation2 + $0x8] sm:$0xff] 0.0
      $region32: #{encoder_forward.24} parent=27 // pred_fallthru
        _
      %v284 = vld [vmem:[#allocation2] sm:$0xff]
      %v285 = vld [vmem:[#allocation2 + $0x8] sm:$0xff]
      %v286 = vld [vmem:[%s251] sm:$0xff]
      %v287 = vld [vmem:[%s251 + $0x8] sm:$0xff]
      %v288 = vld [vmem:[%s251 + $0x10] sm:$0xff]
      %v289 = vld [vmem:[%s251 + $0x18] sm:$0xff]
      %v290 = vld [vmem:[%s251 + $0x20] sm:$0xf]
      %v291 = vld [vmem:[%s251 + $0x24] sm:$0xff]
      %v292 = vld [vmem:[%s251 + $0x2c] sm:$0xff]
      %v293 = vld [vmem:[%s251 + $0x34] sm:$0xff]
      %v294 = vld [vmem:[%s251 + $0x3c] sm:$0xff]
      %v295 = vld [vmem:[%s251 + $0x44] sm:$0xf]
      %v296 = vld [vmem:[%s258] sm:$0xf]
      %v297 = vld [vmem:[%s258 + $0x4] sm:$0xf]
      %v298 = vld [vmem:[%s258 + $0x8] sm:$0xf]
      %v299 = vld [vmem:[%s258 + $0xc] sm:$0xf]
      %v300 = vld [vmem:[%s258 + $0x10] sm:$0xf]
      %v301 = vld [vmem:[%s258 + $0x14] sm:$0xf]
      %v302 = vld [vmem:[%s258 + $0x18] sm:$0xf]
      %v303 = vld [vmem:[%s258 + $0x1c] sm:$0xf]
      %v304 = vld [vmem:[%s258 + $0x20] sm:$0xf]
      %v305 = vld [vmem:[%s258 + $0x24] sm:$0xf]
      %v306 = vld [vmem:[%s258 + $0x28] sm:$0xf]
      %v307 = vld [vmem:[%s258 + $0x2c] sm:$0xf]
      %v308 = vld [vmem:[%s258 + $0x30] sm:$0xf]
      %v309 = vld [vmem:[%s258 + $0x34] sm:$0xf]
      %v310 = vld [vmem:[%s258 + $0x38] sm:$0xf]
      %v311 = vld [vmem:[%s258 + $0x3c] sm:$0xf]
      %v312 = vld [vmem:[%s258 + $0x40] sm:$0xf]
      %v313 = vld [vmem:[%s258 + $0x44] sm:$0xf]
      %v314 = vld [vmem:[%s258 + $0x48] sm:$0xf]
      %v315 = vld [vmem:[%s258 + $0x4c] sm:$0xf]
      %v316 = vld [vmem:[%s258 + $0x50] sm:$0xf]
      %v317 = vld [vmem:[%s258 + $0x54] sm:$0xf]
      %v318 = vld [vmem:[%s258 + $0x58] sm:$0xf]
      %v319 = vld [vmem:[%s258 + $0x5c] sm:$0xf]
      %v320 = vld [vmem:[%s258 + $0x60] sm:$0xf]
      %v321 = vld [vmem:[%s258 + $0x64] sm:$0xf]
      %v322 = vld [vmem:[%s258 + $0x68] sm:$0xf]
      %v323 = vld [vmem:[%s258 + $0x6c] sm:$0xf]
      %v324 = vld [vmem:[%s258 + $0x70] sm:$0xf]
      %v325 = vld [vmem:[%s258 + $0x74] sm:$0xf]
      %v326 = vld [vmem:[%s258 + $0x78] sm:$0xf]
      %v327 = vld [vmem:[%s258 + $0x7c] sm:$0xf]
      %v328 = vld [vmem:[%s258 + $0x80] sm:$0xf]
      %v329 = vld [vmem:[%s258 + $0x84] sm:$0xf]
      %v330 = vld [vmem:[%s258 + $0x88] sm:$0xf]
      %v331 = vld [vmem:[%s258 + $0x8c] sm:$0xf]
      %v332 = vld [vmem:[%s258 + $0x90] sm:$0xf]
      %v333 = vld [vmem:[%s258 + $0x94] sm:$0xf]
      %v334 = vld [vmem:[%s258 + $0x98] sm:$0xf]
      %v335 = vld [vmem:[%s258 + $0x9c] sm:$0xf]
      %v336 = vld [vmem:[%s258 + $0xa0] sm:$0xf]
      %v337 = vld [vmem:[%s258 + $0xa4] sm:$0xf]
      %v338 = vld [vmem:[%s258 + $0xa8] sm:$0xf]
      %v339 = vld [vmem:[%s258 + $0xac] sm:$0xf]
      %v340 = vld [vmem:[%s258 + $0xb0] sm:$0xf]
      %v341 = vld [vmem:[%s258 + $0xb4] sm:$0xf]
      %v342 = vld [vmem:[%s258 + $0xb8] sm:$0xf]
      %v343 = vld [vmem:[%s258 + $0xbc] sm:$0xf]
      %v344 = vld [vmem:[%s258 + $0xc0] sm:$0xf]
      %v345 = vld [vmem:[%s258 + $0xc4] sm:$0xf]
      %v346 = vld [vmem:[%s258 + $0xc8] sm:$0xf]
      %v347 = vld [vmem:[%s258 + $0xcc] sm:$0xf]
      %v348 = vld [vmem:[%s258 + $0xd0] sm:$0xf]
      %v349 = vld [vmem:[%s258 + $0xd4] sm:$0xf]
      %v350 = vld [vmem:[%s258 + $0xd8] sm:$0xf]
      %v351 = vld [vmem:[%s258 + $0xdc] sm:$0xf]
      %v352 = vld [vmem:[%s258 + $0xe0] sm:$0xf]
      %v353 = vld [vmem:[%s258 + $0xe4] sm:$0xf]
      %v354 = vld [vmem:[%s258 + $0xe8] sm:$0xf]
      %v355 = vld [vmem:[%s258 + $0xec] sm:$0xf]
      %v356 = vld [vmem:[%s258 + $0xf0] sm:$0xf]
      %v357 = vld [vmem:[%s258 + $0xf4] sm:$0xf]
      %v358 = vld [vmem:[%s258 + $0xf8] sm:$0xf]
      %v359 = vld [vmem:[%s258 + $0xfc] sm:$0xf]
      %v360 = vld [vmem:[%s258 + $0x100] sm:$0xf]
      %v361 = vld [vmem:[%s258 + $0x104] sm:$0xf]
      %v362 = vld [vmem:[%s258 + $0x108] sm:$0xf]
      %v363 = vld [vmem:[%s258 + $0x10c] sm:$0xf]
      %v364 = vld [vmem:[%s258 + $0x110] sm:$0xf]
      %v365 = vld [vmem:[%s258 + $0x114] sm:$0xf]
      %v366 = vld [vmem:[%s258 + $0x118] sm:$0xf]
      %v367 = vld [vmem:[%s258 + $0x11c] sm:$0xf]
      %v368 = vld [vmem:[%s258 + $0x120] sm:$0xf]
      %v369 = vld [vmem:[%s258 + $0x124] sm:$0xf]
      %v370 = vld [vmem:[%s258 + $0x128] sm:$0xf]
      %v371 = vld [vmem:[%s258 + $0x12c] sm:$0xf]
      %v372 = vld [vmem:[%s258 + $0x130] sm:$0xf]
      %v373 = vld [vmem:[%s258 + $0x134] sm:$0xf]
      %v374 = vld [vmem:[%s258 + $0x138] sm:$0xf]
      %v375 = vld [vmem:[%s258 + $0x13c] sm:$0xf]
      %v376 = vld [vmem:[%s258 + $0x140] sm:$0xf]
      %v377 = vld [vmem:[%s258 + $0x144] sm:$0xf]
      %v378 = vld [vmem:[%s258 + $0x148] sm:$0xf]
      %v379 = vld [vmem:[%s258 + $0x14c] sm:$0xf]
      %v380 = vld [vmem:[%s258 + $0x150] sm:$0xf]
      %v381 = vld [vmem:[%s258 + $0x154] sm:$0xf]
      %v382 = vld [vmem:[%s258 + $0x158] sm:$0xf]
      %v383 = vld [vmem:[%s258 + $0x15c] sm:$0xf]
      %v384 = vld [vmem:[%s258 + $0x160] sm:$0xf]
      %v385 = vld [vmem:[%s258 + $0x164] sm:$0xf]
      %v386 = vld [vmem:[%s258 + $0x168] sm:$0xf]
      %v387 = vld [vmem:[%s258 + $0x16c] sm:$0xf]
      %v388 = vld [vmem:[%s258 + $0x170] sm:$0xf]
      %v389 = vld [vmem:[%s258 + $0x174] sm:$0xf]
      %v390 = vld [vmem:[%s258 + $0x178] sm:$0xf]
      %v391 = vld [vmem:[%s258 + $0x17c] sm:$0xf]
      %v392 = vld [vmem:[%s258 + $0x180] sm:$0xf]
      %v393 = vld [vmem:[%s258 + $0x184] sm:$0xf]
      %v394 = vld [vmem:[%s258 + $0x188] sm:$0xf]
      %v395 = vld [vmem:[%s258 + $0x18c] sm:$0xf]
      %v396 = vld [vmem:[%s258 + $0x190] sm:$0xf]
      %v397 = vld [vmem:[%s258 + $0x194] sm:$0xf]
      %v398 = vld [vmem:[%s258 + $0x198] sm:$0xf]
      %v399 = vld [vmem:[%s258 + $0x19c] sm:$0xf]
      %v400 = vld [vmem:[%s258 + $0x1a0] sm:$0xf]
      %v401 = vld [vmem:[%s258 + $0x1a4] sm:$0xf]
      %v402 = vld [vmem:[%s258 + $0x1a8] sm:$0xf]
      %v403 = vld [vmem:[%s258 + $0x1ac] sm:$0xf]
      %v404 = vld [vmem:[%s258 + $0x1b0] sm:$0xf]
      %v405 = vld [vmem:[%s258 + $0x1b4] sm:$0xf]
      %v406 = vld [vmem:[%s258 + $0x1b8] sm:$0xf]
      %v407 = vld [vmem:[%s258 + $0x1bc] sm:$0xf]
      %v408 = vld [vmem:[%s258 + $0x1c0] sm:$0xf]
      %v409 = vld [vmem:[%s258 + $0x1c4] sm:$0xf]
      %v410 = vld [vmem:[%s258 + $0x1c8] sm:$0xf]
      %v411 = vld [vmem:[%s258 + $0x1cc] sm:$0xf]
      %v412 = vld [vmem:[%s258 + $0x1d0] sm:$0xf]
      %v413 = vld [vmem:[%s258 + $0x1d4] sm:$0xf]
      %v414 = vld [vmem:[%s258 + $0x1d8] sm:$0xf]
      %v415 = vld [vmem:[%s258 + $0x1dc] sm:$0xf]
      %v416 = vld [vmem:[%s258 + $0x1e0] sm:$0xf]
      %v417 = vld [vmem:[%s258 + $0x1e4] sm:$0xf]
      %v418 = vld [vmem:[%s258 + $0x1e8] sm:$0xf]
      %v419 = vld [vmem:[%s258 + $0x1ec] sm:$0xf]
      %v420 = vld [vmem:[%s258 + $0x1f0] sm:$0xf]
      %v421 = vld [vmem:[%s258 + $0x1f4] sm:$0xf]
      %v422 = vld [vmem:[%s258 + $0x1f8] sm:$0xf]
      %v423 = vld [vmem:[%s258 + $0x1fc] sm:$0xf]
      %v424 = vld [vmem:[%s258 + $0x200] sm:$0xf]
      %v425 = vld [vmem:[%s258 + $0x204] sm:$0xf]
      %v426 = vld [vmem:[%s258 + $0x208] sm:$0xf]
      %v427 = vld [vmem:[%s258 + $0x20c] sm:$0xf]
      %v428 = vld [vmem:[%s258 + $0x210] sm:$0xf]
      %v429 = vld [vmem:[%s258 + $0x214] sm:$0xf]
      %v430 = vld [vmem:[%s258 + $0x218] sm:$0xf]
      %v431 = vld [vmem:[%s258 + $0x21c] sm:$0xf]
      %v432 = vld [vmem:[%s258 + $0x220] sm:$0xf]
      %v433 = vld [vmem:[%s258 + $0x224] sm:$0xf]
      %v434 = vld [vmem:[%s258 + $0x228] sm:$0xf]
      %v435 = vld [vmem:[%s258 + $0x22c] sm:$0xf]
      %v436 = vld [vmem:[%s258 + $0x230] sm:$0xf]
      %v437 = vld [vmem:[%s258 + $0x234] sm:$0xf]
      %v438 = vld [vmem:[%s258 + $0x238] sm:$0xf]
      %v439 = vld [vmem:[%s258 + $0x23c] sm:$0xf]
      %v450 = vunpack.c.l.b16 %v286
      %v451 = vunpack.c.h.b16 %v286
      %v452 = vunpack.c.l.b16 %v287
      %v453 = vunpack.c.h.b16 %v287
      %v454 = vunpack.c.l.b16 %v288
      %v455 = vunpack.c.h.b16 %v288
      %v456 = vunpack.c.l.b16 %v289
      %v457 = vunpack.c.h.b16 %v289
      %v458 = vunpack.c.l.b16 %v290
      %v459 = vunpack.c.l.b16 %v291
      %v460 = vunpack.c.h.b16 %v291
      %v461 = vunpack.c.l.b16 %v292
      %v462 = vunpack.c.h.b16 %v292
      %v463 = vunpack.c.l.b16 %v293
      %v464 = vunpack.c.h.b16 %v293
      %v465 = vunpack.c.l.b16 %v294
      %v466 = vunpack.c.h.b16 %v294
      %v467 = vunpack.c.l.b16 %v295
      %v468 = vpack.c.b16 %v459, %v450
      %v469 = vpack.c.b16 %v460, %v451
      %v470 = vpack.c.b16 %v461, %v452
      %v471 = vpack.c.b16 %v462, %v453
      %v472 = vpack.c.b16 %v463, %v454
      %v473 = vpack.c.b16 %v464, %v455
      %v474 = vpack.c.b16 %v465, %v456
      %v475 = vpack.c.b16 %v466, %v457
      %v476 = vpack.c.b16 %v467, %v458
      %v630 = vunpack.c.l.b16 %v296
      %v631 = vunpack.c.l.b16 %v297
      %v632 = vunpack.c.l.b16 %v298
      %v633 = vunpack.c.l.b16 %v299
      %v634 = vunpack.c.l.b16 %v300
      %v635 = vunpack.c.l.b16 %v301
      %v636 = vunpack.c.l.b16 %v302
      %v637 = vunpack.c.l.b16 %v303
      %v638 = vunpack.c.l.b16 %v304
      %v639 = vunpack.c.l.b16 %v305
      %v640 = vunpack.c.l.b16 %v306
      %v641 = vunpack.c.l.b16 %v307
      %v642 = vunpack.c.l.b16 %v308
      %v643 = vunpack.c.l.b16 %v309
      %v644 = vunpack.c.l.b16 %v310
      %v645 = vunpack.c.l.b16 %v311
      %v646 = vunpack.c.l.b16 %v312
      %v647 = vunpack.c.l.b16 %v313
      %v648 = vunpack.c.l.b16 %v314
      %v649 = vunpack.c.l.b16 %v315
      %v650 = vunpack.c.l.b16 %v316
      %v651 = vunpack.c.l.b16 %v317
      %v652 = vunpack.c.l.b16 %v318
      %v653 = vunpack.c.l.b16 %v319
      %v654 = vunpack.c.l.b16 %v320
      %v655 = vunpack.c.l.b16 %v321
      %v656 = vunpack.c.l.b16 %v322
      %v657 = vunpack.c.l.b16 %v323
      %v658 = vunpack.c.l.b16 %v324
      %v659 = vunpack.c.l.b16 %v325
      %v660 = vunpack.c.l.b16 %v326
      %v661 = vunpack.c.l.b16 %v327
      %v662 = vunpack.c.l.b16 %v328
      %v663 = vunpack.c.l.b16 %v329
      %v664 = vunpack.c.l.b16 %v330
      %v665 = vunpack.c.l.b16 %v331
      %v666 = vunpack.c.l.b16 %v332
      %v667 = vunpack.c.l.b16 %v333
      %v668 = vunpack.c.l.b16 %v334
      %v669 = vunpack.c.l.b16 %v335
      %v670 = vunpack.c.l.b16 %v336
      %v671 = vunpack.c.l.b16 %v337
      %v672 = vunpack.c.l.b16 %v338
      %v673 = vunpack.c.l.b16 %v339
      %v674 = vunpack.c.l.b16 %v340
      %v675 = vunpack.c.l.b16 %v341
      %v676 = vunpack.c.l.b16 %v342
      %v677 = vunpack.c.l.b16 %v343
      %v678 = vunpack.c.l.b16 %v344
      %v679 = vunpack.c.l.b16 %v345
      %v680 = vunpack.c.l.b16 %v346
      %v681 = vunpack.c.l.b16 %v347
      %v682 = vunpack.c.l.b16 %v348
      %v683 = vunpack.c.l.b16 %v349
      %v684 = vunpack.c.l.b16 %v350
      %v685 = vunpack.c.l.b16 %v351
      %v686 = vunpack.c.l.b16 %v352
      %v687 = vunpack.c.l.b16 %v353
      %v688 = vunpack.c.l.b16 %v354
      %v689 = vunpack.c.l.b16 %v355
      %v690 = vunpack.c.l.b16 %v356
      %v691 = vunpack.c.l.b16 %v357
      %v692 = vunpack.c.l.b16 %v358
      %v693 = vunpack.c.l.b16 %v359
      %v694 = vunpack.c.l.b16 %v360
      %v695 = vunpack.c.l.b16 %v361
      %v696 = vunpack.c.l.b16 %v362
      %v697 = vunpack.c.l.b16 %v363
      %v698 = vunpack.c.l.b16 %v364
      %v699 = vunpack.c.l.b16 %v365
      %v700 = vunpack.c.l.b16 %v366
      %v701 = vunpack.c.l.b16 %v367
      %v702 = vunpack.c.l.b16 %v368
      %v703 = vunpack.c.l.b16 %v369
      %v704 = vunpack.c.l.b16 %v370
      %v705 = vunpack.c.l.b16 %v371
      %v706 = vunpack.c.l.b16 %v372
      %v707 = vunpack.c.l.b16 %v373
      %v708 = vunpack.c.l.b16 %v374
      %v709 = vunpack.c.l.b16 %v375
      %v710 = vunpack.c.l.b16 %v376
      %v711 = vunpack.c.l.b16 %v377
      %v712 = vunpack.c.l.b16 %v378
      %v713 = vunpack.c.l.b16 %v379
      %v714 = vunpack.c.l.b16 %v380
      %v715 = vunpack.c.l.b16 %v381
      %v716 = vunpack.c.l.b16 %v382
      %v717 = vunpack.c.l.b16 %v383
      %v718 = vunpack.c.l.b16 %v384
      %v719 = vunpack.c.l.b16 %v385
      %v720 = vunpack.c.l.b16 %v386
      %v721 = vunpack.c.l.b16 %v387
      %v722 = vunpack.c.l.b16 %v388
      %v723 = vunpack.c.l.b16 %v389
      %v724 = vunpack.c.l.b16 %v390
      %v725 = vunpack.c.l.b16 %v391
      %v726 = vunpack.c.l.b16 %v392
      %v727 = vunpack.c.l.b16 %v393
      %v728 = vunpack.c.l.b16 %v394
      %v729 = vunpack.c.l.b16 %v395
      %v730 = vunpack.c.l.b16 %v396
      %v731 = vunpack.c.l.b16 %v397
      %v732 = vunpack.c.l.b16 %v398
      %v733 = vunpack.c.l.b16 %v399
      %v734 = vunpack.c.l.b16 %v400
      %v735 = vunpack.c.l.b16 %v401
      %v736 = vunpack.c.l.b16 %v402
      %v737 = vunpack.c.l.b16 %v403
      %v738 = vunpack.c.l.b16 %v404
      %v739 = vunpack.c.l.b16 %v405
      %v740 = vunpack.c.l.b16 %v406
      %v741 = vunpack.c.l.b16 %v407
      %v742 = vunpack.c.l.b16 %v408
      %v743 = vunpack.c.l.b16 %v409
      %v744 = vunpack.c.l.b16 %v410
      %v745 = vunpack.c.l.b16 %v411
      %v746 = vunpack.c.l.b16 %v412
      %v747 = vunpack.c.l.b16 %v413
      %v748 = vunpack.c.l.b16 %v414
      %v749 = vunpack.c.l.b16 %v415
      %v750 = vunpack.c.l.b16 %v416
      %v751 = vunpack.c.l.b16 %v417
      %v752 = vunpack.c.l.b16 %v418
      %v753 = vunpack.c.l.b16 %v419
      %v754 = vunpack.c.l.b16 %v420
      %v755 = vunpack.c.l.b16 %v421
      %v756 = vunpack.c.l.b16 %v422
      %v757 = vunpack.c.l.b16 %v423
      %v758 = vunpack.c.l.b16 %v424
      %v759 = vunpack.c.l.b16 %v425
      %v760 = vunpack.c.l.b16 %v426
      %v761 = vunpack.c.l.b16 %v427
      %v762 = vunpack.c.l.b16 %v428
      %v763 = vunpack.c.l.b16 %v429
      %v764 = vunpack.c.l.b16 %v430
      %v765 = vunpack.c.l.b16 %v431
      %v766 = vunpack.c.l.b16 %v432
      %v767 = vunpack.c.l.b16 %v433
      %v768 = vunpack.c.l.b16 %v434
      %v769 = vunpack.c.l.b16 %v435
      %v770 = vunpack.c.l.b16 %v436
      %v771 = vunpack.c.l.b16 %v437
      %v772 = vunpack.c.l.b16 %v438
      %v773 = vunpack.c.l.b16 %v439
      %v774 = vpack.c.b16 %v631, %v630
      %v775 = vpack.c.b16 %v633, %v632
      %v776 = vpack.c.b16 %v635, %v634
      %v777 = vpack.c.b16 %v637, %v636
      %v778 = vpack.c.b16 %v639, %v638
      %v779 = vpack.c.b16 %v641, %v640
      %v780 = vpack.c.b16 %v643, %v642
      %v781 = vpack.c.b16 %v645, %v644
      %v782 = vpack.c.b16 %v647, %v646
      %v783 = vpack.c.b16 %v649, %v648
      %v784 = vpack.c.b16 %v651, %v650
      %v785 = vpack.c.b16 %v653, %v652
      %v786 = vpack.c.b16 %v655, %v654
      %v787 = vpack.c.b16 %v657, %v656
      %v788 = vpack.c.b16 %v659, %v658
      %v789 = vpack.c.b16 %v661, %v660
      %v790 = vpack.c.b16 %v663, %v662
      %v791 = vpack.c.b16 %v665, %v664
      %v792 = vpack.c.b16 %v667, %v666
      %v793 = vpack.c.b16 %v669, %v668
      %v794 = vpack.c.b16 %v671, %v670
      %v795 = vpack.c.b16 %v673, %v672
      %v796 = vpack.c.b16 %v675, %v674
      %v797 = vpack.c.b16 %v677, %v676
      %v798 = vpack.c.b16 %v679, %v678
      %v799 = vpack.c.b16 %v681, %v680
      %v800 = vpack.c.b16 %v683, %v682
      %v801 = vpack.c.b16 %v685, %v684
      %v802 = vpack.c.b16 %v687, %v686
      %v803 = vpack.c.b16 %v689, %v688
      %v804 = vpack.c.b16 %v691, %v690
      %v805 = vpack.c.b16 %v693, %v692
      %v806 = vpack.c.b16 %v695, %v694
      %v807 = vpack.c.b16 %v697, %v696
      %v808 = vpack.c.b16 %v699, %v698
      %v809 = vpack.c.b16 %v701, %v700
      %v810 = vpack.c.b16 %v703, %v702
      %v811 = vpack.c.b16 %v705, %v704
      %v812 = vpack.c.b16 %v707, %v706
      %v813 = vpack.c.b16 %v709, %v708
      %v814 = vpack.c.b16 %v711, %v710
      %v815 = vpack.c.b16 %v713, %v712
      %v816 = vpack.c.b16 %v715, %v714
      %v817 = vpack.c.b16 %v717, %v716
      %v818 = vpack.c.b16 %v719, %v718
      %v819 = vpack.c.b16 %v721, %v720
      %v820 = vpack.c.b16 %v723, %v722
      %v821 = vpack.c.b16 %v725, %v724
      %v822 = vpack.c.b16 %v727, %v726
      %v823 = vpack.c.b16 %v729, %v728
      %v824 = vpack.c.b16 %v731, %v730
      %v825 = vpack.c.b16 %v733, %v732
      %v826 = vpack.c.b16 %v735, %v734
      %v827 = vpack.c.b16 %v737, %v736
      %v828 = vpack.c.b16 %v739, %v738
      %v829 = vpack.c.b16 %v741, %v740
      %v830 = vpack.c.b16 %v743, %v742
      %v831 = vpack.c.b16 %v745, %v744
      %v832 = vpack.c.b16 %v747, %v746
      %v833 = vpack.c.b16 %v749, %v748
      %v834 = vpack.c.b16 %v751, %v750
      %v835 = vpack.c.b16 %v753, %v752
      %v836 = vpack.c.b16 %v755, %v754
      %v837 = vpack.c.b16 %v757, %v756
      %v838 = vpack.c.b16 %v759, %v758
      %v839 = vpack.c.b16 %v761, %v760
      %v840 = vpack.c.b16 %v763, %v762
      %v841 = vpack.c.b16 %v765, %v764
      %v842 = vpack.c.b16 %v767, %v766
      %v843 = vpack.c.b16 %v769, %v768
      %v844 = vpack.c.b16 %v771, %v770
      %v845 = vpack.c.b16 %v773, %v772
      %918 = vmatprep.subr.bf16.mxu0 0
      %919 = vmatpush1.bf16.msra.mxu0 %v774
      %920 = vmatprep.subr.bf16.mxu0 0
      %921 = vmatpush1.bf16.msra.mxu0 %v775
      %922 = vmatprep.subr.bf16.mxu0 0
      %923 = vmatpush1.bf16.msra.mxu0 %v776
      %924 = vmatprep.subr.bf16.mxu0 0
      %925 = vmatpush1.bf16.msra.mxu0 %v777
      %926 = vmatprep.subr.bf16.mxu0 0
      %927 = vmatpush1.bf16.msra.mxu0 %v778
      %928 = vmatprep.subr.bf16.mxu0 0
      %929 = vmatpush1.bf16.msra.mxu0 %v779
      %930 = vmatprep.subr.bf16.mxu0 0
      %931 = vmatpush1.bf16.msra.mxu0 %v780
      %932 = vmatprep.subr.bf16.mxu0 0
      %933 = vmatpush1.bf16.msra.mxu0 %v781
      %934 = vmatprep.subr.bf16.mxu0 0
      %935 = vmatpush1.bf16.msra.mxu0 %v782
      %936 = vmatprep.subr.bf16.mxu0 0
      %937 = vmatpush1.bf16.msra.mxu0 %v783
      %938 = vmatprep.subr.bf16.mxu0 0
      %939 = vmatpush1.bf16.msra.mxu0 %v784
      %940 = vmatprep.subr.bf16.mxu0 0
      %941 = vmatpush1.bf16.msra.mxu0 %v785
      %942 = vmatprep.subr.bf16.mxu0 0
      %943 = vmatpush1.bf16.msra.mxu0 %v786
      %944 = vmatprep.subr.bf16.mxu0 0
      %945 = vmatpush1.bf16.msra.mxu0 %v787
      %946 = vmatprep.subr.bf16.mxu0 0
      %947 = vmatpush1.bf16.msra.mxu0 %v788
      %948 = vmatprep.subr.bf16.mxu0 0
      %949 = vmatpush1.bf16.msra.mxu0 %v789
      %950 = vmatprep.mubr.bf16.mxu0 %v469
      %951 = vmatmul.mubr.bf16.gmra.mrb[0].mxu0 %v468
      %v952 = vpop.f32.mrb[0].mxu0
      %v953 = vadd.f32 0.0, %v952
      %v954 = vpop.f32.mrb[0].mxu0
      %v955 = vpop.f32.mrb[0].mxu0
      %v956 = vadd.f32 0.0, %v955
      %v957 = vpop.f32.mrb[0].mxu0
      %958 = vdwg.mxu0
      %959 = vmatprep.subr.bf16.mxu0 0
      %960 = vmatpush1.bf16.msra.mxu0 %v790
      %961 = vmatprep.subr.bf16.mxu0 0
      %962 = vmatpush1.bf16.msra.mxu0 %v791
      %963 = vmatprep.subr.bf16.mxu0 0
      %964 = vmatpush1.bf16.msra.mxu0 %v792
      %965 = vmatprep.subr.bf16.mxu0 0
      %966 = vmatpush1.bf16.msra.mxu0 %v793
      %967 = vmatprep.subr.bf16.mxu0 0
      %968 = vmatpush1.bf16.msra.mxu0 %v794
      %969 = vmatprep.subr.bf16.mxu0 0
      %970 = vmatpush1.bf16.msra.mxu0 %v795
      %971 = vmatprep.subr.bf16.mxu0 0
      %972 = vmatpush1.bf16.msra.mxu0 %v796
      %973 = vmatprep.subr.bf16.mxu0 0
      %974 = vmatpush1.bf16.msra.mxu0 %v797
      %975 = vmatprep.subr.bf16.mxu0 0
      %976 = vmatpush1.bf16.msra.mxu0 %v798
      %977 = vmatprep.subr.bf16.mxu0 0
      %978 = vmatpush1.bf16.msra.mxu0 %v799
      %979 = vmatprep.subr.bf16.mxu0 0
      %980 = vmatpush1.bf16.msra.mxu0 %v800
      %981 = vmatprep.subr.bf16.mxu0 0
      %982 = vmatpush1.bf16.msra.mxu0 %v801
      %983 = vmatprep.subr.bf16.mxu0 0
      %984 = vmatpush1.bf16.msra.mxu0 %v802
      %985 = vmatprep.subr.bf16.mxu0 0
      %986 = vmatpush1.bf16.msra.mxu0 %v803
      %987 = vmatprep.subr.bf16.mxu0 0
      %988 = vmatpush1.bf16.msra.mxu0 %v804
      %989 = vmatprep.subr.bf16.mxu0 0
      %990 = vmatpush1.bf16.msra.mxu0 %v805
      %991 = vmatprep.mubr.bf16.mxu0 %v471
      %992 = vmatmul.mubr.bf16.gmra.mrb[0].mxu0 %v470
      %v993 = vpop.f32.mrb[0].mxu0
      %v994 = vadd.f32 %v953, %v993
      %v995 = vpop.f32.mrb[0].mxu0
      %v996 = vpop.f32.mrb[0].mxu0
      %v997 = vadd.f32 %v956, %v996
      %v998 = vpop.f32.mrb[0].mxu0
      %999 = vdwg.mxu0
      %1000 = vmatprep.subr.bf16.mxu0 0
      %1001 = vmatpush1.bf16.msra.mxu0 %v806
      %1002 = vmatprep.subr.bf16.mxu0 0
      %1003 = vmatpush1.bf16.msra.mxu0 %v807
      %1004 = vmatprep.subr.bf16.mxu0 0
      %1005 = vmatpush1.bf16.msra.mxu0 %v808
      %1006 = vmatprep.subr.bf16.mxu0 0
      %1007 = vmatpush1.bf16.msra.mxu0 %v809
      %1008 = vmatprep.subr.bf16.mxu0 0
      %1009 = vmatpush1.bf16.msra.mxu0 %v810
      %1010 = vmatprep.subr.bf16.mxu0 0
      %1011 = vmatpush1.bf16.msra.mxu0 %v811
      %1012 = vmatprep.subr.bf16.mxu0 0
      %1013 = vmatpush1.bf16.msra.mxu0 %v812
      %1014 = vmatprep.subr.bf16.mxu0 0
      %1015 = vmatpush1.bf16.msra.mxu0 %v813
      %1016 = vmatprep.subr.bf16.mxu0 0
      %1017 = vmatpush1.bf16.msra.mxu0 %v814
      %1018 = vmatprep.subr.bf16.mxu0 0
      %1019 = vmatpush1.bf16.msra.mxu0 %v815
      %1020 = vmatprep.subr.bf16.mxu0 0
      %1021 = vmatpush1.bf16.msra.mxu0 %v816
      %1022 = vmatprep.subr.bf16.mxu0 0
      %1023 = vmatpush1.bf16.msra.mxu0 %v817
      %1024 = vmatprep.subr.bf16.mxu0 0
      %1025 = vmatpush1.bf16.msra.mxu0 %v818
      %1026 = vmatprep.subr.bf16.mxu0 0
      %1027 = vmatpush1.bf16.msra.mxu0 %v819
      %1028 = vmatprep.subr.bf16.mxu0 0
      %1029 = vmatpush1.bf16.msra.mxu0 %v820
      %1030 = vmatprep.subr.bf16.mxu0 0
      %1031 = vmatpush1.bf16.msra.mxu0 %v821
      %1032 = vmatprep.mubr.bf16.mxu0 %v473
      %1033 = vmatmul.mubr.bf16.gmra.mrb[0].mxu0 %v472
      %v1034 = vpop.f32.mrb[0].mxu0
      %v1035 = vadd.f32 %v994, %v1034
      %v1036 = vpop.f32.mrb[0].mxu0
      %v1037 = vpop.f32.mrb[0].mxu0
      %v1038 = vadd.f32 %v997, %v1037
      %v1039 = vpop.f32.mrb[0].mxu0
      %1040 = vdwg.mxu0
      %1041 = vmatprep.subr.bf16.mxu0 0
      %1042 = vmatpush1.bf16.msra.mxu0 %v822
      %1043 = vmatprep.subr.bf16.mxu0 0
      %1044 = vmatpush1.bf16.msra.mxu0 %v823
      %1045 = vmatprep.subr.bf16.mxu0 0
      %1046 = vmatpush1.bf16.msra.mxu0 %v824
      %1047 = vmatprep.subr.bf16.mxu0 0
      %1048 = vmatpush1.bf16.msra.mxu0 %v825
      %1049 = vmatprep.subr.bf16.mxu0 0
      %1050 = vmatpush1.bf16.msra.mxu0 %v826
      %1051 = vmatprep.subr.bf16.mxu0 0
      %1052 = vmatpush1.bf16.msra.mxu0 %v827
      %1053 = vmatprep.subr.bf16.mxu0 0
      %1054 = vmatpush1.bf16.msra.mxu0 %v828
      %1055 = vmatprep.subr.bf16.mxu0 0
      %1056 = vmatpush1.bf16.msra.mxu0 %v829
      %1057 = vmatprep.subr.bf16.mxu0 0
      %1058 = vmatpush1.bf16.msra.mxu0 %v830
      %1059 = vmatprep.subr.bf16.mxu0 0
      %1060 = vmatpush1.bf16.msra.mxu0 %v831
      %1061 = vmatprep.subr.bf16.mxu0 0
      %1062 = vmatpush1.bf16.msra.mxu0 %v832
      %1063 = vmatprep.subr.bf16.mxu0 0
      %1064 = vmatpush1.bf16.msra.mxu0 %v833
      %1065 = vmatprep.subr.bf16.mxu0 0
      %1066 = vmatpush1.bf16.msra.mxu0 %v834
      %1067 = vmatprep.subr.bf16.mxu0 0
      %1068 = vmatpush1.bf16.msra.mxu0 %v835
      %1069 = vmatprep.subr.bf16.mxu0 0
      %1070 = vmatpush1.bf16.msra.mxu0 %v836
      %1071 = vmatprep.subr.bf16.mxu0 0
      %1072 = vmatpush1.bf16.msra.mxu0 %v837
      %1073 = vmatprep.mubr.bf16.mxu0 %v475
      %1074 = vmatmul.mubr.bf16.gmra.mrb[0].mxu0 %v474
      %v1075 = vpop.f32.mrb[0].mxu0
      %v1076 = vadd.f32 %v1035, %v1075
      %v1077 = vpop.f32.mrb[0].mxu0
      %v1078 = vpop.f32.mrb[0].mxu0
      %v1079 = vadd.f32 %v1038, %v1078
      %v1080 = vpop.f32.mrb[0].mxu0
      %1081 = vdwg.mxu0
      %1082 = vmatprep.subr.bf16.mxu0 0
      %1083 = vmatpush1.bf16.msra.mxu0 %v838
      %1084 = vmatprep.subr.bf16.mxu0 0
      %1085 = vmatpush1.bf16.msra.mxu0 %v839
      %1086 = vmatprep.subr.bf16.mxu0 0
      %1087 = vmatpush1.bf16.msra.mxu0 %v840
      %1088 = vmatprep.subr.bf16.mxu0 0
      %1089 = vmatpush1.bf16.msra.mxu0 %v841
      %1090 = vmatprep.subr.bf16.mxu0 0
      %1091 = vmatpush1.bf16.msra.mxu0 %v842
      %1092 = vmatprep.subr.bf16.mxu0 0
      %1093 = vmatpush1.bf16.msra.mxu0 %v843
      %1094 = vmatprep.subr.bf16.mxu0 0
      %1095 = vmatpush1.bf16.msra.mxu0 %v844
      %1096 = vmatprep.subr.bf16.mxu0 0
      %1097 = vmatpush1.bf16.msra.mxu0 %v845
      %1098 = vmatprep.subr.bf16.mxu0 0
      %1099 = vmatpush1.bf16.msra.mxu0 0
      %1100 = vmatprep.subr.bf16.mxu0 0
      %1101 = vmatpush1.bf16.msra.mxu0 0
      %1102 = vmatprep.subr.bf16.mxu0 0
      %1103 = vmatpush1.bf16.msra.mxu0 0
      %1104 = vmatprep.subr.bf16.mxu0 0
      %1105 = vmatpush1.bf16.msra.mxu0 0
      %1106 = vmatprep.subr.bf16.mxu0 0
      %1107 = vmatpush1.bf16.msra.mxu0 0
      %1108 = vmatprep.subr.bf16.mxu0 0
      %1109 = vmatpush1.bf16.msra.mxu0 0
      %1110 = vmatprep.subr.bf16.mxu0 0
      %1111 = vmatpush1.bf16.msra.mxu0 0
      %1112 = vmatprep.subr.bf16.mxu0 0
      %1113 = vmatpush1.bf16.msra.mxu0 0
      %1114 = vmatprep.mubr.bf16.mxu0 0
      %1115 = vmatmul.mubr.bf16.gmra.mrb[0].mxu0 %v476
      %v1116 = vpop.f32.mrb[0].mxu0
      %v1117 = vadd.f32 %v1076, %v1116
      %v1118 = vpop.f32.mrb[0].mxu0
      %v1119 = vpop.f32.mrb[0].mxu0
      %v1120 = vadd.f32 %v1079, %v1119
      %v1121 = vpop.f32.mrb[0].mxu0
      %1122 = vdwg.mxu0
      %v1123 = vadd.f32 %v284, %v1117
      %v1124 = vadd.f32 %v285, %v1120
      %1125 = vst [vmem:[#allocation2] sm:$0xff] %v1123
      %1126 = vst [vmem:[#allocation2 + $0x8] sm:$0xff] %v1124
      // Predicated region
      $region33: #{encoder_forward.24} parent=27 // pred_check
        %p1127 = pneg %p278
      $region34: #{encoder_forward.24} parent=27 // pred_check_branch
        %1129 = sbr.rel (%p1127) target = $region36
      $region35: #{encoder_forward.24} parent=27 // pred_region
        %v1130 = vld [vmem:[#allocation2] sm:$0xff]
        %v1131 = vld [vmem:[#allocation2 + $0x8] sm:$0xff]
        %v1132 = vadd.f32 %v1130, %v1131
        %v1133 = vrot.slane %v1132, 4
        %v1134 = vadd.f32 %v1132, %v1133
        %v1135 = vrot.slane %v1134, 2
        %v1136 = vadd.f32 %v1134, %v1135
        %v1137 = vrot.slane %v1136, 1
        %v1138 = vadd.f32 %v1136, %v1137
        %v1139 = vmul.f32 %v1130, %v1130
        %v1140 = vmul.f32 %v1131, %v1131
        %v1141 = vadd.f32 %v1139, %v1140
        %v1142 = vrot.slane %v1141, 4
        %v1143 = vadd.f32 %v1141, %v1142
        %v1144 = vrot.slane %v1143, 2
        %v1145 = vadd.f32 %v1143, %v1144
        %v1146 = vrot.slane %v1145, 1
        %v1147 = vadd.f32 %v1145, %v1146
        %v1148 = vlaneseq
        %v1149 = vshrl.u32 %v1148, 7
        %vm1150 = vcmp.eq.s32.totalorder %v1149, 0
        %vm1151 = vcmp.eq.s32.totalorder %v1149, 1
        %v1152 = vsel %vm1151, %v1147, 0.0
        %v1153 = vsel %vm1150, %v1138, %v1152
        %1154 = vst [vmem:[%s276] sm:$0xff] %v1153
        %v1155 = vpack.c.bf16 %v1131, %v1130
        %v1157 = vunpack.c.l.b16 %v1155
        %v1158 = vunpack.c.h.b16 %v1155
        %v1159 = vpack.c.b16 %v1157, %v1157
        %v1160 = vpack.c.b16 %v1158, %v1158
        %1163 = vst [vmem:[%s268] sm:$0xf] %v1159
        %1164 = vst [vmem:[%s268 + $0x4] sm:$0xf] %v1160
      $region36: #{encoder_forward.24} parent=27 // pred_fallthru
        _
      %s1165 = smul.u32 2, %s21
      %p1166 = scmp.lt.s32.totalorder %s20, 1
      %s1167 = scalar_select %p1166, %s20, 1
      %p1168 = scmp.lt.s32.totalorder %s1165, 1
      %s1169 = scalar_select %p1168, %s1165, 1
      %s1170 = smul.addr %s1167, 2
      %s1171 = sadd.s32 %s1169, %s1170
      %s1172 = smul.addr %s1171, 4
      %s1173 = scalar_lea.vmem %s2, %s1172
      %p1174 = scmp.lt.s32.totalorder %s20, 1
      %s1175 = scalar_select %p1174, %s20, 1
      %p1176 = scmp.lt.s32.totalorder %s21, 0
      %s1177 = scalar_select %p1176, %s21, 0
      %s1178 = sadd.s32 %s1177, %s1175
      %s1179 = smul.addr %s1178, 8
      %s1180 = scalar_lea.vmem %s3, %s1179
      // Predicated region
      $region37: #{encoder_forward.24} parent=27 // pred_check
        %p1181 = pneg %p110
      $region38: #{encoder_forward.24} parent=27 // pred_check_branch
        %1183 = sbr.rel (%p1181) target = $region40
      $region39: #{encoder_forward.24} parent=27 // pred_region
        %s1184 = smul.u32 2, %s21
      $region40: #{encoder_forward.24} parent=27 // pred_fallthru
        _
      // Predicated region
      $region41: #{encoder_forward.24} parent=27 // pred_check
        %p1185 = pneg %p138
      $region42: #{encoder_forward.24} parent=27 // pred_check_branch
        %1187 = sbr.rel (%p1185) target = $region44
      $region43: #{encoder_forward.24} parent=27 // pred_region
        _
      $region44: #{encoder_forward.24} parent=27 // pred_fallthru
        _
    $region28: #{encoder_forward.24} parent=5 // pred_fallthru
      _
    %p1188 = scmp.le.s32.totalorder 2, %s10
    // Predicated region
    $region45: #{encoder_forward.24} parent=5 // pred_check
      %p1189 = pneg %p1188
    $region46: #{encoder_forward.24} parent=5 // pred_check_branch
      %1191 = sbr.rel (%p1189) target = $region48
    $region47: #{encoder_forward.24} parent=5 // pred_region
      %s1192 = ssub.s32 %s10, 2
      // Predicated region
      $region49: #{encoder_forward.24} parent=47 // pred_check
        %p1193 = pneg %p116
      $region50: #{encoder_forward.24} parent=47 // pred_check_branch
        %1195 = sbr.rel (%p1193) target = $region52
      $region51: #{encoder_forward.24} parent=47 // pred_region
        %s1196 = smul.u32 2, %s24
        %p1197 = scmp.lt.s32.totalorder %s23, 1
        %s1198 = scalar_select %p1197, %s23, 1
        %p1199 = scmp.lt.s32.totalorder %s1196, 1
        %s1200 = scalar_select %p1199, %s1196, 1
        %s1201 = smul.addr %s1198, 2
        %s1202 = sadd.s32 %s1200, %s1201
        %s1203 = smul.addr %s1202, 4
        %s1204 = scalar_lea.vmem %s2, %s1203
      $region52: #{encoder_forward.24} parent=47 // pred_fallthru
        _
      // Predicated region
      $region53: #{encoder_forward.24} parent=47 // pred_check
        %p1205 = pneg %p144
      $region54: #{encoder_forward.24} parent=47 // pred_check_branch
        %1207 = sbr.rel (%p1205) target = $region56
      $region55: #{encoder_forward.24} parent=47 // pred_region
        %p1208 = scmp.lt.s32.totalorder %s23, 1
        %s1209 = scalar_select %p1208, %s23, 1
        %p1210 = scmp.lt.s32.totalorder %s24, 0
        %s1211 = scalar_select %p1210, %s24, 0
        %s1212 = sadd.s32 %s1211, %s1209
        %s1213 = smul.addr %s1212, 8
        %s1214 = scalar_lea.vmem %s3, %s1213
      $region56: #{encoder_forward.24} parent=47 // pred_fallthru
        _
    $region48: #{encoder_forward.24} parent=5 // pred_fallthru
      _
  $region6: #{encoder_forward.24} parent=0 // loop_footer
    %s14 = sadd.s32 1, %s10
  $region7: #{encoder_forward.24} parent=0 // loop_footer_branch
    %9 = sbr.rel target = $region3
  $region8: #{encoder_forward.24} parent=0 // loop_exit
    _

</llo_original>
